<compile_context>
chip_gen: v7x
topology: tpu7x:2x2x1
jax: 0.10.0
libtpu: 0.0.40
codegen_flags: <defaults>
</compile_context>

<pallas_src>
import jax
import jax.numpy as jnp
import numpy as np
from jax.experimental import pallas as pl
from jax.experimental.pallas import tpu as pltpu


_VMEM = pl.BlockSpec(memory_space=pltpu.MemorySpace.VMEM)


# ---------------------------------------------------------------------------
# In-kernel GRU cell (PyTorch gate order r, z, n)
# ---------------------------------------------------------------------------
def _gru_cell(gi, h_prev, whh, bhh, H):
    # gi: (B, 3H) precomputed W_ih x + b_ih ; whh: (H, 3H) = W_hh^T ; bhh: (1, 3H)
    gh = jnp.dot(h_prev, whh, preferred_element_type=jnp.float32) + bhh
    r = jax.nn.sigmoid(gi[:, 0:H] + gh[:, 0:H])
    z = jax.nn.sigmoid(gi[:, H:2 * H] + gh[:, H:2 * H])
    n = jnp.tanh(gi[:, 2 * H:3 * H] + r * gh[:, 2 * H:3 * H])
    return (1.0 - z) * n + z * h_prev


# ---------------------------------------------------------------------------
# Kernel A: one full bidirectional GRU layer (fwd + bwd fused), outputs the
# per-step hidden sequence (needed as input for the next layer) + final hiddens.
# ---------------------------------------------------------------------------
def _bigru_layer_kernel(x2d_ref, wih_ref, whhf_ref, whhb_ref,
                        bih_ref, bhhf_ref, bhhb_ref,
                        outf_ref, outb_ref, hlast_ref):
    # x2d_ref  : (S*B, I)  time-major input, flattened over (time, batch)
    # wih_ref  : (I, 6H)   [W_ih_fwd^T | W_ih_bwd^T]
    # whh*_ref : (H, 3H)   W_hh^T per direction
    # bih_ref  : (1, 6H) ; bhh*_ref: (1, 3H)
    # outf_ref : (S, B, H) forward hidden states
    # outb_ref : (S, B, H) backward hidden states (already in natural time order)
    # hlast_ref: (B, 2H)   [h_fwd_final | h_bwd_final]
    S, B, H = outf_ref.shape

    # Hoisted input projection for both directions: ONE MXU matmul.
    gi_all = (jnp.dot(x2d_ref[...], wih_ref[...],
                      preferred_element_type=jnp.float32) + bih_ref[...])   # (S*B, 6H)

    whhf = whhf_ref[...]
    whhb = whhb_ref[...]
    bhhf = bhhf_ref[...]
    bhhb = bhhb_ref[...]

    h_f = jnp.zeros((B, H), jnp.float32)
    h_b = jnp.zeros((B, H), jnp.float32)
    # Fully unrolled static time loop; fwd/bwd are independent dependency chains.
    for t in range(S):
        gi_f = gi_all[t * B:(t + 1) * B, 0:3 * H]
        gi_b = gi_all[(S - 1 - t) * B:(S - t) * B, 3 * H:6 * H]
        h_f = _gru_cell(gi_f, h_f, whhf, bhhf, H)
        h_b = _gru_cell(gi_b, h_b, whhb, bhhb, H)
        outf_ref[t] = h_f             # VMEM-resident output block; DMA'd out once
        outb_ref[S - 1 - t] = h_b     # stored directly in un-reversed time order
    hlast_ref[...] = jnp.concatenate([h_f, h_b], axis=-1)   # written once


# ---------------------------------------------------------------------------
# Kernel B: final bidirectional GRU layer fused with the hidden2label Linear.
# Skips the (unused) output sequence entirely.
# ---------------------------------------------------------------------------
def _bigru_final_kernel(xf2d_ref, xb2d_ref, prevh_ref,
                        wih_ref, whhf_ref, whhb_ref,
                        bih_ref, bhhf_ref, bhhb_ref,
                        fcw_ref, fcb_ref, y_ref):
    # xf2d_ref / xb2d_ref : (S*B, Hp) previous layer's fwd / bwd output sequences
    # prevh_ref           : (B, 2*Hp*(L-1)) final hiddens of all previous layers
    # wih_ref             : (2*Hp, 6H) stacked input weights (rows 0:Hp -> xf, Hp:2Hp -> xb)
    # fcw_ref             : (2H*L, 1) ; fcb_ref: (1, 1) ; y_ref: (B, 1)
    B = y_ref.shape[0]
    SB, Hp = xf2d_ref.shape
    S = SB // B
    H = whhf_ref.shape[0]

    # Input projection of concat(xf, xb) done as two matmuls on the already-split
    # halves of the stacked weight (no wrapper-side concatenation needed).
    gi_all = (jnp.dot(xf2d_ref[...], wih_ref[0:Hp, :],
                      preferred_element_type=jnp.float32)
              + jnp.dot(xb2d_ref[...], wih_ref[Hp:2 * Hp, :],
                        preferred_element_type=jnp.float32)
              + bih_ref[...])                                    # (S*B, 6H)

    whhf = whhf_ref[...]
    whhb = whhb_ref[...]
    bhhf = bhhf_ref[...]
    bhhb = bhhb_ref[...]

    h_f = jnp.zeros((B, H), jnp.float32)
    h_b = jnp.zeros((B, H), jnp.float32)
    for t in range(S):
        gi_f = gi_all[t * B:(t + 1) * B, 0:3 * H]
        gi_b = gi_all[(S - 1 - t) * B:(S - t) * B, 3 * H:6 * H]
        h_f = _gru_cell(gi_f, h_f, whhf, bhhf, H)
        h_b = _gru_cell(gi_b, h_b, whhb, bhhb, H)

    # feat order matches torch.cat([h_n[i] for i in range(2L)], dim=1):
    # [layer0_fwd, layer0_bwd, ..., last_fwd, last_bwd]
    feat = jnp.concatenate([prevh_ref[...], h_f, h_b], axis=-1)   # (B, 2H*L)
    y_ref[...] = (jnp.dot(feat, fcw_ref[...],
                          preferred_element_type=jnp.float32) + fcb_ref[...])


# ---------------------------------------------------------------------------
# Wrappers
# ---------------------------------------------------------------------------
def _run_layer(x2d, p, S, B):
    H = p["whh_f"].shape[0]
    return pl.pallas_call(
        _bigru_layer_kernel,
        out_shape=(jax.ShapeDtypeStruct((S, B, H), jnp.float32),
                   jax.ShapeDtypeStruct((S, B, H), jnp.float32),
                   jax.ShapeDtypeStruct((B, 2 * H), jnp.float32)),
        in_specs=[_VMEM] * 7,
        out_specs=(_VMEM, _VMEM, _VMEM),
    )(x2d, p["wih"], p["whh_f"], p["whh_b"], p["bih"], p["bhh_f"], p["bhh_b"])


def _run_final_layer(xf2d, xb2d, prev_h, p, fc_wT, fc_b, B):
    return pl.pallas_call(
        _bigru_final_kernel,
        out_shape=jax.ShapeDtypeStruct((B, 1), jnp.float32),
        in_specs=[_VMEM] * 11,
        out_specs=_VMEM,
    )(xf2d, xb2d, prev_h, p["wih"], p["whh_f"], p["whh_b"],
      p["bih"], p["bhh_f"], p["bhh_b"], fc_wT, fc_b)


def bigru_forward(packed, sents, length):
    """sents: (batch, seq) int32 token ids; length: (batch,) unused (matches PyTorch)."""
    del length
    L = packed["num_layers"]
    H = packed["hidden"]
    assert L >= 2, "this implementation expects num_layers >= 2 (spec default is 2)"

    x = packed["embedding"][sents]                           # (B, S, E) gather (XLA glue)
    x = jnp.transpose(x, (1, 0, 2)).astype(jnp.float32)      # (S, B, E) time-major
    S, B, E = x.shape

    h_last = []
    out_f = out_b = None
    x2d = x.reshape(S * B, E)
    for layer in range(L - 1):
        p = packed["layers"][layer]
        if layer > 0:  # only reached when num_layers > 2
            x2d = jnp.concatenate([out_f, out_b], axis=-1).reshape(S * B, 2 * H)
        out_f, out_b, hl = _run_layer(x2d, p, S, B)
        h_last.append(hl)

    prev_h = jnp.concatenate(h_last, axis=-1)                # (B, 2H*(L-1))
    # inter-layer / pre-FC dropout: identity in eval mode
    y = _run_final_layer(out_f.reshape(S * B, H), out_b.reshape(S * B, H),
                         prev_h, packed["layers"][L - 1],
                         packed["fc_wT"], packed["fc_b"], B)
    return y


# ---------------------------------------------------------------------------
# One-time parameter packing (pre-transpose / stack; no per-call transposes)
# ---------------------------------------------------------------------------
def pack_params(params):
    L, H = params["num_layers"], params["hidden"]
    packed = {"num_layers": L, "hidden": H,
              "embedding": jnp.asarray(params["embedding"], jnp.float32)}
    layers = []
    for lp in params["gru"]:
        layers.append({
            "wih": jnp.concatenate([jnp.asarray(lp["w_ih_f"], jnp.float32).T,
                                    jnp.asarray(lp["w_ih_b"], jnp.float32).T], axis=1),
            "whh_f": jnp.asarray(lp["w_hh_f"], jnp.float32).T,
            "whh_b": jnp.asarray(lp["w_hh_b"], jnp.float32).T,
            "bih": jnp.concatenate([jnp.asarray(lp["b_ih_f"], jnp.float32),
                                    jnp.asarray(lp["b_ih_b"], jnp.float32)]).reshape(1, 6 * H),
            "bhh_f": jnp.asarray(lp["b_hh_f"], jnp.float32).reshape(1, 3 * H),
            "bhh_b": jnp.asarray(lp["b_hh_b"], jnp.float32).reshape(1, 3 * H),
        })
    packed["layers"] = layers
    packed["fc_wT"] = jnp.asarray(params["fc_w"], jnp.float32).T    # (2H*L, 1)
    packed["fc_b"] = jnp.asarray(params["fc_b"], jnp.float32).reshape(1, 1)
    return packed


# ---------------------------------------------------------------------------
# Pure-JAX reference (for correctness check only)
# ---------------------------------------------------------------------------
def _gru_dir_ref(x, w_ih, w_hh, b_ih, b_hh):
    S, B, _ = x.shape
    H = w_hh.shape[1]
    h = jnp.zeros((B, H), jnp.float32)
    outs = []
    for t in range(S):
        gi = x[t] @ w_ih.T + b_ih
        gh = h @ w_hh.T + b_hh
        r = jax.nn.sigmoid(gi[:, :H] + gh[:, :H])
        z = jax.nn.sigmoid(gi[:, H:2 * H] + gh[:, H:2 * H])
        n = jnp.tanh(gi[:, 2 * H:] + r * gh[:, 2 * H:])
        h = (1.0 - z) * n + z * h
        outs.append(h)
    return jnp.stack(outs, axis=0), h


def bigru_forward_ref(params, sents, length):
    del length
    x = jnp.transpose(params["embedding"][sents], (1, 0, 2)).astype(jnp.float32)
    h_n = []
    layer_in = x
    for layer in range(params["num_layers"]):
        p = params["gru"][layer]
        out_f, h_f = _gru_dir_ref(layer_in, p["w_ih_f"], p["w_hh_f"], p["b_ih_f"], p["b_hh_f"])
        out_b_rev, h_b = _gru_dir_ref(jnp.flip(layer_in, 0), p["w_ih_b"], p["w_hh_b"],
                                      p["b_ih_b"], p["b_hh_b"])
        out_b = jnp.flip(out_b_rev, 0)
        h_n += [h_f, h_b]
        layer_in = jnp.concatenate([out_f, out_b], axis=-1)
    feat = jnp.concatenate(h_n, axis=1)
    return feat @ params["fc_w"].T + params["fc_b"]


# ---------------------------------------------------------------------------
# Deterministic parameter construction (shapes from BiGRU.__init__)
# ---------------------------------------------------------------------------
def make_params(key, vocab=50, emb_dim=32, hidden=32, num_layers=2):
    keys = jax.random.split(key, 32)
    ki = iter(keys)
    scale = 1.0 / np.sqrt(hidden)

    def u(k, shape):
        return jax.random.uniform(k, shape, jnp.float32, -scale, scale)

    params = {"num_layers": num_layers, "hidden": hidden}
    params["embedding"] = jax.random.normal(next(ki), (vocab, emb_dim), jnp.float32) * 0.1

    gru = []
    for layer in range(num_layers):
        in_dim = emb_dim if layer == 0 else 2 * hidden
        gru.append({
            "w_ih_f": u(next(ki), (3 * hidden, in_dim)),
            "w_hh_f": u(next(ki), (3 * hidden, hidden)),
            "b_ih_f": u(next(ki), (3 * hidden,)),
            "b_hh_f": u(next(ki), (3 * hidden,)),
            "w_ih_b": u(next(ki), (3 * hidden, in_dim)),
            "w_hh_b": u(next(ki), (3 * hidden, hidden)),
            "b_ih_b": u(next(ki), (3 * hidden,)),
            "b_hh_b": u(next(ki), (3 * hidden,)),
        })
    params["gru"] = gru

    fc_in = hidden * num_layers * 2
    params["fc_w"] = u(next(ki), (1, fc_in))
    params["fc_b"] = u(next(ki), (1,))
    return params


if __name__ == "__main__":
    key = jax.random.PRNGKey(0)
    kp, ks = jax.random.split(key, 2)

    VOCAB, EMB, HIDDEN, LAYERS = 50, 32, 32, 2
    BATCH, SEQ = 2, 8

    params = make_params(kp, vocab=VOCAB, emb_dim=EMB, hidden=HIDDEN, num_layers=LAYERS)
    packed = pack_params(params)

    sents = jax.random.randint(ks, (BATCH, SEQ), 0, VOCAB, dtype=jnp.int32)
    length = jnp.full((BATCH,), SEQ, dtype=jnp.int32)   # unused by forward (matches PyTorch)

    fwd = jax.jit(lambda s, l: bigru_forward(packed, s, l))
    y = jax.block_until_ready(fwd(sents, length))

    y_ref = jax.block_until_ready(bigru_forward_ref(params, sents, length))
    np.testing.assert_allclose(np.asarray(y), np.asarray(y_ref), rtol=2e-4, atol=2e-4)

    assert y.shape == (BATCH, 1)
    print("KERNEL_OK")
</pallas_src>

<mosaic_0001>
module attributes {stable_mosaic.version = 11 : i64} {
  func.func @_bigru_final_kernel(%arg0: memref<16x32xf32, #tpu.memory_space<vmem>>, %arg1: memref<16x32xf32, #tpu.memory_space<vmem>>, %arg2: memref<2x64xf32, #tpu.memory_space<vmem>>, %arg3: memref<64x192xf32, #tpu.memory_space<vmem>>, %arg4: memref<32x96xf32, #tpu.memory_space<vmem>>, %arg5: memref<32x96xf32, #tpu.memory_space<vmem>>, %arg6: memref<1x192xf32, #tpu.memory_space<vmem>>, %arg7: memref<1x96xf32, #tpu.memory_space<vmem>>, %arg8: memref<1x96xf32, #tpu.memory_space<vmem>>, %arg9: memref<128x1xf32, #tpu.memory_space<vmem>>, %arg10: memref<1x1xf32, #tpu.memory_space<vmem>>, %arg11: memref<2x1xf32, #tpu.memory_space<vmem>>) attributes {dimension_semantics = [], scalar_prefetch = 0 : i64, scratch_operands = 0 : i64, tpu.core_type = #tpu.core_type<tc>} {
    %c0 = arith.constant 0 : index
    %c0_0 = arith.constant 0 : index
    %0 = vector.load %arg0[%c0, %c0_0] : memref<16x32xf32, #tpu.memory_space<vmem>>, vector<16x32xf32>
    %c0_1 = arith.constant 0 : index
    %c0_2 = arith.constant 0 : index
    %1 = vector.load %arg3[%c0_1, %c0_2] : memref<64x192xf32, #tpu.memory_space<vmem>>, vector<32x192xf32>
    %cst = arith.constant dense<0.000000e+00> : vector<16x192xf32>
    %2 = tpu.matmul %0, %1, %cst {dimension_numbers = #tpu.dot_dimension_numbers<[1], [0], [0], [1], [0, 0, 1, 1], [], []>} : vector<16x32xf32>, vector<32x192xf32>, vector<16x192xf32> -> vector<16x192xf32>
    %c0_3 = arith.constant 0 : index
    %c0_4 = arith.constant 0 : index
    %3 = vector.load %arg1[%c0_3, %c0_4] : memref<16x32xf32, #tpu.memory_space<vmem>>, vector<16x32xf32>
    %c32 = arith.constant 32 : index
    %c0_5 = arith.constant 0 : index
    %4 = vector.load %arg3[%c32, %c0_5] : memref<64x192xf32, #tpu.memory_space<vmem>>, vector<32x192xf32>
    %cst_6 = arith.constant dense<0.000000e+00> : vector<16x192xf32>
    %5 = tpu.matmul %3, %4, %cst_6 {dimension_numbers = #tpu.dot_dimension_numbers<[1], [0], [0], [1], [0, 0, 1, 1], [], []>} : vector<16x32xf32>, vector<32x192xf32>, vector<16x192xf32> -> vector<16x192xf32>
    %6 = arith.addf %2, %5 : vector<16x192xf32>
    %c0_7 = arith.constant 0 : index
    %c0_8 = arith.constant 0 : index
    %7 = vector.load %arg6[%c0_7, %c0_8] : memref<1x192xf32, #tpu.memory_space<vmem>>, vector<1x192xf32>
    %8 = vector.broadcast %7 : vector<1x192xf32> to vector<16x192xf32>
    %9 = arith.addf %6, %8 : vector<16x192xf32>
    %c0_9 = arith.constant 0 : index
    %c0_10 = arith.constant 0 : index
    %10 = vector.load %arg4[%c0_9, %c0_10] : memref<32x96xf32, #tpu.memory_space<vmem>>, vector<32x96xf32>
    %c0_11 = arith.constant 0 : index
    %c0_12 = arith.constant 0 : index
    %11 = vector.load %arg5[%c0_11, %c0_12] : memref<32x96xf32, #tpu.memory_space<vmem>>, vector<32x96xf32>
    %c0_13 = arith.constant 0 : index
    %c0_14 = arith.constant 0 : index
    %12 = vector.load %arg7[%c0_13, %c0_14] : memref<1x96xf32, #tpu.memory_space<vmem>>, vector<1x96xf32>
    %c0_15 = arith.constant 0 : index
    %c0_16 = arith.constant 0 : index
    %13 = vector.load %arg8[%c0_15, %c0_16] : memref<1x96xf32, #tpu.memory_space<vmem>>, vector<1x96xf32>
    %cst_17 = arith.constant 0.000000e+00 : f32
    %14 = vector.broadcast %cst_17 : f32 to vector<2x32xf32>
    %cst_18 = arith.constant 0.000000e+00 : f32
    %15 = vector.broadcast %cst_18 : f32 to vector<2x32xf32>
    %16 = vector.extract_strided_slice %9 {offsets = [0, 0], sizes = [2, 96], strides = [1, 1]} : vector<16x192xf32> to vector<2x96xf32>
    %17 = vector.extract_strided_slice %9 {offsets = [14, 96], sizes = [2, 96], strides = [1, 1]} : vector<16x192xf32> to vector<2x96xf32>
    %cst_19 = arith.constant dense<0.000000e+00> : vector<2x96xf32>
    %18 = tpu.matmul %14, %10, %cst_19 {dimension_numbers = #tpu.dot_dimension_numbers<[1], [0], [0], [1], [0, 0, 1, 1], [], []>} : vector<2x32xf32>, vector<32x96xf32>, vector<2x96xf32> -> vector<2x96xf32>
    %19 = vector.broadcast %12 : vector<1x96xf32> to vector<2x96xf32>
    %20 = arith.addf %18, %19 : vector<2x96xf32>
    %21 = vector.extract_strided_slice %16 {offsets = [0, 0], sizes = [2, 32], strides = [1, 1]} : vector<2x96xf32> to vector<2x32xf32>
    %22 = vector.extract_strided_slice %20 {offsets = [0, 0], sizes = [2, 32], strides = [1, 1]} : vector<2x96xf32> to vector<2x32xf32>
    %23 = arith.addf %21, %22 : vector<2x32xf32>
    %24 = arith.negf %23 : vector<2x32xf32>
    %25 = math.exp %24 : vector<2x32xf32>
    %cst_20 = arith.constant 1.000000e+00 : f32
    %26 = vector.broadcast %cst_20 : f32 to vector<2x32xf32>
    %27 = arith.addf %26, %25 : vector<2x32xf32>
    %28 = arith.divf %26, %27 : vector<2x32xf32>
    %29 = vector.extract_strided_slice %16 {offsets = [0, 32], sizes = [2, 32], strides = [1, 1]} : vector<2x96xf32> to vector<2x32xf32>
    %30 = vector.extract_strided_slice %20 {offsets = [0, 32], sizes = [2, 32], strides = [1, 1]} : vector<2x96xf32> to vector<2x32xf32>
    %31 = arith.addf %29, %30 : vector<2x32xf32>
    %32 = arith.negf %31 : vector<2x32xf32>
    %33 = math.exp %32 : vector<2x32xf32>
    %cst_21 = arith.constant 1.000000e+00 : f32
    %34 = vector.broadcast %cst_21 : f32 to vector<2x32xf32>
    %35 = arith.addf %34, %33 : vector<2x32xf32>
    %36 = arith.divf %34, %35 : vector<2x32xf32>
    %37 = vector.extract_strided_slice %16 {offsets = [0, 64], sizes = [2, 32], strides = [1, 1]} : vector<2x96xf32> to vector<2x32xf32>
    %38 = vector.extract_strided_slice %20 {offsets = [0, 64], sizes = [2, 32], strides = [1, 1]} : vector<2x96xf32> to vector<2x32xf32>
    %39 = arith.mulf %28, %38 : vector<2x32xf32>
    %40 = arith.addf %37, %39 : vector<2x32xf32>
    %41 = math.tanh %40 : vector<2x32xf32>
    %cst_22 = arith.constant 1.000000e+00 : f32
    %42 = vector.broadcast %cst_22 : f32 to vector<2x32xf32>
    %43 = arith.subf %42, %36 : vector<2x32xf32>
    %44 = arith.mulf %43, %41 : vector<2x32xf32>
    %45 = arith.mulf %36, %14 : vector<2x32xf32>
    %46 = arith.addf %44, %45 : vector<2x32xf32>
    %cst_23 = arith.constant dense<0.000000e+00> : vector<2x96xf32>
    %47 = tpu.matmul %15, %11, %cst_23 {dimension_numbers = #tpu.dot_dimension_numbers<[1], [0], [0], [1], [0, 0, 1, 1], [], []>} : vector<2x32xf32>, vector<32x96xf32>, vector<2x96xf32> -> vector<2x96xf32>
    %48 = vector.broadcast %13 : vector<1x96xf32> to vector<2x96xf32>
    %49 = arith.addf %47, %48 : vector<2x96xf32>
    %50 = vector.extract_strided_slice %17 {offsets = [0, 0], sizes = [2, 32], strides = [1, 1]} : vector<2x96xf32> to vector<2x32xf32>
    %51 = vector.extract_strided_slice %49 {offsets = [0, 0], sizes = [2, 32], strides = [1, 1]} : vector<2x96xf32> to vector<2x32xf32>
    %52 = arith.addf %50, %51 : vector<2x32xf32>
    %53 = arith.negf %52 : vector<2x32xf32>
    %54 = math.exp %53 : vector<2x32xf32>
    %cst_24 = arith.constant 1.000000e+00 : f32
    %55 = vector.broadcast %cst_24 : f32 to vector<2x32xf32>
    %56 = arith.addf %55, %54 : vector<2x32xf32>
    %57 = arith.divf %55, %56 : vector<2x32xf32>
    %58 = vector.extract_strided_slice %17 {offsets = [0, 32], sizes = [2, 32], strides = [1, 1]} : vector<2x96xf32> to vector<2x32xf32>
    %59 = vector.extract_strided_slice %49 {offsets = [0, 32], sizes = [2, 32], strides = [1, 1]} : vector<2x96xf32> to vector<2x32xf32>
    %60 = arith.addf %58, %59 : vector<2x32xf32>
    %61 = arith.negf %60 : vector<2x32xf32>
    %62 = math.exp %61 : vector<2x32xf32>
    %cst_25 = arith.constant 1.000000e+00 : f32
    %63 = vector.broadcast %cst_25 : f32 to vector<2x32xf32>
    %64 = arith.addf %63, %62 : vector<2x32xf32>
    %65 = arith.divf %63, %64 : vector<2x32xf32>
    %66 = vector.extract_strided_slice %17 {offsets = [0, 64], sizes = [2, 32], strides = [1, 1]} : vector<2x96xf32> to vector<2x32xf32>
    %67 = vector.extract_strided_slice %49 {offsets = [0, 64], sizes = [2, 32], strides = [1, 1]} : vector<2x96xf32> to vector<2x32xf32>
    %68 = arith.mulf %57, %67 : vector<2x32xf32>
    %69 = arith.addf %66, %68 : vector<2x32xf32>
    %70 = math.tanh %69 : vector<2x32xf32>
    %cst_26 = arith.constant 1.000000e+00 : f32
    %71 = vector.broadcast %cst_26 : f32 to vector<2x32xf32>
    %72 = arith.subf %71, %65 : vector<2x32xf32>
    %73 = arith.mulf %72, %70 : vector<2x32xf32>
    %74 = arith.mulf %65, %15 : vector<2x32xf32>
    %75 = arith.addf %73, %74 : vector<2x32xf32>
    %76 = vector.extract_strided_slice %9 {offsets = [2, 0], sizes = [2, 96], strides = [1, 1]} : vector<16x192xf32> to vector<2x96xf32>
    %77 = vector.extract_strided_slice %9 {offsets = [12, 96], sizes = [2, 96], strides = [1, 1]} : vector<16x192xf32> to vector<2x96xf32>
    %cst_27 = arith.constant dense<0.000000e+00> : vector<2x96xf32>
    %78 = tpu.matmul %46, %10, %cst_27 {dimension_numbers = #tpu.dot_dimension_numbers<[1], [0], [0], [1], [0, 0, 1, 1], [], []>} : vector<2x32xf32>, vector<32x96xf32>, vector<2x96xf32> -> vector<2x96xf32>
    %79 = vector.broadcast %12 : vector<1x96xf32> to vector<2x96xf32>
    %80 = arith.addf %78, %79 : vector<2x96xf32>
    %81 = vector.extract_strided_slice %76 {offsets = [0, 0], sizes = [2, 32], strides = [1, 1]} : vector<2x96xf32> to vector<2x32xf32>
    %82 = vector.extract_strided_slice %80 {offsets = [0, 0], sizes = [2, 32], strides = [1, 1]} : vector<2x96xf32> to vector<2x32xf32>
    %83 = arith.addf %81, %82 : vector<2x32xf32>
    %84 = arith.negf %83 : vector<2x32xf32>
    %85 = math.exp %84 : vector<2x32xf32>
    %cst_28 = arith.constant 1.000000e+00 : f32
    %86 = vector.broadcast %cst_28 : f32 to vector<2x32xf32>
    %87 = arith.addf %86, %85 : vector<2x32xf32>
    %88 = arith.divf %86, %87 : vector<2x32xf32>
    %89 = vector.extract_strided_slice %76 {offsets = [0, 32], sizes = [2, 32], strides = [1, 1]} : vector<2x96xf32> to vector<2x32xf32>
    %90 = vector.extract_strided_slice %80 {offsets = [0, 32], sizes = [2, 32], strides = [1, 1]} : vector<2x96xf32> to vector<2x32xf32>
    %91 = arith.addf %89, %90 : vector<2x32xf32>
    %92 = arith.negf %91 : vector<2x32xf32>
    %93 = math.exp %92 : vector<2x32xf32>
    %cst_29 = arith.constant 1.000000e+00 : f32
    %94 = vector.broadcast %cst_29 : f32 to vector<2x32xf32>
    %95 = arith.addf %94, %93 : vector<2x32xf32>
    %96 = arith.divf %94, %95 : vector<2x32xf32>
    %97 = vector.extract_strided_slice %76 {offsets = [0, 64], sizes = [2, 32], strides = [1, 1]} : vector<2x96xf32> to vector<2x32xf32>
    %98 = vector.extract_strided_slice %80 {offsets = [0, 64], sizes = [2, 32], strides = [1, 1]} : vector<2x96xf32> to vector<2x32xf32>
    %99 = arith.mulf %88, %98 : vector<2x32xf32>
    %100 = arith.addf %97, %99 : vector<2x32xf32>
    %101 = math.tanh %100 : vector<2x32xf32>
    %cst_30 = arith.constant 1.000000e+00 : f32
    %102 = vector.broadcast %cst_30 : f32 to vector<2x32xf32>
    %103 = arith.subf %102, %96 : vector<2x32xf32>
    %104 = arith.mulf %103, %101 : vector<2x32xf32>
    %105 = arith.mulf %96, %46 : vector<2x32xf32>
    %106 = arith.addf %104, %105 : vector<2x32xf32>
    %cst_31 = arith.constant dense<0.000000e+00> : vector<2x96xf32>
    %107 = tpu.matmul %75, %11, %cst_31 {dimension_numbers = #tpu.dot_dimension_numbers<[1], [0], [0], [1], [0, 0, 1, 1], [], []>} : vector<2x32xf32>, vector<32x96xf32>, vector<2x96xf32> -> vector<2x96xf32>
    %108 = vector.broadcast %13 : vector<1x96xf32> to vector<2x96xf32>
    %109 = arith.addf %107, %108 : vector<2x96xf32>
    %110 = vector.extract_strided_slice %77 {offsets = [0, 0], sizes = [2, 32], strides = [1, 1]} : vector<2x96xf32> to vector<2x32xf32>
    %111 = vector.extract_strided_slice %109 {offsets = [0, 0], sizes = [2, 32], strides = [1, 1]} : vector<2x96xf32> to vector<2x32xf32>
    %112 = arith.addf %110, %111 : vector<2x32xf32>
    %113 = arith.negf %112 : vector<2x32xf32>
    %114 = math.exp %113 : vector<2x32xf32>
    %cst_32 = arith.constant 1.000000e+00 : f32
    %115 = vector.broadcast %cst_32 : f32 to vector<2x32xf32>
    %116 = arith.addf %115, %114 : vector<2x32xf32>
    %117 = arith.divf %115, %116 : vector<2x32xf32>
    %118 = vector.extract_strided_slice %77 {offsets = [0, 32], sizes = [2, 32], strides = [1, 1]} : vector<2x96xf32> to vector<2x32xf32>
    %119 = vector.extract_strided_slice %109 {offsets = [0, 32], sizes = [2, 32], strides = [1, 1]} : vector<2x96xf32> to vector<2x32xf32>
    %120 = arith.addf %118, %119 : vector<2x32xf32>
    %121 = arith.negf %120 : vector<2x32xf32>
    %122 = math.exp %121 : vector<2x32xf32>
    %cst_33 = arith.constant 1.000000e+00 : f32
    %123 = vector.broadcast %cst_33 : f32 to vector<2x32xf32>
    %124 = arith.addf %123, %122 : vector<2x32xf32>
    %125 = arith.divf %123, %124 : vector<2x32xf32>
    %126 = vector.extract_strided_slice %77 {offsets = [0, 64], sizes = [2, 32], strides = [1, 1]} : vector<2x96xf32> to vector<2x32xf32>
    %127 = vector.extract_strided_slice %109 {offsets = [0, 64], sizes = [2, 32], strides = [1, 1]} : vector<2x96xf32> to vector<2x32xf32>
    %128 = arith.mulf %117, %127 : vector<2x32xf32>
    %129 = arith.addf %126, %128 : vector<2x32xf32>
    %130 = math.tanh %129 : vector<2x32xf32>
    %cst_34 = arith.constant 1.000000e+00 : f32
    %131 = vector.broadcast %cst_34 : f32 to vector<2x32xf32>
    %132 = arith.subf %131, %125 : vector<2x32xf32>
    %133 = arith.mulf %132, %130 : vector<2x32xf32>
    %134 = arith.mulf %125, %75 : vector<2x32xf32>
    %135 = arith.addf %133, %134 : vector<2x32xf32>
    %136 = vector.extract_strided_slice %9 {offsets = [4, 0], sizes = [2, 96], strides = [1, 1]} : vector<16x192xf32> to vector<2x96xf32>
    %137 = vector.extract_strided_slice %9 {offsets = [10, 96], sizes = [2, 96], strides = [1, 1]} : vector<16x192xf32> to vector<2x96xf32>
    %cst_35 = arith.constant dense<0.000000e+00> : vector<2x96xf32>
    %138 = tpu.matmul %106, %10, %cst_35 {dimension_numbers = #tpu.dot_dimension_numbers<[1], [0], [0], [1], [0, 0, 1, 1], [], []>} : vector<2x32xf32>, vector<32x96xf32>, vector<2x96xf32> -> vector<2x96xf32>
    %139 = vector.broadcast %12 : vector<1x96xf32> to vector<2x96xf32>
    %140 = arith.addf %138, %139 : vector<2x96xf32>
    %141 = vector.extract_strided_slice %136 {offsets = [0, 0], sizes = [2, 32], strides = [1, 1]} : vector<2x96xf32> to vector<2x32xf32>
    %142 = vector.extract_strided_slice %140 {offsets = [0, 0], sizes = [2, 32], strides = [1, 1]} : vector<2x96xf32> to vector<2x32xf32>
    %143 = arith.addf %141, %142 : vector<2x32xf32>
    %144 = arith.negf %143 : vector<2x32xf32>
    %145 = math.exp %144 : vector<2x32xf32>
    %cst_36 = arith.constant 1.000000e+00 : f32
    %146 = vector.broadcast %cst_36 : f32 to vector<2x32xf32>
    %147 = arith.addf %146, %145 : vector<2x32xf32>
    %148 = arith.divf %146, %147 : vector<2x32xf32>
    %149 = vector.extract_strided_slice %136 {offsets = [0, 32], sizes = [2, 32], strides = [1, 1]} : vector<2x96xf32> to vector<2x32xf32>
    %150 = vector.extract_strided_slice %140 {offsets = [0, 32], sizes = [2, 32], strides = [1, 1]} : vector<2x96xf32> to vector<2x32xf32>
    %151 = arith.addf %149, %150 : vector<2x32xf32>
    %152 = arith.negf %151 : vector<2x32xf32>
    %153 = math.exp %152 : vector<2x32xf32>
    %cst_37 = arith.constant 1.000000e+00 : f32
    %154 = vector.broadcast %cst_37 : f32 to vector<2x32xf32>
    %155 = arith.addf %154, %153 : vector<2x32xf32>
    %156 = arith.divf %154, %155 : vector<2x32xf32>
    %157 = vector.extract_strided_slice %136 {offsets = [0, 64], sizes = [2, 32], strides = [1, 1]} : vector<2x96xf32> to vector<2x32xf32>
    %158 = vector.extract_strided_slice %140 {offsets = [0, 64], sizes = [2, 32], strides = [1, 1]} : vector<2x96xf32> to vector<2x32xf32>
    %159 = arith.mulf %148, %158 : vector<2x32xf32>
    %160 = arith.addf %157, %159 : vector<2x32xf32>
    %161 = math.tanh %160 : vector<2x32xf32>
    %cst_38 = arith.constant 1.000000e+00 : f32
    %162 = vector.broadcast %cst_38 : f32 to vector<2x32xf32>
    %163 = arith.subf %162, %156 : vector<2x32xf32>
    %164 = arith.mulf %163, %161 : vector<2x32xf32>
    %165 = arith.mulf %156, %106 : vector<2x32xf32>
    %166 = arith.addf %164, %165 : vector<2x32xf32>
    %cst_39 = arith.constant dense<0.000000e+00> : vector<2x96xf32>
    %167 = tpu.matmul %135, %11, %cst_39 {dimension_numbers = #tpu.dot_dimension_numbers<[1], [0], [0], [1], [0, 0, 1, 1], [], []>} : vector<2x32xf32>, vector<32x96xf32>, vector<2x96xf32> -> vector<2x96xf32>
    %168 = vector.broadcast %13 : vector<1x96xf32> to vector<2x96xf32>
    %169 = arith.addf %167, %168 : vector<2x96xf32>
    %170 = vector.extract_strided_slice %137 {offsets = [0, 0], sizes = [2, 32], strides = [1, 1]} : vector<2x96xf32> to vector<2x32xf32>
    %171 = vector.extract_strided_slice %169 {offsets = [0, 0], sizes = [2, 32], strides = [1, 1]} : vector<2x96xf32> to vector<2x32xf32>
    %172 = arith.addf %170, %171 : vector<2x32xf32>
    %173 = arith.negf %172 : vector<2x32xf32>
    %174 = math.exp %173 : vector<2x32xf32>
    %cst_40 = arith.constant 1.000000e+00 : f32
    %175 = vector.broadcast %cst_40 : f32 to vector<2x32xf32>
    %176 = arith.addf %175, %174 : vector<2x32xf32>
    %177 = arith.divf %175, %176 : vector<2x32xf32>
    %178 = vector.extract_strided_slice %137 {offsets = [0, 32], sizes = [2, 32], strides = [1, 1]} : vector<2x96xf32> to vector<2x32xf32>
    %179 = vector.extract_strided_slice %169 {offsets = [0, 32], sizes = [2, 32], strides = [1, 1]} : vector<2x96xf32> to vector<2x32xf32>
    %180 = arith.addf %178, %179 : vector<2x32xf32>
    %181 = arith.negf %180 : vector<2x32xf32>
    %182 = math.exp %181 : vector<2x32xf32>
    %cst_41 = arith.constant 1.000000e+00 : f32
    %183 = vector.broadcast %cst_41 : f32 to vector<2x32xf32>
    %184 = arith.addf %183, %182 : vector<2x32xf32>
    %185 = arith.divf %183, %184 : vector<2x32xf32>
    %186 = vector.extract_strided_slice %137 {offsets = [0, 64], sizes = [2, 32], strides = [1, 1]} : vector<2x96xf32> to vector<2x32xf32>
    %187 = vector.extract_strided_slice %169 {offsets = [0, 64], sizes = [2, 32], strides = [1, 1]} : vector<2x96xf32> to vector<2x32xf32>
    %188 = arith.mulf %177, %187 : vector<2x32xf32>
    %189 = arith.addf %186, %188 : vector<2x32xf32>
    %190 = math.tanh %189 : vector<2x32xf32>
    %cst_42 = arith.constant 1.000000e+00 : f32
    %191 = vector.broadcast %cst_42 : f32 to vector<2x32xf32>
    %192 = arith.subf %191, %185 : vector<2x32xf32>
    %193 = arith.mulf %192, %190 : vector<2x32xf32>
    %194 = arith.mulf %185, %135 : vector<2x32xf32>
    %195 = arith.addf %193, %194 : vector<2x32xf32>
    %196 = vector.extract_strided_slice %9 {offsets = [6, 0], sizes = [2, 96], strides = [1, 1]} : vector<16x192xf32> to vector<2x96xf32>
    %197 = vector.extract_strided_slice %9 {offsets = [8, 96], sizes = [2, 96], strides = [1, 1]} : vector<16x192xf32> to vector<2x96xf32>
    %cst_43 = arith.constant dense<0.000000e+00> : vector<2x96xf32>
    %198 = tpu.matmul %166, %10, %cst_43 {dimension_numbers = #tpu.dot_dimension_numbers<[1], [0], [0], [1], [0, 0, 1, 1], [], []>} : vector<2x32xf32>, vector<32x96xf32>, vector<2x96xf32> -> vector<2x96xf32>
    %199 = vector.broadcast %12 : vector<1x96xf32> to vector<2x96xf32>
    %200 = arith.addf %198, %199 : vector<2x96xf32>
    %201 = vector.extract_strided_slice %196 {offsets = [0, 0], sizes = [2, 32], strides = [1, 1]} : vector<2x96xf32> to vector<2x32xf32>
    %202 = vector.extract_strided_slice %200 {offsets = [0, 0], sizes = [2, 32], strides = [1, 1]} : vector<2x96xf32> to vector<2x32xf32>
    %203 = arith.addf %201, %202 : vector<2x32xf32>
    %204 = arith.negf %203 : vector<2x32xf32>
    %205 = math.exp %204 : vector<2x32xf32>
    %cst_44 = arith.constant 1.000000e+00 : f32
    %206 = vector.broadcast %cst_44 : f32 to vector<2x32xf32>
    %207 = arith.addf %206, %205 : vector<2x32xf32>
    %208 = arith.divf %206, %207 : vector<2x32xf32>
    %209 = vector.extract_strided_slice %196 {offsets = [0, 32], sizes = [2, 32], strides = [1, 1]} : vector<2x96xf32> to vector<2x32xf32>
    %210 = vector.extract_strided_slice %200 {offsets = [0, 32], sizes = [2, 32], strides = [1, 1]} : vector<2x96xf32> to vector<2x32xf32>
    %211 = arith.addf %209, %210 : vector<2x32xf32>
    %212 = arith.negf %211 : vector<2x32xf32>
    %213 = math.exp %212 : vector<2x32xf32>
    %cst_45 = arith.constant 1.000000e+00 : f32
    %214 = vector.broadcast %cst_45 : f32 to vector<2x32xf32>
    %215 = arith.addf %214, %213 : vector<2x32xf32>
    %216 = arith.divf %214, %215 : vector<2x32xf32>
    %217 = vector.extract_strided_slice %196 {offsets = [0, 64], sizes = [2, 32], strides = [1, 1]} : vector<2x96xf32> to vector<2x32xf32>
    %218 = vector.extract_strided_slice %200 {offsets = [0, 64], sizes = [2, 32], strides = [1, 1]} : vector<2x96xf32> to vector<2x32xf32>
    %219 = arith.mulf %208, %218 : vector<2x32xf32>
    %220 = arith.addf %217, %219 : vector<2x32xf32>
    %221 = math.tanh %220 : vector<2x32xf32>
    %cst_46 = arith.constant 1.000000e+00 : f32
    %222 = vector.broadcast %cst_46 : f32 to vector<2x32xf32>
    %223 = arith.subf %222, %216 : vector<2x32xf32>
    %224 = arith.mulf %223, %221 : vector<2x32xf32>
    %225 = arith.mulf %216, %166 : vector<2x32xf32>
    %226 = arith.addf %224, %225 : vector<2x32xf32>
    %cst_47 = arith.constant dense<0.000000e+00> : vector<2x96xf32>
    %227 = tpu.matmul %195, %11, %cst_47 {dimension_numbers = #tpu.dot_dimension_numbers<[1], [0], [0], [1], [0, 0, 1, 1], [], []>} : vector<2x32xf32>, vector<32x96xf32>, vector<2x96xf32> -> vector<2x96xf32>
    %228 = vector.broadcast %13 : vector<1x96xf32> to vector<2x96xf32>
    %229 = arith.addf %227, %228 : vector<2x96xf32>
    %230 = vector.extract_strided_slice %197 {offsets = [0, 0], sizes = [2, 32], strides = [1, 1]} : vector<2x96xf32> to vector<2x32xf32>
    %231 = vector.extract_strided_slice %229 {offsets = [0, 0], sizes = [2, 32], strides = [1, 1]} : vector<2x96xf32> to vector<2x32xf32>
    %232 = arith.addf %230, %231 : vector<2x32xf32>
    %233 = arith.negf %232 : vector<2x32xf32>
    %234 = math.exp %233 : vector<2x32xf32>
    %cst_48 = arith.constant 1.000000e+00 : f32
    %235 = vector.broadcast %cst_48 : f32 to vector<2x32xf32>
    %236 = arith.addf %235, %234 : vector<2x32xf32>
    %237 = arith.divf %235, %236 : vector<2x32xf32>
    %238 = vector.extract_strided_slice %197 {offsets = [0, 32], sizes = [2, 32], strides = [1, 1]} : vector<2x96xf32> to vector<2x32xf32>
    %239 = vector.extract_strided_slice %229 {offsets = [0, 32], sizes = [2, 32], strides = [1, 1]} : vector<2x96xf32> to vector<2x32xf32>
    %240 = arith.addf %238, %239 : vector<2x32xf32>
    %241 = arith.negf %240 : vector<2x32xf32>
    %242 = math.exp %241 : vector<2x32xf32>
    %cst_49 = arith.constant 1.000000e+00 : f32
    %243 = vector.broadcast %cst_49 : f32 to vector<2x32xf32>
    %244 = arith.addf %243, %242 : vector<2x32xf32>
    %245 = arith.divf %243, %244 : vector<2x32xf32>
    %246 = vector.extract_strided_slice %197 {offsets = [0, 64], sizes = [2, 32], strides = [1, 1]} : vector<2x96xf32> to vector<2x32xf32>
    %247 = vector.extract_strided_slice %229 {offsets = [0, 64], sizes = [2, 32], strides = [1, 1]} : vector<2x96xf32> to vector<2x32xf32>
    %248 = arith.mulf %237, %247 : vector<2x32xf32>
    %249 = arith.addf %246, %248 : vector<2x32xf32>
    %250 = math.tanh %249 : vector<2x32xf32>
    %cst_50 = arith.constant 1.000000e+00 : f32
    %251 = vector.broadcast %cst_50 : f32 to vector<2x32xf32>
    %252 = arith.subf %251, %245 : vector<2x32xf32>
    %253 = arith.mulf %252, %250 : vector<2x32xf32>
    %254 = arith.mulf %245, %195 : vector<2x32xf32>
    %255 = arith.addf %253, %254 : vector<2x32xf32>
    %256 = vector.extract_strided_slice %9 {offsets = [8, 0], sizes = [2, 96], strides = [1, 1]} : vector<16x192xf32> to vector<2x96xf32>
    %257 = vector.extract_strided_slice %9 {offsets = [6, 96], sizes = [2, 96], strides = [1, 1]} : vector<16x192xf32> to vector<2x96xf32>
    %cst_51 = arith.constant dense<0.000000e+00> : vector<2x96xf32>
    %258 = tpu.matmul %226, %10, %cst_51 {dimension_numbers = #tpu.dot_dimension_numbers<[1], [0], [0], [1], [0, 0, 1, 1], [], []>} : vector<2x32xf32>, vector<32x96xf32>, vector<2x96xf32> -> vector<2x96xf32>
    %259 = vector.broadcast %12 : vector<1x96xf32> to vector<2x96xf32>
    %260 = arith.addf %258, %259 : vector<2x96xf32>
    %261 = vector.extract_strided_slice %256 {offsets = [0, 0], sizes = [2, 32], strides = [1, 1]} : vector<2x96xf32> to vector<2x32xf32>
    %262 = vector.extract_strided_slice %260 {offsets = [0, 0], sizes = [2, 32], strides = [1, 1]} : vector<2x96xf32> to vector<2x32xf32>
    %263 = arith.addf %261, %262 : vector<2x32xf32>
    %264 = arith.negf %263 : vector<2x32xf32>
    %265 = math.exp %264 : vector<2x32xf32>
    %cst_52 = arith.constant 1.000000e+00 : f32
    %266 = vector.broadcast %cst_52 : f32 to vector<2x32xf32>
    %267 = arith.addf %266, %265 : vector<2x32xf32>
    %268 = arith.divf %266, %267 : vector<2x32xf32>
    %269 = vector.extract_strided_slice %256 {offsets = [0, 32], sizes = [2, 32], strides = [1, 1]} : vector<2x96xf32> to vector<2x32xf32>
    %270 = vector.extract_strided_slice %260 {offsets = [0, 32], sizes = [2, 32], strides = [1, 1]} : vector<2x96xf32> to vector<2x32xf32>
    %271 = arith.addf %269, %270 : vector<2x32xf32>
    %272 = arith.negf %271 : vector<2x32xf32>
    %273 = math.exp %272 : vector<2x32xf32>
    %cst_53 = arith.constant 1.000000e+00 : f32
    %274 = vector.broadcast %cst_53 : f32 to vector<2x32xf32>
    %275 = arith.addf %274, %273 : vector<2x32xf32>
    %276 = arith.divf %274, %275 : vector<2x32xf32>
    %277 = vector.extract_strided_slice %256 {offsets = [0, 64], sizes = [2, 32], strides = [1, 1]} : vector<2x96xf32> to vector<2x32xf32>
    %278 = vector.extract_strided_slice %260 {offsets = [0, 64], sizes = [2, 32], strides = [1, 1]} : vector<2x96xf32> to vector<2x32xf32>
    %279 = arith.mulf %268, %278 : vector<2x32xf32>
    %280 = arith.addf %277, %279 : vector<2x32xf32>
    %281 = math.tanh %280 : vector<2x32xf32>
    %cst_54 = arith.constant 1.000000e+00 : f32
    %282 = vector.broadcast %cst_54 : f32 to vector<2x32xf32>
    %283 = arith.subf %282, %276 : vector<2x32xf32>
    %284 = arith.mulf %283, %281 : vector<2x32xf32>
    %285 = arith.mulf %276, %226 : vector<2x32xf32>
    %286 = arith.addf %284, %285 : vector<2x32xf32>
    %cst_55 = arith.constant dense<0.000000e+00> : vector<2x96xf32>
    %287 = tpu.matmul %255, %11, %cst_55 {dimension_numbers = #tpu.dot_dimension_numbers<[1], [0], [0], [1], [0, 0, 1, 1], [], []>} : vector<2x32xf32>, vector<32x96xf32>, vector<2x96xf32> -> vector<2x96xf32>
    %288 = vector.broadcast %13 : vector<1x96xf32> to vector<2x96xf32>
    %289 = arith.addf %287, %288 : vector<2x96xf32>
    %290 = vector.extract_strided_slice %257 {offsets = [0, 0], sizes = [2, 32], strides = [1, 1]} : vector<2x96xf32> to vector<2x32xf32>
    %291 = vector.extract_strided_slice %289 {offsets = [0, 0], sizes = [2, 32], strides = [1, 1]} : vector<2x96xf32> to vector<2x32xf32>
    %292 = arith.addf %290, %291 : vector<2x32xf32>
    %293 = arith.negf %292 : vector<2x32xf32>
    %294 = math.exp %293 : vector<2x32xf32>
    %cst_56 = arith.constant 1.000000e+00 : f32
    %295 = vector.broadcast %cst_56 : f32 to vector<2x32xf32>
    %296 = arith.addf %295, %294 : vector<2x32xf32>
    %297 = arith.divf %295, %296 : vector<2x32xf32>
    %298 = vector.extract_strided_slice %257 {offsets = [0, 32], sizes = [2, 32], strides = [1, 1]} : vector<2x96xf32> to vector<2x32xf32>
    %299 = vector.extract_strided_slice %289 {offsets = [0, 32], sizes = [2, 32], strides = [1, 1]} : vector<2x96xf32> to vector<2x32xf32>
    %300 = arith.addf %298, %299 : vector<2x32xf32>
    %301 = arith.negf %300 : vector<2x32xf32>
    %302 = math.exp %301 : vector<2x32xf32>
    %cst_57 = arith.constant 1.000000e+00 : f32
    %303 = vector.broadcast %cst_57 : f32 to vector<2x32xf32>
    %304 = arith.addf %303, %302 : vector<2x32xf32>
    %305 = arith.divf %303, %304 : vector<2x32xf32>
    %306 = vector.extract_strided_slice %257 {offsets = [0, 64], sizes = [2, 32], strides = [1, 1]} : vector<2x96xf32> to vector<2x32xf32>
    %307 = vector.extract_strided_slice %289 {offsets = [0, 64], sizes = [2, 32], strides = [1, 1]} : vector<2x96xf32> to vector<2x32xf32>
    %308 = arith.mulf %297, %307 : vector<2x32xf32>
    %309 = arith.addf %306, %308 : vector<2x32xf32>
    %310 = math.tanh %309 : vector<2x32xf32>
    %cst_58 = arith.constant 1.000000e+00 : f32
    %311 = vector.broadcast %cst_58 : f32 to vector<2x32xf32>
    %312 = arith.subf %311, %305 : vector<2x32xf32>
    %313 = arith.mulf %312, %310 : vector<2x32xf32>
    %314 = arith.mulf %305, %255 : vector<2x32xf32>
    %315 = arith.addf %313, %314 : vector<2x32xf32>
    %316 = vector.extract_strided_slice %9 {offsets = [10, 0], sizes = [2, 96], strides = [1, 1]} : vector<16x192xf32> to vector<2x96xf32>
    %317 = vector.extract_strided_slice %9 {offsets = [4, 96], sizes = [2, 96], strides = [1, 1]} : vector<16x192xf32> to vector<2x96xf32>
    %cst_59 = arith.constant dense<0.000000e+00> : vector<2x96xf32>
    %318 = tpu.matmul %286, %10, %cst_59 {dimension_numbers = #tpu.dot_dimension_numbers<[1], [0], [0], [1], [0, 0, 1, 1], [], []>} : vector<2x32xf32>, vector<32x96xf32>, vector<2x96xf32> -> vector<2x96xf32>
    %319 = vector.broadcast %12 : vector<1x96xf32> to vector<2x96xf32>
    %320 = arith.addf %318, %319 : vector<2x96xf32>
    %321 = vector.extract_strided_slice %316 {offsets = [0, 0], sizes = [2, 32], strides = [1, 1]} : vector<2x96xf32> to vector<2x32xf32>
    %322 = vector.extract_strided_slice %320 {offsets = [0, 0], sizes = [2, 32], strides = [1, 1]} : vector<2x96xf32> to vector<2x32xf32>
    %323 = arith.addf %321, %322 : vector<2x32xf32>
    %324 = arith.negf %323 : vector<2x32xf32>
    %325 = math.exp %324 : vector<2x32xf32>
    %cst_60 = arith.constant 1.000000e+00 : f32
    %326 = vector.broadcast %cst_60 : f32 to vector<2x32xf32>
    %327 = arith.addf %326, %325 : vector<2x32xf32>
    %328 = arith.divf %326, %327 : vector<2x32xf32>
    %329 = vector.extract_strided_slice %316 {offsets = [0, 32], sizes = [2, 32], strides = [1, 1]} : vector<2x96xf32> to vector<2x32xf32>
    %330 = vector.extract_strided_slice %320 {offsets = [0, 32], sizes = [2, 32], strides = [1, 1]} : vector<2x96xf32> to vector<2x32xf32>
    %331 = arith.addf %329, %330 : vector<2x32xf32>
    %332 = arith.negf %331 : vector<2x32xf32>
    %333 = math.exp %332 : vector<2x32xf32>
    %cst_61 = arith.constant 1.000000e+00 : f32
    %334 = vector.broadcast %cst_61 : f32 to vector<2x32xf32>
    %335 = arith.addf %334, %333 : vector<2x32xf32>
    %336 = arith.divf %334, %335 : vector<2x32xf32>
    %337 = vector.extract_strided_slice %316 {offsets = [0, 64], sizes = [2, 32], strides = [1, 1]} : vector<2x96xf32> to vector<2x32xf32>
    %338 = vector.extract_strided_slice %320 {offsets = [0, 64], sizes = [2, 32], strides = [1, 1]} : vector<2x96xf32> to vector<2x32xf32>
    %339 = arith.mulf %328, %338 : vector<2x32xf32>
    %340 = arith.addf %337, %339 : vector<2x32xf32>
    %341 = math.tanh %340 : vector<2x32xf32>
    %cst_62 = arith.constant 1.000000e+00 : f32
    %342 = vector.broadcast %cst_62 : f32 to vector<2x32xf32>
    %343 = arith.subf %342, %336 : vector<2x32xf32>
    %344 = arith.mulf %343, %341 : vector<2x32xf32>
    %345 = arith.mulf %336, %286 : vector<2x32xf32>
    %346 = arith.addf %344, %345 : vector<2x32xf32>
    %cst_63 = arith.constant dense<0.000000e+00> : vector<2x96xf32>
    %347 = tpu.matmul %315, %11, %cst_63 {dimension_numbers = #tpu.dot_dimension_numbers<[1], [0], [0], [1], [0, 0, 1, 1], [], []>} : vector<2x32xf32>, vector<32x96xf32>, vector<2x96xf32> -> vector<2x96xf32>
    %348 = vector.broadcast %13 : vector<1x96xf32> to vector<2x96xf32>
    %349 = arith.addf %347, %348 : vector<2x96xf32>
    %350 = vector.extract_strided_slice %317 {offsets = [0, 0], sizes = [2, 32], strides = [1, 1]} : vector<2x96xf32> to vector<2x32xf32>
    %351 = vector.extract_strided_slice %349 {offsets = [0, 0], sizes = [2, 32], strides = [1, 1]} : vector<2x96xf32> to vector<2x32xf32>
    %352 = arith.addf %350, %351 : vector<2x32xf32>
    %353 = arith.negf %352 : vector<2x32xf32>
    %354 = math.exp %353 : vector<2x32xf32>
    %cst_64 = arith.constant 1.000000e+00 : f32
    %355 = vector.broadcast %cst_64 : f32 to vector<2x32xf32>
    %356 = arith.addf %355, %354 : vector<2x32xf32>
    %357 = arith.divf %355, %356 : vector<2x32xf32>
    %358 = vector.extract_strided_slice %317 {offsets = [0, 32], sizes = [2, 32], strides = [1, 1]} : vector<2x96xf32> to vector<2x32xf32>
    %359 = vector.extract_strided_slice %349 {offsets = [0, 32], sizes = [2, 32], strides = [1, 1]} : vector<2x96xf32> to vector<2x32xf32>
    %360 = arith.addf %358, %359 : vector<2x32xf32>
    %361 = arith.negf %360 : vector<2x32xf32>
    %362 = math.exp %361 : vector<2x32xf32>
    %cst_65 = arith.constant 1.000000e+00 : f32
    %363 = vector.broadcast %cst_65 : f32 to vector<2x32xf32>
    %364 = arith.addf %363, %362 : vector<2x32xf32>
    %365 = arith.divf %363, %364 : vector<2x32xf32>
    %366 = vector.extract_strided_slice %317 {offsets = [0, 64], sizes = [2, 32], strides = [1, 1]} : vector<2x96xf32> to vector<2x32xf32>
    %367 = vector.extract_strided_slice %349 {offsets = [0, 64], sizes = [2, 32], strides = [1, 1]} : vector<2x96xf32> to vector<2x32xf32>
    %368 = arith.mulf %357, %367 : vector<2x32xf32>
    %369 = arith.addf %366, %368 : vector<2x32xf32>
    %370 = math.tanh %369 : vector<2x32xf32>
    %cst_66 = arith.constant 1.000000e+00 : f32
    %371 = vector.broadcast %cst_66 : f32 to vector<2x32xf32>
    %372 = arith.subf %371, %365 : vector<2x32xf32>
    %373 = arith.mulf %372, %370 : vector<2x32xf32>
    %374 = arith.mulf %365, %315 : vector<2x32xf32>
    %375 = arith.addf %373, %374 : vector<2x32xf32>
    %376 = vector.extract_strided_slice %9 {offsets = [12, 0], sizes = [2, 96], strides = [1, 1]} : vector<16x192xf32> to vector<2x96xf32>
    %377 = vector.extract_strided_slice %9 {offsets = [2, 96], sizes = [2, 96], strides = [1, 1]} : vector<16x192xf32> to vector<2x96xf32>
    %cst_67 = arith.constant dense<0.000000e+00> : vector<2x96xf32>
    %378 = tpu.matmul %346, %10, %cst_67 {dimension_numbers = #tpu.dot_dimension_numbers<[1], [0], [0], [1], [0, 0, 1, 1], [], []>} : vector<2x32xf32>, vector<32x96xf32>, vector<2x96xf32> -> vector<2x96xf32>
    %379 = vector.broadcast %12 : vector<1x96xf32> to vector<2x96xf32>
    %380 = arith.addf %378, %379 : vector<2x96xf32>
    %381 = vector.extract_strided_slice %376 {offsets = [0, 0], sizes = [2, 32], strides = [1, 1]} : vector<2x96xf32> to vector<2x32xf32>
    %382 = vector.extract_strided_slice %380 {offsets = [0, 0], sizes = [2, 32], strides = [1, 1]} : vector<2x96xf32> to vector<2x32xf32>
    %383 = arith.addf %381, %382 : vector<2x32xf32>
    %384 = arith.negf %383 : vector<2x32xf32>
    %385 = math.exp %384 : vector<2x32xf32>
    %cst_68 = arith.constant 1.000000e+00 : f32
    %386 = vector.broadcast %cst_68 : f32 to vector<2x32xf32>
    %387 = arith.addf %386, %385 : vector<2x32xf32>
    %388 = arith.divf %386, %387 : vector<2x32xf32>
    %389 = vector.extract_strided_slice %376 {offsets = [0, 32], sizes = [2, 32], strides = [1, 1]} : vector<2x96xf32> to vector<2x32xf32>
    %390 = vector.extract_strided_slice %380 {offsets = [0, 32], sizes = [2, 32], strides = [1, 1]} : vector<2x96xf32> to vector<2x32xf32>
    %391 = arith.addf %389, %390 : vector<2x32xf32>
    %392 = arith.negf %391 : vector<2x32xf32>
    %393 = math.exp %392 : vector<2x32xf32>
    %cst_69 = arith.constant 1.000000e+00 : f32
    %394 = vector.broadcast %cst_69 : f32 to vector<2x32xf32>
    %395 = arith.addf %394, %393 : vector<2x32xf32>
    %396 = arith.divf %394, %395 : vector<2x32xf32>
    %397 = vector.extract_strided_slice %376 {offsets = [0, 64], sizes = [2, 32], strides = [1, 1]} : vector<2x96xf32> to vector<2x32xf32>
    %398 = vector.extract_strided_slice %380 {offsets = [0, 64], sizes = [2, 32], strides = [1, 1]} : vector<2x96xf32> to vector<2x32xf32>
    %399 = arith.mulf %388, %398 : vector<2x32xf32>
    %400 = arith.addf %397, %399 : vector<2x32xf32>
    %401 = math.tanh %400 : vector<2x32xf32>
    %cst_70 = arith.constant 1.000000e+00 : f32
    %402 = vector.broadcast %cst_70 : f32 to vector<2x32xf32>
    %403 = arith.subf %402, %396 : vector<2x32xf32>
    %404 = arith.mulf %403, %401 : vector<2x32xf32>
    %405 = arith.mulf %396, %346 : vector<2x32xf32>
    %406 = arith.addf %404, %405 : vector<2x32xf32>
    %cst_71 = arith.constant dense<0.000000e+00> : vector<2x96xf32>
    %407 = tpu.matmul %375, %11, %cst_71 {dimension_numbers = #tpu.dot_dimension_numbers<[1], [0], [0], [1], [0, 0, 1, 1], [], []>} : vector<2x32xf32>, vector<32x96xf32>, vector<2x96xf32> -> vector<2x96xf32>
    %408 = vector.broadcast %13 : vector<1x96xf32> to vector<2x96xf32>
    %409 = arith.addf %407, %408 : vector<2x96xf32>
    %410 = vector.extract_strided_slice %377 {offsets = [0, 0], sizes = [2, 32], strides = [1, 1]} : vector<2x96xf32> to vector<2x32xf32>
    %411 = vector.extract_strided_slice %409 {offsets = [0, 0], sizes = [2, 32], strides = [1, 1]} : vector<2x96xf32> to vector<2x32xf32>
    %412 = arith.addf %410, %411 : vector<2x32xf32>
    %413 = arith.negf %412 : vector<2x32xf32>
    %414 = math.exp %413 : vector<2x32xf32>
    %cst_72 = arith.constant 1.000000e+00 : f32
    %415 = vector.broadcast %cst_72 : f32 to vector<2x32xf32>
    %416 = arith.addf %415, %414 : vector<2x32xf32>
    %417 = arith.divf %415, %416 : vector<2x32xf32>
    %418 = vector.extract_strided_slice %377 {offsets = [0, 32], sizes = [2, 32], strides = [1, 1]} : vector<2x96xf32> to vector<2x32xf32>
    %419 = vector.extract_strided_slice %409 {offsets = [0, 32], sizes = [2, 32], strides = [1, 1]} : vector<2x96xf32> to vector<2x32xf32>
    %420 = arith.addf %418, %419 : vector<2x32xf32>
    %421 = arith.negf %420 : vector<2x32xf32>
    %422 = math.exp %421 : vector<2x32xf32>
    %cst_73 = arith.constant 1.000000e+00 : f32
    %423 = vector.broadcast %cst_73 : f32 to vector<2x32xf32>
    %424 = arith.addf %423, %422 : vector<2x32xf32>
    %425 = arith.divf %423, %424 : vector<2x32xf32>
    %426 = vector.extract_strided_slice %377 {offsets = [0, 64], sizes = [2, 32], strides = [1, 1]} : vector<2x96xf32> to vector<2x32xf32>
    %427 = vector.extract_strided_slice %409 {offsets = [0, 64], sizes = [2, 32], strides = [1, 1]} : vector<2x96xf32> to vector<2x32xf32>
    %428 = arith.mulf %417, %427 : vector<2x32xf32>
    %429 = arith.addf %426, %428 : vector<2x32xf32>
    %430 = math.tanh %429 : vector<2x32xf32>
    %cst_74 = arith.constant 1.000000e+00 : f32
    %431 = vector.broadcast %cst_74 : f32 to vector<2x32xf32>
    %432 = arith.subf %431, %425 : vector<2x32xf32>
    %433 = arith.mulf %432, %430 : vector<2x32xf32>
    %434 = arith.mulf %425, %375 : vector<2x32xf32>
    %435 = arith.addf %433, %434 : vector<2x32xf32>
    %436 = vector.extract_strided_slice %9 {offsets = [14, 0], sizes = [2, 96], strides = [1, 1]} : vector<16x192xf32> to vector<2x96xf32>
    %437 = vector.extract_strided_slice %9 {offsets = [0, 96], sizes = [2, 96], strides = [1, 1]} : vector<16x192xf32> to vector<2x96xf32>
    %cst_75 = arith.constant dense<0.000000e+00> : vector<2x96xf32>
    %438 = tpu.matmul %406, %10, %cst_75 {dimension_numbers = #tpu.dot_dimension_numbers<[1], [0], [0], [1], [0, 0, 1, 1], [], []>} : vector<2x32xf32>, vector<32x96xf32>, vector<2x96xf32> -> vector<2x96xf32>
    %439 = vector.broadcast %12 : vector<1x96xf32> to vector<2x96xf32>
    %440 = arith.addf %438, %439 : vector<2x96xf32>
    %441 = vector.extract_strided_slice %436 {offsets = [0, 0], sizes = [2, 32], strides = [1, 1]} : vector<2x96xf32> to vector<2x32xf32>
    %442 = vector.extract_strided_slice %440 {offsets = [0, 0], sizes = [2, 32], strides = [1, 1]} : vector<2x96xf32> to vector<2x32xf32>
    %443 = arith.addf %441, %442 : vector<2x32xf32>
    %444 = arith.negf %443 : vector<2x32xf32>
    %445 = math.exp %444 : vector<2x32xf32>
    %cst_76 = arith.constant 1.000000e+00 : f32
    %446 = vector.broadcast %cst_76 : f32 to vector<2x32xf32>
    %447 = arith.addf %446, %445 : vector<2x32xf32>
    %448 = arith.divf %446, %447 : vector<2x32xf32>
    %449 = vector.extract_strided_slice %436 {offsets = [0, 32], sizes = [2, 32], strides = [1, 1]} : vector<2x96xf32> to vector<2x32xf32>
    %450 = vector.extract_strided_slice %440 {offsets = [0, 32], sizes = [2, 32], strides = [1, 1]} : vector<2x96xf32> to vector<2x32xf32>
    %451 = arith.addf %449, %450 : vector<2x32xf32>
    %452 = arith.negf %451 : vector<2x32xf32>
    %453 = math.exp %452 : vector<2x32xf32>
    %cst_77 = arith.constant 1.000000e+00 : f32
    %454 = vector.broadcast %cst_77 : f32 to vector<2x32xf32>
    %455 = arith.addf %454, %453 : vector<2x32xf32>
    %456 = arith.divf %454, %455 : vector<2x32xf32>
    %457 = vector.extract_strided_slice %436 {offsets = [0, 64], sizes = [2, 32], strides = [1, 1]} : vector<2x96xf32> to vector<2x32xf32>
    %458 = vector.extract_strided_slice %440 {offsets = [0, 64], sizes = [2, 32], strides = [1, 1]} : vector<2x96xf32> to vector<2x32xf32>
    %459 = arith.mulf %448, %458 : vector<2x32xf32>
    %460 = arith.addf %457, %459 : vector<2x32xf32>
    %461 = math.tanh %460 : vector<2x32xf32>
    %cst_78 = arith.constant 1.000000e+00 : f32
    %462 = vector.broadcast %cst_78 : f32 to vector<2x32xf32>
    %463 = arith.subf %462, %456 : vector<2x32xf32>
    %464 = arith.mulf %463, %461 : vector<2x32xf32>
    %465 = arith.mulf %456, %406 : vector<2x32xf32>
    %466 = arith.addf %464, %465 : vector<2x32xf32>
    %cst_79 = arith.constant dense<0.000000e+00> : vector<2x96xf32>
    %467 = tpu.matmul %435, %11, %cst_79 {dimension_numbers = #tpu.dot_dimension_numbers<[1], [0], [0], [1], [0, 0, 1, 1], [], []>} : vector<2x32xf32>, vector<32x96xf32>, vector<2x96xf32> -> vector<2x96xf32>
    %468 = vector.broadcast %13 : vector<1x96xf32> to vector<2x96xf32>
    %469 = arith.addf %467, %468 : vector<2x96xf32>
    %470 = vector.extract_strided_slice %437 {offsets = [0, 0], sizes = [2, 32], strides = [1, 1]} : vector<2x96xf32> to vector<2x32xf32>
    %471 = vector.extract_strided_slice %469 {offsets = [0, 0], sizes = [2, 32], strides = [1, 1]} : vector<2x96xf32> to vector<2x32xf32>
    %472 = arith.addf %470, %471 : vector<2x32xf32>
    %473 = arith.negf %472 : vector<2x32xf32>
    %474 = math.exp %473 : vector<2x32xf32>
    %cst_80 = arith.constant 1.000000e+00 : f32
    %475 = vector.broadcast %cst_80 : f32 to vector<2x32xf32>
    %476 = arith.addf %475, %474 : vector<2x32xf32>
    %477 = arith.divf %475, %476 : vector<2x32xf32>
    %478 = vector.extract_strided_slice %437 {offsets = [0, 32], sizes = [2, 32], strides = [1, 1]} : vector<2x96xf32> to vector<2x32xf32>
    %479 = vector.extract_strided_slice %469 {offsets = [0, 32], sizes = [2, 32], strides = [1, 1]} : vector<2x96xf32> to vector<2x32xf32>
    %480 = arith.addf %478, %479 : vector<2x32xf32>
    %481 = arith.negf %480 : vector<2x32xf32>
    %482 = math.exp %481 : vector<2x32xf32>
    %cst_81 = arith.constant 1.000000e+00 : f32
    %483 = vector.broadcast %cst_81 : f32 to vector<2x32xf32>
    %484 = arith.addf %483, %482 : vector<2x32xf32>
    %485 = arith.divf %483, %484 : vector<2x32xf32>
    %486 = vector.extract_strided_slice %437 {offsets = [0, 64], sizes = [2, 32], strides = [1, 1]} : vector<2x96xf32> to vector<2x32xf32>
    %487 = vector.extract_strided_slice %469 {offsets = [0, 64], sizes = [2, 32], strides = [1, 1]} : vector<2x96xf32> to vector<2x32xf32>
    %488 = arith.mulf %477, %487 : vector<2x32xf32>
    %489 = arith.addf %486, %488 : vector<2x32xf32>
    %490 = math.tanh %489 : vector<2x32xf32>
    %cst_82 = arith.constant 1.000000e+00 : f32
    %491 = vector.broadcast %cst_82 : f32 to vector<2x32xf32>
    %492 = arith.subf %491, %485 : vector<2x32xf32>
    %493 = arith.mulf %492, %490 : vector<2x32xf32>
    %494 = arith.mulf %485, %435 : vector<2x32xf32>
    %495 = arith.addf %493, %494 : vector<2x32xf32>
    %c0_83 = arith.constant 0 : index
    %c0_84 = arith.constant 0 : index
    %496 = vector.load %arg2[%c0_83, %c0_84] : memref<2x64xf32, #tpu.memory_space<vmem>>, vector<2x64xf32>
    %497 = tpu.concatenate %496, %466, %495 in 1 : vector<2x64xf32>, vector<2x32xf32>, vector<2x32xf32> -> vector<2x128xf32>
    %c0_85 = arith.constant 0 : index
    %c0_86 = arith.constant 0 : index
    %498 = vector.load %arg9[%c0_85, %c0_86] : memref<128x1xf32, #tpu.memory_space<vmem>>, vector<128x1xf32>
    %cst_87 = arith.constant dense<0.000000e+00> : vector<2x1xf32>
    %499 = tpu.matmul %497, %498, %cst_87 {dimension_numbers = #tpu.dot_dimension_numbers<[1], [0], [0], [1], [0, 0, 1, 1], [], []>} : vector<2x128xf32>, vector<128x1xf32>, vector<2x1xf32> -> vector<2x1xf32>
    %c0_88 = arith.constant 0 : index
    %c0_89 = arith.constant 0 : index
    %500 = vector.load %arg10[%c0_88, %c0_89] : memref<1x1xf32, #tpu.memory_space<vmem>>, vector<1x1xf32>
    %501 = vector.broadcast %500 : vector<1x1xf32> to vector<2x1xf32>
    %502 = arith.addf %499, %501 : vector<2x1xf32>
    %c0_90 = arith.constant 0 : index
    %c0_91 = arith.constant 0 : index
    %503 = vector.load %arg11[%c0_90, %c0_91] : memref<2x1xf32, #tpu.memory_space<vmem>>, vector<2x1xf32>
    tpu.vector_store %arg11[%c0_90, %c0_91], %502 {strides = array<i32>} : memref<2x1xf32, #tpu.memory_space<vmem>>, vector<2x1xf32>,
    return
  }
}

module attributes {stable_mosaic.version = 11 : i64} {
  func.func @_bigru_layer_kernel(%arg0: memref<16x32xf32, #tpu.memory_space<vmem>>, %arg1: memref<32x192xf32, #tpu.memory_space<vmem>>, %arg2: memref<32x96xf32, #tpu.memory_space<vmem>>, %arg3: memref<32x96xf32, #tpu.memory_space<vmem>>, %arg4: memref<1x192xf32, #tpu.memory_space<vmem>>, %arg5: memref<1x96xf32, #tpu.memory_space<vmem>>, %arg6: memref<1x96xf32, #tpu.memory_space<vmem>>, %arg7: memref<8x2x32xf32, #tpu.memory_space<vmem>>, %arg8: memref<8x2x32xf32, #tpu.memory_space<vmem>>, %arg9: memref<2x64xf32, #tpu.memory_space<vmem>>) attributes {dimension_semantics = [], scalar_prefetch = 0 : i64, scratch_operands = 0 : i64, tpu.core_type = #tpu.core_type<tc>} {
    %c0 = arith.constant 0 : index
    %c0_0 = arith.constant 0 : index
    %0 = vector.load %arg0[%c0, %c0_0] : memref<16x32xf32, #tpu.memory_space<vmem>>, vector<16x32xf32>
    %c0_1 = arith.constant 0 : index
    %c0_2 = arith.constant 0 : index
    %1 = vector.load %arg1[%c0_1, %c0_2] : memref<32x192xf32, #tpu.memory_space<vmem>>, vector<32x192xf32>
    %cst = arith.constant dense<0.000000e+00> : vector<16x192xf32>
    %2 = tpu.matmul %0, %1, %cst {dimension_numbers = #tpu.dot_dimension_numbers<[1], [0], [0], [1], [0, 0, 1, 1], [], []>} : vector<16x32xf32>, vector<32x192xf32>, vector<16x192xf32> -> vector<16x192xf32>
    %c0_3 = arith.constant 0 : index
    %c0_4 = arith.constant 0 : index
    %3 = vector.load %arg4[%c0_3, %c0_4] : memref<1x192xf32, #tpu.memory_space<vmem>>, vector<1x192xf32>
    %4 = vector.broadcast %3 : vector<1x192xf32> to vector<16x192xf32>
    %5 = arith.addf %2, %4 : vector<16x192xf32>
    %c0_5 = arith.constant 0 : index
    %c0_6 = arith.constant 0 : index
    %6 = vector.load %arg2[%c0_5, %c0_6] : memref<32x96xf32, #tpu.memory_space<vmem>>, vector<32x96xf32>
    %c0_7 = arith.constant 0 : index
    %c0_8 = arith.constant 0 : index
    %7 = vector.load %arg3[%c0_7, %c0_8] : memref<32x96xf32, #tpu.memory_space<vmem>>, vector<32x96xf32>
    %c0_9 = arith.constant 0 : index
    %c0_10 = arith.constant 0 : index
    %8 = vector.load %arg5[%c0_9, %c0_10] : memref<1x96xf32, #tpu.memory_space<vmem>>, vector<1x96xf32>
    %c0_11 = arith.constant 0 : index
    %c0_12 = arith.constant 0 : index
    %9 = vector.load %arg6[%c0_11, %c0_12] : memref<1x96xf32, #tpu.memory_space<vmem>>, vector<1x96xf32>
    %cst_13 = arith.constant 0.000000e+00 : f32
    %10 = vector.broadcast %cst_13 : f32 to vector<2x32xf32>
    %cst_14 = arith.constant 0.000000e+00 : f32
    %11 = vector.broadcast %cst_14 : f32 to vector<2x32xf32>
    %12 = vector.extract_strided_slice %5 {offsets = [0, 0], sizes = [2, 96], strides = [1, 1]} : vector<16x192xf32> to vector<2x96xf32>
    %13 = vector.extract_strided_slice %5 {offsets = [14, 96], sizes = [2, 96], strides = [1, 1]} : vector<16x192xf32> to vector<2x96xf32>
    %cst_15 = arith.constant dense<0.000000e+00> : vector<2x96xf32>
    %14 = tpu.matmul %10, %6, %cst_15 {dimension_numbers = #tpu.dot_dimension_numbers<[1], [0], [0], [1], [0, 0, 1, 1], [], []>} : vector<2x32xf32>, vector<32x96xf32>, vector<2x96xf32> -> vector<2x96xf32>
    %15 = vector.broadcast %8 : vector<1x96xf32> to vector<2x96xf32>
    %16 = arith.addf %14, %15 : vector<2x96xf32>
    %17 = vector.extract_strided_slice %12 {offsets = [0, 0], sizes = [2, 32], strides = [1, 1]} : vector<2x96xf32> to vector<2x32xf32>
    %18 = vector.extract_strided_slice %16 {offsets = [0, 0], sizes = [2, 32], strides = [1, 1]} : vector<2x96xf32> to vector<2x32xf32>
    %19 = arith.addf %17, %18 : vector<2x32xf32>
    %20 = arith.negf %19 : vector<2x32xf32>
    %21 = math.exp %20 : vector<2x32xf32>
    %cst_16 = arith.constant 1.000000e+00 : f32
    %22 = vector.broadcast %cst_16 : f32 to vector<2x32xf32>
    %23 = arith.addf %22, %21 : vector<2x32xf32>
    %24 = arith.divf %22, %23 : vector<2x32xf32>
    %25 = vector.extract_strided_slice %12 {offsets = [0, 32], sizes = [2, 32], strides = [1, 1]} : vector<2x96xf32> to vector<2x32xf32>
    %26 = vector.extract_strided_slice %16 {offsets = [0, 32], sizes = [2, 32], strides = [1, 1]} : vector<2x96xf32> to vector<2x32xf32>
    %27 = arith.addf %25, %26 : vector<2x32xf32>
    %28 = arith.negf %27 : vector<2x32xf32>
    %29 = math.exp %28 : vector<2x32xf32>
    %cst_17 = arith.constant 1.000000e+00 : f32
    %30 = vector.broadcast %cst_17 : f32 to vector<2x32xf32>
    %31 = arith.addf %30, %29 : vector<2x32xf32>
    %32 = arith.divf %30, %31 : vector<2x32xf32>
    %33 = vector.extract_strided_slice %12 {offsets = [0, 64], sizes = [2, 32], strides = [1, 1]} : vector<2x96xf32> to vector<2x32xf32>
    %34 = vector.extract_strided_slice %16 {offsets = [0, 64], sizes = [2, 32], strides = [1, 1]} : vector<2x96xf32> to vector<2x32xf32>
    %35 = arith.mulf %24, %34 : vector<2x32xf32>
    %36 = arith.addf %33, %35 : vector<2x32xf32>
    %37 = math.tanh %36 : vector<2x32xf32>
    %cst_18 = arith.constant 1.000000e+00 : f32
    %38 = vector.broadcast %cst_18 : f32 to vector<2x32xf32>
    %39 = arith.subf %38, %32 : vector<2x32xf32>
    %40 = arith.mulf %39, %37 : vector<2x32xf32>
    %41 = arith.mulf %32, %10 : vector<2x32xf32>
    %42 = arith.addf %40, %41 : vector<2x32xf32>
    %cst_19 = arith.constant dense<0.000000e+00> : vector<2x96xf32>
    %43 = tpu.matmul %11, %7, %cst_19 {dimension_numbers = #tpu.dot_dimension_numbers<[1], [0], [0], [1], [0, 0, 1, 1], [], []>} : vector<2x32xf32>, vector<32x96xf32>, vector<2x96xf32> -> vector<2x96xf32>
    %44 = vector.broadcast %9 : vector<1x96xf32> to vector<2x96xf32>
    %45 = arith.addf %43, %44 : vector<2x96xf32>
    %46 = vector.extract_strided_slice %13 {offsets = [0, 0], sizes = [2, 32], strides = [1, 1]} : vector<2x96xf32> to vector<2x32xf32>
    %47 = vector.extract_strided_slice %45 {offsets = [0, 0], sizes = [2, 32], strides = [1, 1]} : vector<2x96xf32> to vector<2x32xf32>
    %48 = arith.addf %46, %47 : vector<2x32xf32>
    %49 = arith.negf %48 : vector<2x32xf32>
    %50 = math.exp %49 : vector<2x32xf32>
    %cst_20 = arith.constant 1.000000e+00 : f32
    %51 = vector.broadcast %cst_20 : f32 to vector<2x32xf32>
    %52 = arith.addf %51, %50 : vector<2x32xf32>
    %53 = arith.divf %51, %52 : vector<2x32xf32>
    %54 = vector.extract_strided_slice %13 {offsets = [0, 32], sizes = [2, 32], strides = [1, 1]} : vector<2x96xf32> to vector<2x32xf32>
    %55 = vector.extract_strided_slice %45 {offsets = [0, 32], sizes = [2, 32], strides = [1, 1]} : vector<2x96xf32> to vector<2x32xf32>
    %56 = arith.addf %54, %55 : vector<2x32xf32>
    %57 = arith.negf %56 : vector<2x32xf32>
    %58 = math.exp %57 : vector<2x32xf32>
    %cst_21 = arith.constant 1.000000e+00 : f32
    %59 = vector.broadcast %cst_21 : f32 to vector<2x32xf32>
    %60 = arith.addf %59, %58 : vector<2x32xf32>
    %61 = arith.divf %59, %60 : vector<2x32xf32>
    %62 = vector.extract_strided_slice %13 {offsets = [0, 64], sizes = [2, 32], strides = [1, 1]} : vector<2x96xf32> to vector<2x32xf32>
    %63 = vector.extract_strided_slice %45 {offsets = [0, 64], sizes = [2, 32], strides = [1, 1]} : vector<2x96xf32> to vector<2x32xf32>
    %64 = arith.mulf %53, %63 : vector<2x32xf32>
    %65 = arith.addf %62, %64 : vector<2x32xf32>
    %66 = math.tanh %65 : vector<2x32xf32>
    %cst_22 = arith.constant 1.000000e+00 : f32
    %67 = vector.broadcast %cst_22 : f32 to vector<2x32xf32>
    %68 = arith.subf %67, %61 : vector<2x32xf32>
    %69 = arith.mulf %68, %66 : vector<2x32xf32>
    %70 = arith.mulf %61, %11 : vector<2x32xf32>
    %71 = arith.addf %69, %70 : vector<2x32xf32>
    %c0_23 = arith.constant 0 : index
    %c0_24 = arith.constant 0 : index
    %c0_25 = arith.constant 0 : index
    %72 = vector.load %arg7[%c0_23, %c0_24, %c0_25] : memref<8x2x32xf32, #tpu.memory_space<vmem>>, vector<1x2x32xf32>
    %73 = vector.shape_cast %72 : vector<1x2x32xf32> to vector<2x32xf32>
    %74 = vector.shape_cast %42 : vector<2x32xf32> to vector<1x2x32xf32>
    tpu.vector_store %arg7[%c0_23, %c0_24, %c0_25], %74 {strides = array<i32>} : memref<8x2x32xf32, #tpu.memory_space<vmem>>, vector<1x2x32xf32>,
    %c7 = arith.constant 7 : index
    %c0_26 = arith.constant 0 : index
    %c0_27 = arith.constant 0 : index
    %75 = vector.load %arg8[%c7, %c0_26, %c0_27] : memref<8x2x32xf32, #tpu.memory_space<vmem>>, vector<1x2x32xf32>
    %76 = vector.shape_cast %75 : vector<1x2x32xf32> to vector<2x32xf32>
    %77 = vector.shape_cast %71 : vector<2x32xf32> to vector<1x2x32xf32>
    tpu.vector_store %arg8[%c7, %c0_26, %c0_27], %77 {strides = array<i32>} : memref<8x2x32xf32, #tpu.memory_space<vmem>>, vector<1x2x32xf32>,
    %78 = vector.extract_strided_slice %5 {offsets = [2, 0], sizes = [2, 96], strides = [1, 1]} : vector<16x192xf32> to vector<2x96xf32>
    %79 = vector.extract_strided_slice %5 {offsets = [12, 96], sizes = [2, 96], strides = [1, 1]} : vector<16x192xf32> to vector<2x96xf32>
    %cst_28 = arith.constant dense<0.000000e+00> : vector<2x96xf32>
    %80 = tpu.matmul %42, %6, %cst_28 {dimension_numbers = #tpu.dot_dimension_numbers<[1], [0], [0], [1], [0, 0, 1, 1], [], []>} : vector<2x32xf32>, vector<32x96xf32>, vector<2x96xf32> -> vector<2x96xf32>
    %81 = vector.broadcast %8 : vector<1x96xf32> to vector<2x96xf32>
    %82 = arith.addf %80, %81 : vector<2x96xf32>
    %83 = vector.extract_strided_slice %78 {offsets = [0, 0], sizes = [2, 32], strides = [1, 1]} : vector<2x96xf32> to vector<2x32xf32>
    %84 = vector.extract_strided_slice %82 {offsets = [0, 0], sizes = [2, 32], strides = [1, 1]} : vector<2x96xf32> to vector<2x32xf32>
    %85 = arith.addf %83, %84 : vector<2x32xf32>
    %86 = arith.negf %85 : vector<2x32xf32>
    %87 = math.exp %86 : vector<2x32xf32>
    %cst_29 = arith.constant 1.000000e+00 : f32
    %88 = vector.broadcast %cst_29 : f32 to vector<2x32xf32>
    %89 = arith.addf %88, %87 : vector<2x32xf32>
    %90 = arith.divf %88, %89 : vector<2x32xf32>
    %91 = vector.extract_strided_slice %78 {offsets = [0, 32], sizes = [2, 32], strides = [1, 1]} : vector<2x96xf32> to vector<2x32xf32>
    %92 = vector.extract_strided_slice %82 {offsets = [0, 32], sizes = [2, 32], strides = [1, 1]} : vector<2x96xf32> to vector<2x32xf32>
    %93 = arith.addf %91, %92 : vector<2x32xf32>
    %94 = arith.negf %93 : vector<2x32xf32>
    %95 = math.exp %94 : vector<2x32xf32>
    %cst_30 = arith.constant 1.000000e+00 : f32
    %96 = vector.broadcast %cst_30 : f32 to vector<2x32xf32>
    %97 = arith.addf %96, %95 : vector<2x32xf32>
    %98 = arith.divf %96, %97 : vector<2x32xf32>
    %99 = vector.extract_strided_slice %78 {offsets = [0, 64], sizes = [2, 32], strides = [1, 1]} : vector<2x96xf32> to vector<2x32xf32>
    %100 = vector.extract_strided_slice %82 {offsets = [0, 64], sizes = [2, 32], strides = [1, 1]} : vector<2x96xf32> to vector<2x32xf32>
    %101 = arith.mulf %90, %100 : vector<2x32xf32>
    %102 = arith.addf %99, %101 : vector<2x32xf32>
    %103 = math.tanh %102 : vector<2x32xf32>
    %cst_31 = arith.constant 1.000000e+00 : f32
    %104 = vector.broadcast %cst_31 : f32 to vector<2x32xf32>
    %105 = arith.subf %104, %98 : vector<2x32xf32>
    %106 = arith.mulf %105, %103 : vector<2x32xf32>
    %107 = arith.mulf %98, %42 : vector<2x32xf32>
    %108 = arith.addf %106, %107 : vector<2x32xf32>
    %cst_32 = arith.constant dense<0.000000e+00> : vector<2x96xf32>
    %109 = tpu.matmul %71, %7, %cst_32 {dimension_numbers = #tpu.dot_dimension_numbers<[1], [0], [0], [1], [0, 0, 1, 1], [], []>} : vector<2x32xf32>, vector<32x96xf32>, vector<2x96xf32> -> vector<2x96xf32>
    %110 = vector.broadcast %9 : vector<1x96xf32> to vector<2x96xf32>
    %111 = arith.addf %109, %110 : vector<2x96xf32>
    %112 = vector.extract_strided_slice %79 {offsets = [0, 0], sizes = [2, 32], strides = [1, 1]} : vector<2x96xf32> to vector<2x32xf32>
    %113 = vector.extract_strided_slice %111 {offsets = [0, 0], sizes = [2, 32], strides = [1, 1]} : vector<2x96xf32> to vector<2x32xf32>
    %114 = arith.addf %112, %113 : vector<2x32xf32>
    %115 = arith.negf %114 : vector<2x32xf32>
    %116 = math.exp %115 : vector<2x32xf32>
    %cst_33 = arith.constant 1.000000e+00 : f32
    %117 = vector.broadcast %cst_33 : f32 to vector<2x32xf32>
    %118 = arith.addf %117, %116 : vector<2x32xf32>
    %119 = arith.divf %117, %118 : vector<2x32xf32>
    %120 = vector.extract_strided_slice %79 {offsets = [0, 32], sizes = [2, 32], strides = [1, 1]} : vector<2x96xf32> to vector<2x32xf32>
    %121 = vector.extract_strided_slice %111 {offsets = [0, 32], sizes = [2, 32], strides = [1, 1]} : vector<2x96xf32> to vector<2x32xf32>
    %122 = arith.addf %120, %121 : vector<2x32xf32>
    %123 = arith.negf %122 : vector<2x32xf32>
    %124 = math.exp %123 : vector<2x32xf32>
    %cst_34 = arith.constant 1.000000e+00 : f32
    %125 = vector.broadcast %cst_34 : f32 to vector<2x32xf32>
    %126 = arith.addf %125, %124 : vector<2x32xf32>
    %127 = arith.divf %125, %126 : vector<2x32xf32>
    %128 = vector.extract_strided_slice %79 {offsets = [0, 64], sizes = [2, 32], strides = [1, 1]} : vector<2x96xf32> to vector<2x32xf32>
    %129 = vector.extract_strided_slice %111 {offsets = [0, 64], sizes = [2, 32], strides = [1, 1]} : vector<2x96xf32> to vector<2x32xf32>
    %130 = arith.mulf %119, %129 : vector<2x32xf32>
    %131 = arith.addf %128, %130 : vector<2x32xf32>
    %132 = math.tanh %131 : vector<2x32xf32>
    %cst_35 = arith.constant 1.000000e+00 : f32
    %133 = vector.broadcast %cst_35 : f32 to vector<2x32xf32>
    %134 = arith.subf %133, %127 : vector<2x32xf32>
    %135 = arith.mulf %134, %132 : vector<2x32xf32>
    %136 = arith.mulf %127, %71 : vector<2x32xf32>
    %137 = arith.addf %135, %136 : vector<2x32xf32>
    %c1 = arith.constant 1 : index
    %c0_36 = arith.constant 0 : index
    %c0_37 = arith.constant 0 : index
    %138 = vector.load %arg7[%c1, %c0_36, %c0_37] : memref<8x2x32xf32, #tpu.memory_space<vmem>>, vector<1x2x32xf32>
    %139 = vector.shape_cast %138 : vector<1x2x32xf32> to vector<2x32xf32>
    %140 = vector.shape_cast %108 : vector<2x32xf32> to vector<1x2x32xf32>
    tpu.vector_store %arg7[%c1, %c0_36, %c0_37], %140 {strides = array<i32>} : memref<8x2x32xf32, #tpu.memory_space<vmem>>, vector<1x2x32xf32>,
    %c6 = arith.constant 6 : index
    %c0_38 = arith.constant 0 : index
    %c0_39 = arith.constant 0 : index
    %141 = vector.load %arg8[%c6, %c0_38, %c0_39] : memref<8x2x32xf32, #tpu.memory_space<vmem>>, vector<1x2x32xf32>
    %142 = vector.shape_cast %141 : vector<1x2x32xf32> to vector<2x32xf32>
    %143 = vector.shape_cast %137 : vector<2x32xf32> to vector<1x2x32xf32>
    tpu.vector_store %arg8[%c6, %c0_38, %c0_39], %143 {strides = array<i32>} : memref<8x2x32xf32, #tpu.memory_space<vmem>>, vector<1x2x32xf32>,
    %144 = vector.extract_strided_slice %5 {offsets = [4, 0], sizes = [2, 96], strides = [1, 1]} : vector<16x192xf32> to vector<2x96xf32>
    %145 = vector.extract_strided_slice %5 {offsets = [10, 96], sizes = [2, 96], strides = [1, 1]} : vector<16x192xf32> to vector<2x96xf32>
    %cst_40 = arith.constant dense<0.000000e+00> : vector<2x96xf32>
    %146 = tpu.matmul %108, %6, %cst_40 {dimension_numbers = #tpu.dot_dimension_numbers<[1], [0], [0], [1], [0, 0, 1, 1], [], []>} : vector<2x32xf32>, vector<32x96xf32>, vector<2x96xf32> -> vector<2x96xf32>
    %147 = vector.broadcast %8 : vector<1x96xf32> to vector<2x96xf32>
    %148 = arith.addf %146, %147 : vector<2x96xf32>
    %149 = vector.extract_strided_slice %144 {offsets = [0, 0], sizes = [2, 32], strides = [1, 1]} : vector<2x96xf32> to vector<2x32xf32>
    %150 = vector.extract_strided_slice %148 {offsets = [0, 0], sizes = [2, 32], strides = [1, 1]} : vector<2x96xf32> to vector<2x32xf32>
    %151 = arith.addf %149, %150 : vector<2x32xf32>
    %152 = arith.negf %151 : vector<2x32xf32>
    %153 = math.exp %152 : vector<2x32xf32>
    %cst_41 = arith.constant 1.000000e+00 : f32
    %154 = vector.broadcast %cst_41 : f32 to vector<2x32xf32>
    %155 = arith.addf %154, %153 : vector<2x32xf32>
    %156 = arith.divf %154, %155 : vector<2x32xf32>
    %157 = vector.extract_strided_slice %144 {offsets = [0, 32], sizes = [2, 32], strides = [1, 1]} : vector<2x96xf32> to vector<2x32xf32>
    %158 = vector.extract_strided_slice %148 {offsets = [0, 32], sizes = [2, 32], strides = [1, 1]} : vector<2x96xf32> to vector<2x32xf32>
    %159 = arith.addf %157, %158 : vector<2x32xf32>
    %160 = arith.negf %159 : vector<2x32xf32>
    %161 = math.exp %160 : vector<2x32xf32>
    %cst_42 = arith.constant 1.000000e+00 : f32
    %162 = vector.broadcast %cst_42 : f32 to vector<2x32xf32>
    %163 = arith.addf %162, %161 : vector<2x32xf32>
    %164 = arith.divf %162, %163 : vector<2x32xf32>
    %165 = vector.extract_strided_slice %144 {offsets = [0, 64], sizes = [2, 32], strides = [1, 1]} : vector<2x96xf32> to vector<2x32xf32>
    %166 = vector.extract_strided_slice %148 {offsets = [0, 64], sizes = [2, 32], strides = [1, 1]} : vector<2x96xf32> to vector<2x32xf32>
    %167 = arith.mulf %156, %166 : vector<2x32xf32>
    %168 = arith.addf %165, %167 : vector<2x32xf32>
    %169 = math.tanh %168 : vector<2x32xf32>
    %cst_43 = arith.constant 1.000000e+00 : f32
    %170 = vector.broadcast %cst_43 : f32 to vector<2x32xf32>
    %171 = arith.subf %170, %164 : vector<2x32xf32>
    %172 = arith.mulf %171, %169 : vector<2x32xf32>
    %173 = arith.mulf %164, %108 : vector<2x32xf32>
    %174 = arith.addf %172, %173 : vector<2x32xf32>
    %cst_44 = arith.constant dense<0.000000e+00> : vector<2x96xf32>
    %175 = tpu.matmul %137, %7, %cst_44 {dimension_numbers = #tpu.dot_dimension_numbers<[1], [0], [0], [1], [0, 0, 1, 1], [], []>} : vector<2x32xf32>, vector<32x96xf32>, vector<2x96xf32> -> vector<2x96xf32>
    %176 = vector.broadcast %9 : vector<1x96xf32> to vector<2x96xf32>
    %177 = arith.addf %175, %176 : vector<2x96xf32>
    %178 = vector.extract_strided_slice %145 {offsets = [0, 0], sizes = [2, 32], strides = [1, 1]} : vector<2x96xf32> to vector<2x32xf32>
    %179 = vector.extract_strided_slice %177 {offsets = [0, 0], sizes = [2, 32], strides = [1, 1]} : vector<2x96xf32> to vector<2x32xf32>
    %180 = arith.addf %178, %179 : vector<2x32xf32>
    %181 = arith.negf %180 : vector<2x32xf32>
    %182 = math.exp %181 : vector<2x32xf32>
    %cst_45 = arith.constant 1.000000e+00 : f32
    %183 = vector.broadcast %cst_45 : f32 to vector<2x32xf32>
    %184 = arith.addf %183, %182 : vector<2x32xf32>
    %185 = arith.divf %183, %184 : vector<2x32xf32>
    %186 = vector.extract_strided_slice %145 {offsets = [0, 32], sizes = [2, 32], strides = [1, 1]} : vector<2x96xf32> to vector<2x32xf32>
    %187 = vector.extract_strided_slice %177 {offsets = [0, 32], sizes = [2, 32], strides = [1, 1]} : vector<2x96xf32> to vector<2x32xf32>
    %188 = arith.addf %186, %187 : vector<2x32xf32>
    %189 = arith.negf %188 : vector<2x32xf32>
    %190 = math.exp %189 : vector<2x32xf32>
    %cst_46 = arith.constant 1.000000e+00 : f32
    %191 = vector.broadcast %cst_46 : f32 to vector<2x32xf32>
    %192 = arith.addf %191, %190 : vector<2x32xf32>
    %193 = arith.divf %191, %192 : vector<2x32xf32>
    %194 = vector.extract_strided_slice %145 {offsets = [0, 64], sizes = [2, 32], strides = [1, 1]} : vector<2x96xf32> to vector<2x32xf32>
    %195 = vector.extract_strided_slice %177 {offsets = [0, 64], sizes = [2, 32], strides = [1, 1]} : vector<2x96xf32> to vector<2x32xf32>
    %196 = arith.mulf %185, %195 : vector<2x32xf32>
    %197 = arith.addf %194, %196 : vector<2x32xf32>
    %198 = math.tanh %197 : vector<2x32xf32>
    %cst_47 = arith.constant 1.000000e+00 : f32
    %199 = vector.broadcast %cst_47 : f32 to vector<2x32xf32>
    %200 = arith.subf %199, %193 : vector<2x32xf32>
    %201 = arith.mulf %200, %198 : vector<2x32xf32>
    %202 = arith.mulf %193, %137 : vector<2x32xf32>
    %203 = arith.addf %201, %202 : vector<2x32xf32>
    %c2 = arith.constant 2 : index
    %c0_48 = arith.constant 0 : index
    %c0_49 = arith.constant 0 : index
    %204 = vector.load %arg7[%c2, %c0_48, %c0_49] : memref<8x2x32xf32, #tpu.memory_space<vmem>>, vector<1x2x32xf32>
    %205 = vector.shape_cast %204 : vector<1x2x32xf32> to vector<2x32xf32>
    %206 = vector.shape_cast %174 : vector<2x32xf32> to vector<1x2x32xf32>
    tpu.vector_store %arg7[%c2, %c0_48, %c0_49], %206 {strides = array<i32>} : memref<8x2x32xf32, #tpu.memory_space<vmem>>, vector<1x2x32xf32>,
    %c5 = arith.constant 5 : index
    %c0_50 = arith.constant 0 : index
    %c0_51 = arith.constant 0 : index
    %207 = vector.load %arg8[%c5, %c0_50, %c0_51] : memref<8x2x32xf32, #tpu.memory_space<vmem>>, vector<1x2x32xf32>
    %208 = vector.shape_cast %207 : vector<1x2x32xf32> to vector<2x32xf32>
    %209 = vector.shape_cast %203 : vector<2x32xf32> to vector<1x2x32xf32>
    tpu.vector_store %arg8[%c5, %c0_50, %c0_51], %209 {strides = array<i32>} : memref<8x2x32xf32, #tpu.memory_space<vmem>>, vector<1x2x32xf32>,
    %210 = vector.extract_strided_slice %5 {offsets = [6, 0], sizes = [2, 96], strides = [1, 1]} : vector<16x192xf32> to vector<2x96xf32>
    %211 = vector.extract_strided_slice %5 {offsets = [8, 96], sizes = [2, 96], strides = [1, 1]} : vector<16x192xf32> to vector<2x96xf32>
    %cst_52 = arith.constant dense<0.000000e+00> : vector<2x96xf32>
    %212 = tpu.matmul %174, %6, %cst_52 {dimension_numbers = #tpu.dot_dimension_numbers<[1], [0], [0], [1], [0, 0, 1, 1], [], []>} : vector<2x32xf32>, vector<32x96xf32>, vector<2x96xf32> -> vector<2x96xf32>
    %213 = vector.broadcast %8 : vector<1x96xf32> to vector<2x96xf32>
    %214 = arith.addf %212, %213 : vector<2x96xf32>
    %215 = vector.extract_strided_slice %210 {offsets = [0, 0], sizes = [2, 32], strides = [1, 1]} : vector<2x96xf32> to vector<2x32xf32>
    %216 = vector.extract_strided_slice %214 {offsets = [0, 0], sizes = [2, 32], strides = [1, 1]} : vector<2x96xf32> to vector<2x32xf32>
    %217 = arith.addf %215, %216 : vector<2x32xf32>
    %218 = arith.negf %217 : vector<2x32xf32>
    %219 = math.exp %218 : vector<2x32xf32>
    %cst_53 = arith.constant 1.000000e+00 : f32
    %220 = vector.broadcast %cst_53 : f32 to vector<2x32xf32>
    %221 = arith.addf %220, %219 : vector<2x32xf32>
    %222 = arith.divf %220, %221 : vector<2x32xf32>
    %223 = vector.extract_strided_slice %210 {offsets = [0, 32], sizes = [2, 32], strides = [1, 1]} : vector<2x96xf32> to vector<2x32xf32>
    %224 = vector.extract_strided_slice %214 {offsets = [0, 32], sizes = [2, 32], strides = [1, 1]} : vector<2x96xf32> to vector<2x32xf32>
    %225 = arith.addf %223, %224 : vector<2x32xf32>
    %226 = arith.negf %225 : vector<2x32xf32>
    %227 = math.exp %226 : vector<2x32xf32>
    %cst_54 = arith.constant 1.000000e+00 : f32
    %228 = vector.broadcast %cst_54 : f32 to vector<2x32xf32>
    %229 = arith.addf %228, %227 : vector<2x32xf32>
    %230 = arith.divf %228, %229 : vector<2x32xf32>
    %231 = vector.extract_strided_slice %210 {offsets = [0, 64], sizes = [2, 32], strides = [1, 1]} : vector<2x96xf32> to vector<2x32xf32>
    %232 = vector.extract_strided_slice %214 {offsets = [0, 64], sizes = [2, 32], strides = [1, 1]} : vector<2x96xf32> to vector<2x32xf32>
    %233 = arith.mulf %222, %232 : vector<2x32xf32>
    %234 = arith.addf %231, %233 : vector<2x32xf32>
    %235 = math.tanh %234 : vector<2x32xf32>
    %cst_55 = arith.constant 1.000000e+00 : f32
    %236 = vector.broadcast %cst_55 : f32 to vector<2x32xf32>
    %237 = arith.subf %236, %230 : vector<2x32xf32>
    %238 = arith.mulf %237, %235 : vector<2x32xf32>
    %239 = arith.mulf %230, %174 : vector<2x32xf32>
    %240 = arith.addf %238, %239 : vector<2x32xf32>
    %cst_56 = arith.constant dense<0.000000e+00> : vector<2x96xf32>
    %241 = tpu.matmul %203, %7, %cst_56 {dimension_numbers = #tpu.dot_dimension_numbers<[1], [0], [0], [1], [0, 0, 1, 1], [], []>} : vector<2x32xf32>, vector<32x96xf32>, vector<2x96xf32> -> vector<2x96xf32>
    %242 = vector.broadcast %9 : vector<1x96xf32> to vector<2x96xf32>
    %243 = arith.addf %241, %242 : vector<2x96xf32>
    %244 = vector.extract_strided_slice %211 {offsets = [0, 0], sizes = [2, 32], strides = [1, 1]} : vector<2x96xf32> to vector<2x32xf32>
    %245 = vector.extract_strided_slice %243 {offsets = [0, 0], sizes = [2, 32], strides = [1, 1]} : vector<2x96xf32> to vector<2x32xf32>
    %246 = arith.addf %244, %245 : vector<2x32xf32>
    %247 = arith.negf %246 : vector<2x32xf32>
    %248 = math.exp %247 : vector<2x32xf32>
    %cst_57 = arith.constant 1.000000e+00 : f32
    %249 = vector.broadcast %cst_57 : f32 to vector<2x32xf32>
    %250 = arith.addf %249, %248 : vector<2x32xf32>
    %251 = arith.divf %249, %250 : vector<2x32xf32>
    %252 = vector.extract_strided_slice %211 {offsets = [0, 32], sizes = [2, 32], strides = [1, 1]} : vector<2x96xf32> to vector<2x32xf32>
    %253 = vector.extract_strided_slice %243 {offsets = [0, 32], sizes = [2, 32], strides = [1, 1]} : vector<2x96xf32> to vector<2x32xf32>
    %254 = arith.addf %252, %253 : vector<2x32xf32>
    %255 = arith.negf %254 : vector<2x32xf32>
    %256 = math.exp %255 : vector<2x32xf32>
    %cst_58 = arith.constant 1.000000e+00 : f32
    %257 = vector.broadcast %cst_58 : f32 to vector<2x32xf32>
    %258 = arith.addf %257, %256 : vector<2x32xf32>
    %259 = arith.divf %257, %258 : vector<2x32xf32>
    %260 = vector.extract_strided_slice %211 {offsets = [0, 64], sizes = [2, 32], strides = [1, 1]} : vector<2x96xf32> to vector<2x32xf32>
    %261 = vector.extract_strided_slice %243 {offsets = [0, 64], sizes = [2, 32], strides = [1, 1]} : vector<2x96xf32> to vector<2x32xf32>
    %262 = arith.mulf %251, %261 : vector<2x32xf32>
    %263 = arith.addf %260, %262 : vector<2x32xf32>
    %264 = math.tanh %263 : vector<2x32xf32>
    %cst_59 = arith.constant 1.000000e+00 : f32
    %265 = vector.broadcast %cst_59 : f32 to vector<2x32xf32>
    %266 = arith.subf %265, %259 : vector<2x32xf32>
    %267 = arith.mulf %266, %264 : vector<2x32xf32>
    %268 = arith.mulf %259, %203 : vector<2x32xf32>
    %269 = arith.addf %267, %268 : vector<2x32xf32>
    %c3 = arith.constant 3 : index
    %c0_60 = arith.constant 0 : index
    %c0_61 = arith.constant 0 : index
    %270 = vector.load %arg7[%c3, %c0_60, %c0_61] : memref<8x2x32xf32, #tpu.memory_space<vmem>>, vector<1x2x32xf32>
    %271 = vector.shape_cast %270 : vector<1x2x32xf32> to vector<2x32xf32>
    %272 = vector.shape_cast %240 : vector<2x32xf32> to vector<1x2x32xf32>
    tpu.vector_store %arg7[%c3, %c0_60, %c0_61], %272 {strides = array<i32>} : memref<8x2x32xf32, #tpu.memory_space<vmem>>, vector<1x2x32xf32>,
    %c4 = arith.constant 4 : index
    %c0_62 = arith.constant 0 : index
    %c0_63 = arith.constant 0 : index
    %273 = vector.load %arg8[%c4, %c0_62, %c0_63] : memref<8x2x32xf32, #tpu.memory_space<vmem>>, vector<1x2x32xf32>
    %274 = vector.shape_cast %273 : vector<1x2x32xf32> to vector<2x32xf32>
    %275 = vector.shape_cast %269 : vector<2x32xf32> to vector<1x2x32xf32>
    tpu.vector_store %arg8[%c4, %c0_62, %c0_63], %275 {strides = array<i32>} : memref<8x2x32xf32, #tpu.memory_space<vmem>>, vector<1x2x32xf32>,
    %276 = vector.extract_strided_slice %5 {offsets = [8, 0], sizes = [2, 96], strides = [1, 1]} : vector<16x192xf32> to vector<2x96xf32>
    %277 = vector.extract_strided_slice %5 {offsets = [6, 96], sizes = [2, 96], strides = [1, 1]} : vector<16x192xf32> to vector<2x96xf32>
    %cst_64 = arith.constant dense<0.000000e+00> : vector<2x96xf32>
    %278 = tpu.matmul %240, %6, %cst_64 {dimension_numbers = #tpu.dot_dimension_numbers<[1], [0], [0], [1], [0, 0, 1, 1], [], []>} : vector<2x32xf32>, vector<32x96xf32>, vector<2x96xf32> -> vector<2x96xf32>
    %279 = vector.broadcast %8 : vector<1x96xf32> to vector<2x96xf32>
    %280 = arith.addf %278, %279 : vector<2x96xf32>
    %281 = vector.extract_strided_slice %276 {offsets = [0, 0], sizes = [2, 32], strides = [1, 1]} : vector<2x96xf32> to vector<2x32xf32>
    %282 = vector.extract_strided_slice %280 {offsets = [0, 0], sizes = [2, 32], strides = [1, 1]} : vector<2x96xf32> to vector<2x32xf32>
    %283 = arith.addf %281, %282 : vector<2x32xf32>
    %284 = arith.negf %283 : vector<2x32xf32>
    %285 = math.exp %284 : vector<2x32xf32>
    %cst_65 = arith.constant 1.000000e+00 : f32
    %286 = vector.broadcast %cst_65 : f32 to vector<2x32xf32>
    %287 = arith.addf %286, %285 : vector<2x32xf32>
    %288 = arith.divf %286, %287 : vector<2x32xf32>
    %289 = vector.extract_strided_slice %276 {offsets = [0, 32], sizes = [2, 32], strides = [1, 1]} : vector<2x96xf32> to vector<2x32xf32>
    %290 = vector.extract_strided_slice %280 {offsets = [0, 32], sizes = [2, 32], strides = [1, 1]} : vector<2x96xf32> to vector<2x32xf32>
    %291 = arith.addf %289, %290 : vector<2x32xf32>
    %292 = arith.negf %291 : vector<2x32xf32>
    %293 = math.exp %292 : vector<2x32xf32>
    %cst_66 = arith.constant 1.000000e+00 : f32
    %294 = vector.broadcast %cst_66 : f32 to vector<2x32xf32>
    %295 = arith.addf %294, %293 : vector<2x32xf32>
    %296 = arith.divf %294, %295 : vector<2x32xf32>
    %297 = vector.extract_strided_slice %276 {offsets = [0, 64], sizes = [2, 32], strides = [1, 1]} : vector<2x96xf32> to vector<2x32xf32>
    %298 = vector.extract_strided_slice %280 {offsets = [0, 64], sizes = [2, 32], strides = [1, 1]} : vector<2x96xf32> to vector<2x32xf32>
    %299 = arith.mulf %288, %298 : vector<2x32xf32>
    %300 = arith.addf %297, %299 : vector<2x32xf32>
    %301 = math.tanh %300 : vector<2x32xf32>
    %cst_67 = arith.constant 1.000000e+00 : f32
    %302 = vector.broadcast %cst_67 : f32 to vector<2x32xf32>
    %303 = arith.subf %302, %296 : vector<2x32xf32>
    %304 = arith.mulf %303, %301 : vector<2x32xf32>
    %305 = arith.mulf %296, %240 : vector<2x32xf32>
    %306 = arith.addf %304, %305 : vector<2x32xf32>
    %cst_68 = arith.constant dense<0.000000e+00> : vector<2x96xf32>
    %307 = tpu.matmul %269, %7, %cst_68 {dimension_numbers = #tpu.dot_dimension_numbers<[1], [0], [0], [1], [0, 0, 1, 1], [], []>} : vector<2x32xf32>, vector<32x96xf32>, vector<2x96xf32> -> vector<2x96xf32>
    %308 = vector.broadcast %9 : vector<1x96xf32> to vector<2x96xf32>
    %309 = arith.addf %307, %308 : vector<2x96xf32>
    %310 = vector.extract_strided_slice %277 {offsets = [0, 0], sizes = [2, 32], strides = [1, 1]} : vector<2x96xf32> to vector<2x32xf32>
    %311 = vector.extract_strided_slice %309 {offsets = [0, 0], sizes = [2, 32], strides = [1, 1]} : vector<2x96xf32> to vector<2x32xf32>
    %312 = arith.addf %310, %311 : vector<2x32xf32>
    %313 = arith.negf %312 : vector<2x32xf32>
    %314 = math.exp %313 : vector<2x32xf32>
    %cst_69 = arith.constant 1.000000e+00 : f32
    %315 = vector.broadcast %cst_69 : f32 to vector<2x32xf32>
    %316 = arith.addf %315, %314 : vector<2x32xf32>
    %317 = arith.divf %315, %316 : vector<2x32xf32>
    %318 = vector.extract_strided_slice %277 {offsets = [0, 32], sizes = [2, 32], strides = [1, 1]} : vector<2x96xf32> to vector<2x32xf32>
    %319 = vector.extract_strided_slice %309 {offsets = [0, 32], sizes = [2, 32], strides = [1, 1]} : vector<2x96xf32> to vector<2x32xf32>
    %320 = arith.addf %318, %319 : vector<2x32xf32>
    %321 = arith.negf %320 : vector<2x32xf32>
    %322 = math.exp %321 : vector<2x32xf32>
    %cst_70 = arith.constant 1.000000e+00 : f32
    %323 = vector.broadcast %cst_70 : f32 to vector<2x32xf32>
    %324 = arith.addf %323, %322 : vector<2x32xf32>
    %325 = arith.divf %323, %324 : vector<2x32xf32>
    %326 = vector.extract_strided_slice %277 {offsets = [0, 64], sizes = [2, 32], strides = [1, 1]} : vector<2x96xf32> to vector<2x32xf32>
    %327 = vector.extract_strided_slice %309 {offsets = [0, 64], sizes = [2, 32], strides = [1, 1]} : vector<2x96xf32> to vector<2x32xf32>
    %328 = arith.mulf %317, %327 : vector<2x32xf32>
    %329 = arith.addf %326, %328 : vector<2x32xf32>
    %330 = math.tanh %329 : vector<2x32xf32>
    %cst_71 = arith.constant 1.000000e+00 : f32
    %331 = vector.broadcast %cst_71 : f32 to vector<2x32xf32>
    %332 = arith.subf %331, %325 : vector<2x32xf32>
    %333 = arith.mulf %332, %330 : vector<2x32xf32>
    %334 = arith.mulf %325, %269 : vector<2x32xf32>
    %335 = arith.addf %333, %334 : vector<2x32xf32>
    %c4_72 = arith.constant 4 : index
    %c0_73 = arith.constant 0 : index
    %c0_74 = arith.constant 0 : index
    %336 = vector.load %arg7[%c4_72, %c0_73, %c0_74] : memref<8x2x32xf32, #tpu.memory_space<vmem>>, vector<1x2x32xf32>
    %337 = vector.shape_cast %336 : vector<1x2x32xf32> to vector<2x32xf32>
    %338 = vector.shape_cast %306 : vector<2x32xf32> to vector<1x2x32xf32>
    tpu.vector_store %arg7[%c4_72, %c0_73, %c0_74], %338 {strides = array<i32>} : memref<8x2x32xf32, #tpu.memory_space<vmem>>, vector<1x2x32xf32>,
    %c3_75 = arith.constant 3 : index
    %c0_76 = arith.constant 0 : index
    %c0_77 = arith.constant 0 : index
    %339 = vector.load %arg8[%c3_75, %c0_76, %c0_77] : memref<8x2x32xf32, #tpu.memory_space<vmem>>, vector<1x2x32xf32>
    %340 = vector.shape_cast %339 : vector<1x2x32xf32> to vector<2x32xf32>
    %341 = vector.shape_cast %335 : vector<2x32xf32> to vector<1x2x32xf32>
    tpu.vector_store %arg8[%c3_75, %c0_76, %c0_77], %341 {strides = array<i32>} : memref<8x2x32xf32, #tpu.memory_space<vmem>>, vector<1x2x32xf32>,
    %342 = vector.extract_strided_slice %5 {offsets = [10, 0], sizes = [2, 96], strides = [1, 1]} : vector<16x192xf32> to vector<2x96xf32>
    %343 = vector.extract_strided_slice %5 {offsets = [4, 96], sizes = [2, 96], strides = [1, 1]} : vector<16x192xf32> to vector<2x96xf32>
    %cst_78 = arith.constant dense<0.000000e+00> : vector<2x96xf32>
    %344 = tpu.matmul %306, %6, %cst_78 {dimension_numbers = #tpu.dot_dimension_numbers<[1], [0], [0], [1], [0, 0, 1, 1], [], []>} : vector<2x32xf32>, vector<32x96xf32>, vector<2x96xf32> -> vector<2x96xf32>
    %345 = vector.broadcast %8 : vector<1x96xf32> to vector<2x96xf32>
    %346 = arith.addf %344, %345 : vector<2x96xf32>
    %347 = vector.extract_strided_slice %342 {offsets = [0, 0], sizes = [2, 32], strides = [1, 1]} : vector<2x96xf32> to vector<2x32xf32>
    %348 = vector.extract_strided_slice %346 {offsets = [0, 0], sizes = [2, 32], strides = [1, 1]} : vector<2x96xf32> to vector<2x32xf32>
    %349 = arith.addf %347, %348 : vector<2x32xf32>
    %350 = arith.negf %349 : vector<2x32xf32>
    %351 = math.exp %350 : vector<2x32xf32>
    %cst_79 = arith.constant 1.000000e+00 : f32
    %352 = vector.broadcast %cst_79 : f32 to vector<2x32xf32>
    %353 = arith.addf %352, %351 : vector<2x32xf32>
    %354 = arith.divf %352, %353 : vector<2x32xf32>
    %355 = vector.extract_strided_slice %342 {offsets = [0, 32], sizes = [2, 32], strides = [1, 1]} : vector<2x96xf32> to vector<2x32xf32>
    %356 = vector.extract_strided_slice %346 {offsets = [0, 32], sizes = [2, 32], strides = [1, 1]} : vector<2x96xf32> to vector<2x32xf32>
    %357 = arith.addf %355, %356 : vector<2x32xf32>
    %358 = arith.negf %357 : vector<2x32xf32>
    %359 = math.exp %358 : vector<2x32xf32>
    %cst_80 = arith.constant 1.000000e+00 : f32
    %360 = vector.broadcast %cst_80 : f32 to vector<2x32xf32>
    %361 = arith.addf %360, %359 : vector<2x32xf32>
    %362 = arith.divf %360, %361 : vector<2x32xf32>
    %363 = vector.extract_strided_slice %342 {offsets = [0, 64], sizes = [2, 32], strides = [1, 1]} : vector<2x96xf32> to vector<2x32xf32>
    %364 = vector.extract_strided_slice %346 {offsets = [0, 64], sizes = [2, 32], strides = [1, 1]} : vector<2x96xf32> to vector<2x32xf32>
    %365 = arith.mulf %354, %364 : vector<2x32xf32>
    %366 = arith.addf %363, %365 : vector<2x32xf32>
    %367 = math.tanh %366 : vector<2x32xf32>
    %cst_81 = arith.constant 1.000000e+00 : f32
    %368 = vector.broadcast %cst_81 : f32 to vector<2x32xf32>
    %369 = arith.subf %368, %362 : vector<2x32xf32>
    %370 = arith.mulf %369, %367 : vector<2x32xf32>
    %371 = arith.mulf %362, %306 : vector<2x32xf32>
    %372 = arith.addf %370, %371 : vector<2x32xf32>
    %cst_82 = arith.constant dense<0.000000e+00> : vector<2x96xf32>
    %373 = tpu.matmul %335, %7, %cst_82 {dimension_numbers = #tpu.dot_dimension_numbers<[1], [0], [0], [1], [0, 0, 1, 1], [], []>} : vector<2x32xf32>, vector<32x96xf32>, vector<2x96xf32> -> vector<2x96xf32>
    %374 = vector.broadcast %9 : vector<1x96xf32> to vector<2x96xf32>
    %375 = arith.addf %373, %374 : vector<2x96xf32>
    %376 = vector.extract_strided_slice %343 {offsets = [0, 0], sizes = [2, 32], strides = [1, 1]} : vector<2x96xf32> to vector<2x32xf32>
    %377 = vector.extract_strided_slice %375 {offsets = [0, 0], sizes = [2, 32], strides = [1, 1]} : vector<2x96xf32> to vector<2x32xf32>
    %378 = arith.addf %376, %377 : vector<2x32xf32>
    %379 = arith.negf %378 : vector<2x32xf32>
    %380 = math.exp %379 : vector<2x32xf32>
    %cst_83 = arith.constant 1.000000e+00 : f32
    %381 = vector.broadcast %cst_83 : f32 to vector<2x32xf32>
    %382 = arith.addf %381, %380 : vector<2x32xf32>
    %383 = arith.divf %381, %382 : vector<2x32xf32>
    %384 = vector.extract_strided_slice %343 {offsets = [0, 32], sizes = [2, 32], strides = [1, 1]} : vector<2x96xf32> to vector<2x32xf32>
    %385 = vector.extract_strided_slice %375 {offsets = [0, 32], sizes = [2, 32], strides = [1, 1]} : vector<2x96xf32> to vector<2x32xf32>
    %386 = arith.addf %384, %385 : vector<2x32xf32>
    %387 = arith.negf %386 : vector<2x32xf32>
    %388 = math.exp %387 : vector<2x32xf32>
    %cst_84 = arith.constant 1.000000e+00 : f32
    %389 = vector.broadcast %cst_84 : f32 to vector<2x32xf32>
    %390 = arith.addf %389, %388 : vector<2x32xf32>
    %391 = arith.divf %389, %390 : vector<2x32xf32>
    %392 = vector.extract_strided_slice %343 {offsets = [0, 64], sizes = [2, 32], strides = [1, 1]} : vector<2x96xf32> to vector<2x32xf32>
    %393 = vector.extract_strided_slice %375 {offsets = [0, 64], sizes = [2, 32], strides = [1, 1]} : vector<2x96xf32> to vector<2x32xf32>
    %394 = arith.mulf %383, %393 : vector<2x32xf32>
    %395 = arith.addf %392, %394 : vector<2x32xf32>
    %396 = math.tanh %395 : vector<2x32xf32>
    %cst_85 = arith.constant 1.000000e+00 : f32
    %397 = vector.broadcast %cst_85 : f32 to vector<2x32xf32>
    %398 = arith.subf %397, %391 : vector<2x32xf32>
    %399 = arith.mulf %398, %396 : vector<2x32xf32>
    %400 = arith.mulf %391, %335 : vector<2x32xf32>
    %401 = arith.addf %399, %400 : vector<2x32xf32>
    %c5_86 = arith.constant 5 : index
    %c0_87 = arith.constant 0 : index
    %c0_88 = arith.constant 0 : index
    %402 = vector.load %arg7[%c5_86, %c0_87, %c0_88] : memref<8x2x32xf32, #tpu.memory_space<vmem>>, vector<1x2x32xf32>
    %403 = vector.shape_cast %402 : vector<1x2x32xf32> to vector<2x32xf32>
    %404 = vector.shape_cast %372 : vector<2x32xf32> to vector<1x2x32xf32>
    tpu.vector_store %arg7[%c5_86, %c0_87, %c0_88], %404 {strides = array<i32>} : memref<8x2x32xf32, #tpu.memory_space<vmem>>, vector<1x2x32xf32>,
    %c2_89 = arith.constant 2 : index
    %c0_90 = arith.constant 0 : index
    %c0_91 = arith.constant 0 : index
    %405 = vector.load %arg8[%c2_89, %c0_90, %c0_91] : memref<8x2x32xf32, #tpu.memory_space<vmem>>, vector<1x2x32xf32>
    %406 = vector.shape_cast %405 : vector<1x2x32xf32> to vector<2x32xf32>
    %407 = vector.shape_cast %401 : vector<2x32xf32> to vector<1x2x32xf32>
    tpu.vector_store %arg8[%c2_89, %c0_90, %c0_91], %407 {strides = array<i32>} : memref<8x2x32xf32, #tpu.memory_space<vmem>>, vector<1x2x32xf32>,
    %408 = vector.extract_strided_slice %5 {offsets = [12, 0], sizes = [2, 96], strides = [1, 1]} : vector<16x192xf32> to vector<2x96xf32>
    %409 = vector.extract_strided_slice %5 {offsets = [2, 96], sizes = [2, 96], strides = [1, 1]} : vector<16x192xf32> to vector<2x96xf32>
    %cst_92 = arith.constant dense<0.000000e+00> : vector<2x96xf32>
    %410 = tpu.matmul %372, %6, %cst_92 {dimension_numbers = #tpu.dot_dimension_numbers<[1], [0], [0], [1], [0, 0, 1, 1], [], []>} : vector<2x32xf32>, vector<32x96xf32>, vector<2x96xf32> -> vector<2x96xf32>
    %411 = vector.broadcast %8 : vector<1x96xf32> to vector<2x96xf32>
    %412 = arith.addf %410, %411 : vector<2x96xf32>
    %413 = vector.extract_strided_slice %408 {offsets = [0, 0], sizes = [2, 32], strides = [1, 1]} : vector<2x96xf32> to vector<2x32xf32>
    %414 = vector.extract_strided_slice %412 {offsets = [0, 0], sizes = [2, 32], strides = [1, 1]} : vector<2x96xf32> to vector<2x32xf32>
    %415 = arith.addf %413, %414 : vector<2x32xf32>
    %416 = arith.negf %415 : vector<2x32xf32>
    %417 = math.exp %416 : vector<2x32xf32>
    %cst_93 = arith.constant 1.000000e+00 : f32
    %418 = vector.broadcast %cst_93 : f32 to vector<2x32xf32>
    %419 = arith.addf %418, %417 : vector<2x32xf32>
    %420 = arith.divf %418, %419 : vector<2x32xf32>
    %421 = vector.extract_strided_slice %408 {offsets = [0, 32], sizes = [2, 32], strides = [1, 1]} : vector<2x96xf32> to vector<2x32xf32>
    %422 = vector.extract_strided_slice %412 {offsets = [0, 32], sizes = [2, 32], strides = [1, 1]} : vector<2x96xf32> to vector<2x32xf32>
    %423 = arith.addf %421, %422 : vector<2x32xf32>
    %424 = arith.negf %423 : vector<2x32xf32>
    %425 = math.exp %424 : vector<2x32xf32>
    %cst_94 = arith.constant 1.000000e+00 : f32
    %426 = vector.broadcast %cst_94 : f32 to vector<2x32xf32>
    %427 = arith.addf %426, %425 : vector<2x32xf32>
    %428 = arith.divf %426, %427 : vector<2x32xf32>
    %429 = vector.extract_strided_slice %408 {offsets = [0, 64], sizes = [2, 32], strides = [1, 1]} : vector<2x96xf32> to vector<2x32xf32>
    %430 = vector.extract_strided_slice %412 {offsets = [0, 64], sizes = [2, 32], strides = [1, 1]} : vector<2x96xf32> to vector<2x32xf32>
    %431 = arith.mulf %420, %430 : vector<2x32xf32>
    %432 = arith.addf %429, %431 : vector<2x32xf32>
    %433 = math.tanh %432 : vector<2x32xf32>
    %cst_95 = arith.constant 1.000000e+00 : f32
    %434 = vector.broadcast %cst_95 : f32 to vector<2x32xf32>
    %435 = arith.subf %434, %428 : vector<2x32xf32>
    %436 = arith.mulf %435, %433 : vector<2x32xf32>
    %437 = arith.mulf %428, %372 : vector<2x32xf32>
    %438 = arith.addf %436, %437 : vector<2x32xf32>
    %cst_96 = arith.constant dense<0.000000e+00> : vector<2x96xf32>
    %439 = tpu.matmul %401, %7, %cst_96 {dimension_numbers = #tpu.dot_dimension_numbers<[1], [0], [0], [1], [0, 0, 1, 1], [], []>} : vector<2x32xf32>, vector<32x96xf32>, vector<2x96xf32> -> vector<2x96xf32>
    %440 = vector.broadcast %9 : vector<1x96xf32> to vector<2x96xf32>
    %441 = arith.addf %439, %440 : vector<2x96xf32>
    %442 = vector.extract_strided_slice %409 {offsets = [0, 0], sizes = [2, 32], strides = [1, 1]} : vector<2x96xf32> to vector<2x32xf32>
    %443 = vector.extract_strided_slice %441 {offsets = [0, 0], sizes = [2, 32], strides = [1, 1]} : vector<2x96xf32> to vector<2x32xf32>
    %444 = arith.addf %442, %443 : vector<2x32xf32>
    %445 = arith.negf %444 : vector<2x32xf32>
    %446 = math.exp %445 : vector<2x32xf32>
    %cst_97 = arith.constant 1.000000e+00 : f32
    %447 = vector.broadcast %cst_97 : f32 to vector<2x32xf32>
    %448 = arith.addf %447, %446 : vector<2x32xf32>
    %449 = arith.divf %447, %448 : vector<2x32xf32>
    %450 = vector.extract_strided_slice %409 {offsets = [0, 32], sizes = [2, 32], strides = [1, 1]} : vector<2x96xf32> to vector<2x32xf32>
    %451 = vector.extract_strided_slice %441 {offsets = [0, 32], sizes = [2, 32], strides = [1, 1]} : vector<2x96xf32> to vector<2x32xf32>
    %452 = arith.addf %450, %451 : vector<2x32xf32>
    %453 = arith.negf %452 : vector<2x32xf32>
    %454 = math.exp %453 : vector<2x32xf32>
    %cst_98 = arith.constant 1.000000e+00 : f32
    %455 = vector.broadcast %cst_98 : f32 to vector<2x32xf32>
    %456 = arith.addf %455, %454 : vector<2x32xf32>
    %457 = arith.divf %455, %456 : vector<2x32xf32>
    %458 = vector.extract_strided_slice %409 {offsets = [0, 64], sizes = [2, 32], strides = [1, 1]} : vector<2x96xf32> to vector<2x32xf32>
    %459 = vector.extract_strided_slice %441 {offsets = [0, 64], sizes = [2, 32], strides = [1, 1]} : vector<2x96xf32> to vector<2x32xf32>
    %460 = arith.mulf %449, %459 : vector<2x32xf32>
    %461 = arith.addf %458, %460 : vector<2x32xf32>
    %462 = math.tanh %461 : vector<2x32xf32>
    %cst_99 = arith.constant 1.000000e+00 : f32
    %463 = vector.broadcast %cst_99 : f32 to vector<2x32xf32>
    %464 = arith.subf %463, %457 : vector<2x32xf32>
    %465 = arith.mulf %464, %462 : vector<2x32xf32>
    %466 = arith.mulf %457, %401 : vector<2x32xf32>
    %467 = arith.addf %465, %466 : vector<2x32xf32>
    %c6_100 = arith.constant 6 : index
    %c0_101 = arith.constant 0 : index
    %c0_102 = arith.constant 0 : index
    %468 = vector.load %arg7[%c6_100, %c0_101, %c0_102] : memref<8x2x32xf32, #tpu.memory_space<vmem>>, vector<1x2x32xf32>
    %469 = vector.shape_cast %468 : vector<1x2x32xf32> to vector<2x32xf32>
    %470 = vector.shape_cast %438 : vector<2x32xf32> to vector<1x2x32xf32>
    tpu.vector_store %arg7[%c6_100, %c0_101, %c0_102], %470 {strides = array<i32>} : memref<8x2x32xf32, #tpu.memory_space<vmem>>, vector<1x2x32xf32>,
    %c1_103 = arith.constant 1 : index
    %c0_104 = arith.constant 0 : index
    %c0_105 = arith.constant 0 : index
    %471 = vector.load %arg8[%c1_103, %c0_104, %c0_105] : memref<8x2x32xf32, #tpu.memory_space<vmem>>, vector<1x2x32xf32>
    %472 = vector.shape_cast %471 : vector<1x2x32xf32> to vector<2x32xf32>
    %473 = vector.shape_cast %467 : vector<2x32xf32> to vector<1x2x32xf32>
    tpu.vector_store %arg8[%c1_103, %c0_104, %c0_105], %473 {strides = array<i32>} : memref<8x2x32xf32, #tpu.memory_space<vmem>>, vector<1x2x32xf32>,
    %474 = vector.extract_strided_slice %5 {offsets = [14, 0], sizes = [2, 96], strides = [1, 1]} : vector<16x192xf32> to vector<2x96xf32>
    %475 = vector.extract_strided_slice %5 {offsets = [0, 96], sizes = [2, 96], strides = [1, 1]} : vector<16x192xf32> to vector<2x96xf32>
    %cst_106 = arith.constant dense<0.000000e+00> : vector<2x96xf32>
    %476 = tpu.matmul %438, %6, %cst_106 {dimension_numbers = #tpu.dot_dimension_numbers<[1], [0], [0], [1], [0, 0, 1, 1], [], []>} : vector<2x32xf32>, vector<32x96xf32>, vector<2x96xf32> -> vector<2x96xf32>
    %477 = vector.broadcast %8 : vector<1x96xf32> to vector<2x96xf32>
    %478 = arith.addf %476, %477 : vector<2x96xf32>
    %479 = vector.extract_strided_slice %474 {offsets = [0, 0], sizes = [2, 32], strides = [1, 1]} : vector<2x96xf32> to vector<2x32xf32>
    %480 = vector.extract_strided_slice %478 {offsets = [0, 0], sizes = [2, 32], strides = [1, 1]} : vector<2x96xf32> to vector<2x32xf32>
    %481 = arith.addf %479, %480 : vector<2x32xf32>
    %482 = arith.negf %481 : vector<2x32xf32>
    %483 = math.exp %482 : vector<2x32xf32>
    %cst_107 = arith.constant 1.000000e+00 : f32
    %484 = vector.broadcast %cst_107 : f32 to vector<2x32xf32>
    %485 = arith.addf %484, %483 : vector<2x32xf32>
    %486 = arith.divf %484, %485 : vector<2x32xf32>
    %487 = vector.extract_strided_slice %474 {offsets = [0, 32], sizes = [2, 32], strides = [1, 1]} : vector<2x96xf32> to vector<2x32xf32>
    %488 = vector.extract_strided_slice %478 {offsets = [0, 32], sizes = [2, 32], strides = [1, 1]} : vector<2x96xf32> to vector<2x32xf32>
    %489 = arith.addf %487, %488 : vector<2x32xf32>
    %490 = arith.negf %489 : vector<2x32xf32>
    %491 = math.exp %490 : vector<2x32xf32>
    %cst_108 = arith.constant 1.000000e+00 : f32
    %492 = vector.broadcast %cst_108 : f32 to vector<2x32xf32>
    %493 = arith.addf %492, %491 : vector<2x32xf32>
    %494 = arith.divf %492, %493 : vector<2x32xf32>
    %495 = vector.extract_strided_slice %474 {offsets = [0, 64], sizes = [2, 32], strides = [1, 1]} : vector<2x96xf32> to vector<2x32xf32>
    %496 = vector.extract_strided_slice %478 {offsets = [0, 64], sizes = [2, 32], strides = [1, 1]} : vector<2x96xf32> to vector<2x32xf32>
    %497 = arith.mulf %486, %496 : vector<2x32xf32>
    %498 = arith.addf %495, %497 : vector<2x32xf32>
    %499 = math.tanh %498 : vector<2x32xf32>
    %cst_109 = arith.constant 1.000000e+00 : f32
    %500 = vector.broadcast %cst_109 : f32 to vector<2x32xf32>
    %501 = arith.subf %500, %494 : vector<2x32xf32>
    %502 = arith.mulf %501, %499 : vector<2x32xf32>
    %503 = arith.mulf %494, %438 : vector<2x32xf32>
    %504 = arith.addf %502, %503 : vector<2x32xf32>
    %cst_110 = arith.constant dense<0.000000e+00> : vector<2x96xf32>
    %505 = tpu.matmul %467, %7, %cst_110 {dimension_numbers = #tpu.dot_dimension_numbers<[1], [0], [0], [1], [0, 0, 1, 1], [], []>} : vector<2x32xf32>, vector<32x96xf32>, vector<2x96xf32> -> vector<2x96xf32>
    %506 = vector.broadcast %9 : vector<1x96xf32> to vector<2x96xf32>
    %507 = arith.addf %505, %506 : vector<2x96xf32>
    %508 = vector.extract_strided_slice %475 {offsets = [0, 0], sizes = [2, 32], strides = [1, 1]} : vector<2x96xf32> to vector<2x32xf32>
    %509 = vector.extract_strided_slice %507 {offsets = [0, 0], sizes = [2, 32], strides = [1, 1]} : vector<2x96xf32> to vector<2x32xf32>
    %510 = arith.addf %508, %509 : vector<2x32xf32>
    %511 = arith.negf %510 : vector<2x32xf32>
    %512 = math.exp %511 : vector<2x32xf32>
    %cst_111 = arith.constant 1.000000e+00 : f32
    %513 = vector.broadcast %cst_111 : f32 to vector<2x32xf32>
    %514 = arith.addf %513, %512 : vector<2x32xf32>
    %515 = arith.divf %513, %514 : vector<2x32xf32>
    %516 = vector.extract_strided_slice %475 {offsets = [0, 32], sizes = [2, 32], strides = [1, 1]} : vector<2x96xf32> to vector<2x32xf32>
    %517 = vector.extract_strided_slice %507 {offsets = [0, 32], sizes = [2, 32], strides = [1, 1]} : vector<2x96xf32> to vector<2x32xf32>
    %518 = arith.addf %516, %517 : vector<2x32xf32>
    %519 = arith.negf %518 : vector<2x32xf32>
    %520 = math.exp %519 : vector<2x32xf32>
    %cst_112 = arith.constant 1.000000e+00 : f32
    %521 = vector.broadcast %cst_112 : f32 to vector<2x32xf32>
    %522 = arith.addf %521, %520 : vector<2x32xf32>
    %523 = arith.divf %521, %522 : vector<2x32xf32>
    %524 = vector.extract_strided_slice %475 {offsets = [0, 64], sizes = [2, 32], strides = [1, 1]} : vector<2x96xf32> to vector<2x32xf32>
    %525 = vector.extract_strided_slice %507 {offsets = [0, 64], sizes = [2, 32], strides = [1, 1]} : vector<2x96xf32> to vector<2x32xf32>
    %526 = arith.mulf %515, %525 : vector<2x32xf32>
    %527 = arith.addf %524, %526 : vector<2x32xf32>
    %528 = math.tanh %527 : vector<2x32xf32>
    %cst_113 = arith.constant 1.000000e+00 : f32
    %529 = vector.broadcast %cst_113 : f32 to vector<2x32xf32>
    %530 = arith.subf %529, %523 : vector<2x32xf32>
    %531 = arith.mulf %530, %528 : vector<2x32xf32>
    %532 = arith.mulf %523, %467 : vector<2x32xf32>
    %533 = arith.addf %531, %532 : vector<2x32xf32>
    %c7_114 = arith.constant 7 : index
    %c0_115 = arith.constant 0 : index
    %c0_116 = arith.constant 0 : index
    %534 = vector.load %arg7[%c7_114, %c0_115, %c0_116] : memref<8x2x32xf32, #tpu.memory_space<vmem>>, vector<1x2x32xf32>
    %535 = vector.shape_cast %534 : vector<1x2x32xf32> to vector<2x32xf32>
    %536 = vector.shape_cast %504 : vector<2x32xf32> to vector<1x2x32xf32>
    tpu.vector_store %arg7[%c7_114, %c0_115, %c0_116], %536 {strides = array<i32>} : memref<8x2x32xf32, #tpu.memory_space<vmem>>, vector<1x2x32xf32>,
    %c0_117 = arith.constant 0 : index
    %c0_118 = arith.constant 0 : index
    %c0_119 = arith.constant 0 : index
    %537 = vector.load %arg8[%c0_117, %c0_118, %c0_119] : memref<8x2x32xf32, #tpu.memory_space<vmem>>, vector<1x2x32xf32>
    %538 = vector.shape_cast %537 : vector<1x2x32xf32> to vector<2x32xf32>
    %539 = vector.shape_cast %533 : vector<2x32xf32> to vector<1x2x32xf32>
    tpu.vector_store %arg8[%c0_117, %c0_118, %c0_119], %539 {strides = array<i32>} : memref<8x2x32xf32, #tpu.memory_space<vmem>>, vector<1x2x32xf32>,
    %540 = tpu.concatenate %504, %533 in 1 : vector<2x32xf32>, vector<2x32xf32> -> vector<2x64xf32>
    %c0_120 = arith.constant 0 : index
    %c0_121 = arith.constant 0 : index
    %541 = vector.load %arg9[%c0_120, %c0_121] : memref<2x64xf32, #tpu.memory_space<vmem>>, vector<2x64xf32>
    tpu.vector_store %arg9[%c0_120, %c0_121], %540 {strides = array<i32>} : memref<2x64xf32, #tpu.memory_space<vmem>>, vector<2x64xf32>,
    return
  }
}

</mosaic_0001>

<llo_original>
// kernel: _lambda_.2
$region0: #{_lambda_.2}
  #allocation0 [shape = 'u32[]', space=smem, size = 0x4, offset = 0x4, fixed_abs, tag = 'smem constant byte address 0x4 - core index']
  #allocation1 [shape = 'u32[144,128]{1,0:T(1,128)}', space=vmem, size = 0x12000, scoped, tag = 'internal scratch']
  %s0 = inlined_call_operand.vmem [shape: f32[16,32], index: 0, kind: input, shape index: {}]
  %s1 = inlined_call_operand.vmem [shape: f32[32,192], index: 1, kind: input, shape index: {}]
  %s2 = inlined_call_operand.hbm [shape: f32[32,96], index: 2, kind: input, shape index: {}]
  %s3 = inlined_call_operand.hbm [shape: f32[32,96], index: 3, kind: input, shape index: {}]
  %s4 = inlined_call_operand.vmem [shape: f32[1,192], index: 4, kind: input, shape index: {}]
  %s5 = inlined_call_operand.vmem [shape: f32[1,96], index: 5, kind: input, shape index: {}]
  %s6 = inlined_call_operand.vmem [shape: f32[1,96], index: 6, kind: input, shape index: {}]
  %s7 = inlined_call_operand.vmem [shape: f32[8,2,32], index: 7, kind: output, shape index: {0}]
  %s8 = inlined_call_operand.vmem [shape: f32[8,2,32], index: 8, kind: output, shape index: {1}]
  %s9 = inlined_call_operand.vmem [shape: f32[2,64], index: 9, kind: output, shape index: {2}]
  %10 = xla_tuple %s7, %s8, %s9
  %s11 = sld [smem:[#allocation0]]
  $region62: #{_lambda_.2} parent=0
    _
  %s13 = ssub.s32 1, %s11
  %s14 = scalar_select 0, %s13, %s11
  $region1: #{_lambda_.2} parent=0
    #allocation2 [shape = 'u8[16384]{0}', space=vmem, size = 0x4000, scoped, tag = 'input window, operand 2, single buffered']
    #allocation3 [shape = 's32[1]{0}', space=sflag, size = 0x4, scoped, tag = 'scoped memory for _lambda_.2']
    #allocation4 [shape = 'u8[16384]{0}', space=vmem, size = 0x4000, scoped, tag = 'input window, operand 3, single buffered']
    #allocation5 [shape = 's32[1]{0}', space=sflag, size = 0x4, scoped, tag = 'scoped memory for _lambda_.2']
    %15 = vsyncpa [#allocation3], 0
    %16 = vsyncpa [#allocation5], 0
    // Predicated region
    $region2: #{_lambda_.2} parent=1 // pred_check
      _
    $region3: #{_lambda_.2} parent=1 // pred_check_branch
      %18 = sbr.rel (0) target = $region5
    $region4: #{_lambda_.2} parent=1 // pred_region
      _
    $region5: #{_lambda_.2} parent=1 // pred_fallthru
      _
    // Predicated region
    $region6: #{_lambda_.2} parent=1 // pred_check
      _
    $region7: #{_lambda_.2} parent=1 // pred_check_branch
      %20 = sbr.rel (0) target = $region9
    $region8: #{_lambda_.2} parent=1 // pred_region
      _
    $region9: #{_lambda_.2} parent=1 // pred_fallthru
      _
    // Predicated region
    $region10: #{_lambda_.2} parent=1 // pred_check
      _
    $region11: #{_lambda_.2} parent=1 // pred_check_branch
      %22 = sbr.rel (0) target = $region13
    $region12: #{_lambda_.2} parent=1 // pred_region
      %s24 = ssub.s32 512, 512
      %25 = vsyncadd [#allocation3], %s24
      %s26 = sshll.u32 [#allocation2], 4
      %s27 = int_to_ptr.vmem [resolvable:$true] %s26
      %32 = dma.hbm_to_vmem [thread:$0]  %s2, 512, %s27, [#allocation3], 128, 128, 8
    $region13: #{_lambda_.2} parent=1 // pred_fallthru
      _
    // Predicated region
    $region14: #{_lambda_.2} parent=1 // pred_check
      _
    $region15: #{_lambda_.2} parent=1 // pred_check_branch
      %34 = sbr.rel (0) target = $region17
    $region16: #{_lambda_.2} parent=1 // pred_region
      %s36 = ssub.s32 512, 512
      %37 = vsyncadd [#allocation5], %s36
      %s38 = sshll.u32 [#allocation4], 4
      %s39 = int_to_ptr.vmem [resolvable:$true] %s38
      %44 = dma.hbm_to_vmem [thread:$0]  %s3, 512, %s39, [#allocation5], 128, 128, 8
    $region17: #{_lambda_.2} parent=1 // pred_fallthru
      _
    // Predicated region
    $region18: #{_lambda_.2} parent=1 // pred_check
      _
    $region19: #{_lambda_.2} parent=1 // pred_check_branch
      %46 = sbr.rel (0) target = $region21
    $region20: #{_lambda_.2} parent=1 // pred_region
      _
    $region21: #{_lambda_.2} parent=1 // pred_fallthru
      _
    // Predicated region
    $region22: #{_lambda_.2} parent=1 // pred_check
      _
    $region23: #{_lambda_.2} parent=1 // pred_check_branch
      %48 = sbr.rel (0) target = $region25
    $region24: #{_lambda_.2} parent=1 // pred_region
      _
    $region25: #{_lambda_.2} parent=1 // pred_fallthru
      _
    // Predicated region
    $region26: #{_lambda_.2} parent=1 // pred_check
      _
    $region27: #{_lambda_.2} parent=1 // pred_check_branch
      %50 = sbr.rel (0) target = $region29
    $region28: #{_lambda_.2} parent=1 // pred_region
      _
    $region29: #{_lambda_.2} parent=1 // pred_fallthru
      _
    // Predicated region
    $region30: #{_lambda_.2} parent=1 // pred_check
      _
    $region31: #{_lambda_.2} parent=1 // pred_check_branch
      %52 = sbr.rel (0) target = $region33
    $region32: #{_lambda_.2} parent=1 // pred_region
      %53 = dma.done [#allocation3], 512
    $region33: #{_lambda_.2} parent=1 // pred_fallthru
      _
    // Predicated region
    $region34: #{_lambda_.2} parent=1 // pred_check
      _
    $region35: #{_lambda_.2} parent=1 // pred_check_branch
      %55 = sbr.rel (0) target = $region37
    $region36: #{_lambda_.2} parent=1 // pred_region
      %56 = dma.done [#allocation5], 512
    $region37: #{_lambda_.2} parent=1 // pred_fallthru
      _
    %v57 = vld [vmem:[%s0] sm:$0xff]
    %v58 = vld [vmem:[%s0 + $0x8] sm:$0xff]
    %v59 = vld [vmem:[%s1] sm:$0xff]
    %v60 = vld [vmem:[%s1 + $0x8] sm:$0xff]
    %v61 = vld [vmem:[%s1 + $0x10] sm:$0xff]
    %v62 = vld [vmem:[%s1 + $0x18] sm:$0xff]
    %v63 = vld [vmem:[%s1 + $0x20] sm:$0xff]
    %v64 = vld [vmem:[%s1 + $0x28] sm:$0xff]
    %v65 = vld [vmem:[%s1 + $0x30] sm:$0xff]
    %v66 = vld [vmem:[%s1 + $0x38] sm:$0xff]
    %v67 = vld [vmem:[%s4] sm:$0x3]
    %v69 = vlaneseq
    %v70 = vshrl.u32 %v69, 7
    %v71 = vsub.s32 0, %v70
    %v72 = vrot.slane %v67, %v71
    %v73 = vlaneseq
    %v74 = vshrl.u32 %v73, 7
    %v75 = vsub.s32 1, %v74
    %v76 = vrot.slane %v67, %v75
    %vm79 = vcmask 261120
    %v81 = vsel %vm79, %v57, 0
    %v84 = vsel %vm79, %v58, 0
    %86 = vmatprep.subr.mxu0 %v60
    %87 = vmatpush1.msra.mxu0 %v59
    %88 = vmatprep.subr.mxu0 %v62
    %89 = vmatpush1.msra.mxu0 %v61
    %90 = vmatprep.subr.mxu0 %v64
    %91 = vmatpush1.msra.mxu0 %v63
    %92 = vmatprep.subr.mxu0 %v66
    %93 = vmatpush1.msra.mxu0 %v65
    %94 = vmatprep.subr.mxu0 0.0
    %95 = vmatpush1.msra.mxu0 0.0
    %96 = vmatprep.subr.mxu0 0.0
    %97 = vmatpush1.msra.mxu0 0.0
    %98 = vmatprep.subr.mxu0 0.0
    %99 = vmatpush1.msra.mxu0 0.0
    %100 = vmatprep.subr.mxu0 0.0
    %101 = vmatpush1.msra.mxu0 0.0
    %102 = vmatprep.subr.mxu0 0.0
    %103 = vmatpush1.msra.mxu0 0.0
    %104 = vmatprep.subr.mxu0 0.0
    %105 = vmatpush1.msra.mxu0 0.0
    %106 = vmatprep.subr.mxu0 0.0
    %107 = vmatpush1.msra.mxu0 0.0
    %108 = vmatprep.subr.mxu0 0.0
    %109 = vmatpush1.msra.mxu0 0.0
    %110 = vmatprep.subr.mxu0 0.0
    %111 = vmatpush1.msra.mxu0 0.0
    %112 = vmatprep.subr.mxu0 0.0
    %113 = vmatpush1.msra.mxu0 0.0
    %114 = vmatprep.subr.mxu0 0.0
    %115 = vmatpush1.msra.mxu0 0.0
    %116 = vmatprep.subr.mxu0 0.0
    %117 = vmatpush1.msra.mxu0 0.0
    %118 = vmatprep.subr.mxu0 0.0
    %119 = vmatpush1.msra.mxu0 0.0
    %120 = vmatprep.subr.mxu0 0.0
    %121 = vmatpush1.msra.mxu0 0.0
    %122 = vmatprep.subr.mxu0 0.0
    %123 = vmatpush1.msra.mxu0 0.0
    %124 = vmatprep.subr.mxu0 0.0
    %125 = vmatpush1.msra.mxu0 0.0
    %126 = vmatprep.subr.mxu0 0.0
    %127 = vmatpush1.msra.mxu0 0.0
    %128 = vmatprep.subr.mxu0 0.0
    %129 = vmatpush1.msra.mxu0 0.0
    %130 = vmatprep.subr.mxu0 0.0
    %131 = vmatpush1.msra.mxu0 0.0
    %132 = vmatprep.subr.mxu0 0.0
    %133 = vmatpush1.msra.mxu0 0.0
    %134 = vmatprep.subr.mxu0 0.0
    %135 = vmatpush1.msra.mxu0 0.0
    %136 = vmatprep.subr.mxu0 0.0
    %137 = vmatpush1.msra.mxu0 0.0
    %138 = vmatprep.subr.mxu0 0.0
    %139 = vmatpush1.msra.mxu0 0.0
    %140 = vmatprep.subr.mxu0 0.0
    %141 = vmatpush1.msra.mxu0 0.0
    %142 = vmatprep.subr.mxu0 0.0
    %143 = vmatpush1.msra.mxu0 0.0
    %144 = vmatprep.subr.mxu0 0.0
    %145 = vmatpush1.msra.mxu0 0.0
    %146 = vmatprep.subr.mxu0 0.0
    %147 = vmatpush1.msra.mxu0 0.0
    %148 = vmatprep.subr.mxu0 0.0
    %149 = vmatpush1.msra.mxu0 0.0
    %150 = vmatprep.mubr.f32.mxu0 0.0
    %151 = vmatmul.mubr.f32.gmra.mrb[0].mxu0 %v81
    %v152 = vpop.f32.mrb[0].mxu0
    %v153 = vadd.f32 %v72, %v152
    %v154 = vpop.f32.mrb[0].mxu0
    %v155 = vadd.f32 %v76, %v154
    %156 = vmatprep.mubr.f32.mxu0 0.0
    %157 = vmatmul.mubr.f32.gmra.mrb[0].mxu0 %v84
    %v158 = vpop.f32.mrb[0].mxu0
    %v159 = vadd.f32 %v72, %v158
    %v160 = vpop.f32.mrb[0].mxu0
    %v161 = vadd.f32 %v76, %v160
    %162 = vdwg.mxu0
    %v163 = vld [vmem:[#allocation2] sm:$0xff]
    %v164 = vld [vmem:[#allocation2 + $0x8] sm:$0xff]
    %v165 = vld [vmem:[#allocation2 + $0x10] sm:$0xff]
    %v166 = vld [vmem:[#allocation2 + $0x18] sm:$0xff]
    %v167 = vld [vmem:[#allocation4] sm:$0xff]
    %v168 = vld [vmem:[#allocation4 + $0x8] sm:$0xff]
    %v169 = vld [vmem:[#allocation4 + $0x10] sm:$0xff]
    %v170 = vld [vmem:[#allocation4 + $0x18] sm:$0xff]
    %v171 = vld [vmem:[%s5] sm:$0x1]
    %v172 = vld [vmem:[%s6] sm:$0x1]
    %v174 = vlaneseq
    %v175 = vshrl.u32 %v174, 7
    %v176 = vsub.s32 0, %v175
    %v177 = vrot.slane %v171, %v176
    %v180 = vsel %vm79, 0.0, 0
    %182 = vmatprep.subr.mxu0 0.0
    %183 = vmatpush1.msra.mxu0 %v163
    %184 = vmatprep.subr.mxu0 0.0
    %185 = vmatpush1.msra.mxu0 %v164
    %186 = vmatprep.subr.mxu0 0.0
    %187 = vmatpush1.msra.mxu0 %v165
    %188 = vmatprep.subr.mxu0 0.0
    %189 = vmatpush1.msra.mxu0 %v166
    %190 = vmatprep.subr.mxu0 0.0
    %191 = vmatpush1.msra.mxu0 0.0
    %192 = vmatprep.subr.mxu0 0.0
    %193 = vmatpush1.msra.mxu0 0.0
    %194 = vmatprep.subr.mxu0 0.0
    %195 = vmatpush1.msra.mxu0 0.0
    %196 = vmatprep.subr.mxu0 0.0
    %197 = vmatpush1.msra.mxu0 0.0
    %198 = vmatprep.subr.mxu0 0.0
    %199 = vmatpush1.msra.mxu0 0.0
    %200 = vmatprep.subr.mxu0 0.0
    %201 = vmatpush1.msra.mxu0 0.0
    %202 = vmatprep.subr.mxu0 0.0
    %203 = vmatpush1.msra.mxu0 0.0
    %204 = vmatprep.subr.mxu0 0.0
    %205 = vmatpush1.msra.mxu0 0.0
    %206 = vmatprep.subr.mxu0 0.0
    %207 = vmatpush1.msra.mxu0 0.0
    %208 = vmatprep.subr.mxu0 0.0
    %209 = vmatpush1.msra.mxu0 0.0
    %210 = vmatprep.subr.mxu0 0.0
    %211 = vmatpush1.msra.mxu0 0.0
    %212 = vmatprep.subr.mxu0 0.0
    %213 = vmatpush1.msra.mxu0 0.0
    %214 = vmatprep.subr.mxu0 0.0
    %215 = vmatpush1.msra.mxu0 0.0
    %216 = vmatprep.subr.mxu0 0.0
    %217 = vmatpush1.msra.mxu0 0.0
    %218 = vmatprep.subr.mxu0 0.0
    %219 = vmatpush1.msra.mxu0 0.0
    %220 = vmatprep.subr.mxu0 0.0
    %221 = vmatpush1.msra.mxu0 0.0
    %222 = vmatprep.subr.mxu0 0.0
    %223 = vmatpush1.msra.mxu0 0.0
    %224 = vmatprep.subr.mxu0 0.0
    %225 = vmatpush1.msra.mxu0 0.0
    %226 = vmatprep.subr.mxu0 0.0
    %227 = vmatpush1.msra.mxu0 0.0
    %228 = vmatprep.subr.mxu0 0.0
    %229 = vmatpush1.msra.mxu0 0.0
    %230 = vmatprep.subr.mxu0 0.0
    %231 = vmatpush1.msra.mxu0 0.0
    %232 = vmatprep.subr.mxu0 0.0
    %233 = vmatpush1.msra.mxu0 0.0
    %234 = vmatprep.subr.mxu0 0.0
    %235 = vmatpush1.msra.mxu0 0.0
    %236 = vmatprep.subr.mxu0 0.0
    %237 = vmatpush1.msra.mxu0 0.0
    %238 = vmatprep.subr.mxu0 0.0
    %239 = vmatpush1.msra.mxu0 0.0
    %240 = vmatprep.subr.mxu0 0.0
    %241 = vmatpush1.msra.mxu0 0.0
    %242 = vmatprep.subr.mxu0 0.0
    %243 = vmatpush1.msra.mxu0 0.0
    %244 = vmatprep.subr.mxu0 0.0
    %245 = vmatpush1.msra.mxu0 0.0
    %246 = vmatprep.mubr.f32.mxu0 0.0
    %247 = vmatmul.mubr.f32.gmra.mrb[0].mxu0 %v180
    %v248 = vpop.f32.mrb[0].mxu0
    %v249 = vadd.f32 %v177, %v248
    %v250 = vpop.f32.mrb[0].mxu0
    %251 = vdwg.mxu0
    %v252 = vadd.f32 %v153, %v249
    %v253 = vxor.u32 %v252, 2147483648
    %v254 = vmul.f32 %v253, 1.442695
    %v255 = vpow.pop %v254
    %v256 = vadd.f32 %v255, 1.0
    %v257 = vrcp.pop %v256
    %v258 = vmul.f32 1.0, %v257
    %260 = vrot.lane.b32.xlu0 %v249, 64
    %v261 = vpop.permute.xlu0 %260
    %v263 = vmul.f32 %v258, %v261
    %265 = vrot.lane.b32.xlu0 %v263, 64
    %v266 = vpop.permute.xlu0 %265
    %v268 = vadd.f32 %v153, %v266
    %v269 = vtanh.pop %v268
    %v270 = vsub.f32 1.0, %v258
    %272 = vrot.lane.b32.xlu0 %v269, 96
    %v273 = vpop.permute.xlu0 %272
    %v275 = vmul.f32 %v270, %v273
    %v276 = vmul.f32 %v258, 0.0
    %v277 = vadd.f32 %v275, %v276
    %v279 = vlaneseq
    %v280 = vshrl.u32 %v279, 7
    %v281 = vsub.s32 0, %v280
    %v282 = vrot.slane %v172, %v281
    %284 = vmatprep.subr.mxu0 0.0
    %285 = vmatpush1.msra.mxu0 %v167
    %286 = vmatprep.subr.mxu0 0.0
    %287 = vmatpush1.msra.mxu0 %v168
    %288 = vmatprep.subr.mxu0 0.0
    %289 = vmatpush1.msra.mxu0 %v169
    %290 = vmatprep.subr.mxu0 0.0
    %291 = vmatpush1.msra.mxu0 %v170
    %292 = vmatprep.subr.mxu0 0.0
    %293 = vmatpush1.msra.mxu0 0.0
    %294 = vmatprep.subr.mxu0 0.0
    %295 = vmatpush1.msra.mxu0 0.0
    %296 = vmatprep.subr.mxu0 0.0
    %297 = vmatpush1.msra.mxu0 0.0
    %298 = vmatprep.subr.mxu0 0.0
    %299 = vmatpush1.msra.mxu0 0.0
    %300 = vmatprep.subr.mxu0 0.0
    %301 = vmatpush1.msra.mxu0 0.0
    %302 = vmatprep.subr.mxu0 0.0
    %303 = vmatpush1.msra.mxu0 0.0
    %304 = vmatprep.subr.mxu0 0.0
    %305 = vmatpush1.msra.mxu0 0.0
    %306 = vmatprep.subr.mxu0 0.0
    %307 = vmatpush1.msra.mxu0 0.0
    %308 = vmatprep.subr.mxu0 0.0
    %309 = vmatpush1.msra.mxu0 0.0
    %310 = vmatprep.subr.mxu0 0.0
    %311 = vmatpush1.msra.mxu0 0.0
    %312 = vmatprep.subr.mxu0 0.0
    %313 = vmatpush1.msra.mxu0 0.0
    %314 = vmatprep.subr.mxu0 0.0
    %315 = vmatpush1.msra.mxu0 0.0
    %316 = vmatprep.subr.mxu0 0.0
    %317 = vmatpush1.msra.mxu0 0.0
    %318 = vmatprep.subr.mxu0 0.0
    %319 = vmatpush1.msra.mxu0 0.0
    %320 = vmatprep.subr.mxu0 0.0
    %321 = vmatpush1.msra.mxu0 0.0
    %322 = vmatprep.subr.mxu0 0.0
    %323 = vmatpush1.msra.mxu0 0.0
    %324 = vmatprep.subr.mxu0 0.0
    %325 = vmatpush1.msra.mxu0 0.0
    %326 = vmatprep.subr.mxu0 0.0
    %327 = vmatpush1.msra.mxu0 0.0
    %328 = vmatprep.subr.mxu0 0.0
    %329 = vmatpush1.msra.mxu0 0.0
    %330 = vmatprep.subr.mxu0 0.0
    %331 = vmatpush1.msra.mxu0 0.0
    %332 = vmatprep.subr.mxu0 0.0
    %333 = vmatpush1.msra.mxu0 0.0
    %334 = vmatprep.subr.mxu0 0.0
    %335 = vmatpush1.msra.mxu0 0.0
    %336 = vmatprep.subr.mxu0 0.0
    %337 = vmatpush1.msra.mxu0 0.0
    %338 = vmatprep.subr.mxu0 0.0
    %339 = vmatpush1.msra.mxu0 0.0
    %340 = vmatprep.subr.mxu0 0.0
    %341 = vmatpush1.msra.mxu0 0.0
    %342 = vmatprep.subr.mxu0 0.0
    %343 = vmatpush1.msra.mxu0 0.0
    %344 = vmatprep.subr.mxu0 0.0
    %345 = vmatpush1.msra.mxu0 0.0
    %346 = vmatprep.subr.mxu0 0.0
    %347 = vmatpush1.msra.mxu0 0.0
    %348 = vmatprep.mubr.f32.mxu0 0.0
    %349 = vmatmul.mubr.f32.gmra.mrb[0].mxu0 %v180
    %v350 = vpop.f32.mrb[0].mxu0
    %v351 = vadd.f32 %v282, %v350
    %v352 = vpop.f32.mrb[0].mxu0
    %353 = vdwg.mxu0
    %v355 = vrot.slane %v351, 2
    %356 = vrot.lane.b32.xlu0 %v355, 96
    %v357 = vpop.permute.xlu0 %356
    %v359 = vadd.f32 %v159, %v357
    %v360 = vxor.u32 %v359, 2147483648
    %v361 = vmul.f32 %v360, 1.442695
    %v362 = vpow.pop %v361
    %v363 = vadd.f32 %v362, 1.0
    %v364 = vrcp.pop %v363
    %v365 = vmul.f32 1.0, %v364
    %v366 = vadd.f32 %v161, %v357
    %v367 = vxor.u32 %v366, 2147483648
    %v368 = vmul.f32 %v367, 1.442695
    %v369 = vpow.pop %v368
    %v370 = vadd.f32 %v369, 1.0
    %v371 = vrcp.pop %v370
    %v372 = vmul.f32 1.0, %v371
    %373 = vrot.lane.b32.xlu0 %v355, 32
    %v374 = vpop.permute.xlu0 %373
    %v376 = vmul.f32 %v365, %v374
    %378 = vrot.lane.b32.xlu0 %v376, 64
    %v379 = vpop.permute.xlu0 %378
    %v381 = vadd.f32 %v161, %v379
    %v382 = vtanh.pop %v381
    %v383 = vsub.f32 1.0, %v372
    %385 = vrot.lane.b32.xlu0 %v382, 96
    %v386 = vpop.permute.xlu0 %385
    %v388 = vmul.f32 %v383, %v386
    %v389 = vmul.f32 %v372, 0.0
    %v390 = vadd.f32 %v388, %v389
    %392 = vrot.lane.b32.xlu0 %v277, 96
    %v393 = vpop.permute.xlu0 %392
    %vm395 = vcmask 254976
    %396 = vst.msk [vmem:[%s7] sm:$0x3] %vm395, %v393
    %s397 = scalar_lea.vmem %s8, 14
    %vm398 = vcmask 261126
    %399 = vst.msk [vmem:[%s397 - $0x6] sm:$0xc0] %vm398, %v390
    %v400 = vsel %vm79, %v393, 0
    %402 = vmatprep.subr.mxu0 0.0
    %403 = vmatpush1.msra.mxu0 %v163
    %404 = vmatprep.subr.mxu0 0.0
    %405 = vmatpush1.msra.mxu0 %v164
    %406 = vmatprep.subr.mxu0 0.0
    %407 = vmatpush1.msra.mxu0 %v165
    %408 = vmatprep.subr.mxu0 0.0
    %409 = vmatpush1.msra.mxu0 %v166
    %410 = vmatprep.subr.mxu0 0.0
    %411 = vmatpush1.msra.mxu0 0.0
    %412 = vmatprep.subr.mxu0 0.0
    %413 = vmatpush1.msra.mxu0 0.0
    %414 = vmatprep.subr.mxu0 0.0
    %415 = vmatpush1.msra.mxu0 0.0
    %416 = vmatprep.subr.mxu0 0.0
    %417 = vmatpush1.msra.mxu0 0.0
    %418 = vmatprep.subr.mxu0 0.0
    %419 = vmatpush1.msra.mxu0 0.0
    %420 = vmatprep.subr.mxu0 0.0
    %421 = vmatpush1.msra.mxu0 0.0
    %422 = vmatprep.subr.mxu0 0.0
    %423 = vmatpush1.msra.mxu0 0.0
    %424 = vmatprep.subr.mxu0 0.0
    %425 = vmatpush1.msra.mxu0 0.0
    %426 = vmatprep.subr.mxu0 0.0
    %427 = vmatpush1.msra.mxu0 0.0
    %428 = vmatprep.subr.mxu0 0.0
    %429 = vmatpush1.msra.mxu0 0.0
    %430 = vmatprep.subr.mxu0 0.0
    %431 = vmatpush1.msra.mxu0 0.0
    %432 = vmatprep.subr.mxu0 0.0
    %433 = vmatpush1.msra.mxu0 0.0
    %434 = vmatprep.subr.mxu0 0.0
    %435 = vmatpush1.msra.mxu0 0.0
    %436 = vmatprep.subr.mxu0 0.0
    %437 = vmatpush1.msra.mxu0 0.0
    %438 = vmatprep.subr.mxu0 0.0
    %439 = vmatpush1.msra.mxu0 0.0
    %440 = vmatprep.subr.mxu0 0.0
    %441 = vmatpush1.msra.mxu0 0.0
    %442 = vmatprep.subr.mxu0 0.0
    %443 = vmatpush1.msra.mxu0 0.0
    %444 = vmatprep.subr.mxu0 0.0
    %445 = vmatpush1.msra.mxu0 0.0
    %446 = vmatprep.subr.mxu0 0.0
    %447 = vmatpush1.msra.mxu0 0.0
    %448 = vmatprep.subr.mxu0 0.0
    %449 = vmatpush1.msra.mxu0 0.0
    %450 = vmatprep.subr.mxu0 0.0
    %451 = vmatpush1.msra.mxu0 0.0
    %452 = vmatprep.subr.mxu0 0.0
    %453 = vmatpush1.msra.mxu0 0.0
    %454 = vmatprep.subr.mxu0 0.0
    %455 = vmatpush1.msra.mxu0 0.0
    %456 = vmatprep.subr.mxu0 0.0
    %457 = vmatpush1.msra.mxu0 0.0
    %458 = vmatprep.subr.mxu0 0.0
    %459 = vmatpush1.msra.mxu0 0.0
    %460 = vmatprep.subr.mxu0 0.0
    %461 = vmatpush1.msra.mxu0 0.0
    %462 = vmatprep.subr.mxu0 0.0
    %463 = vmatpush1.msra.mxu0 0.0
    %464 = vmatprep.subr.mxu0 0.0
    %465 = vmatpush1.msra.mxu0 0.0
    %466 = vmatprep.mubr.f32.mxu0 0.0
    %467 = vmatmul.mubr.f32.gmra.mrb[0].mxu0 %v400
    %v468 = vpop.f32.mrb[0].mxu0
    %v469 = vadd.f32 %v177, %v468
    %v470 = vpop.f32.mrb[0].mxu0
    %471 = vdwg.mxu0
    %v473 = vrot.slane %v469, 6
    %v475 = vadd.f32 %v153, %v473
    %v476 = vxor.u32 %v475, 2147483648
    %v477 = vmul.f32 %v476, 1.442695
    %v478 = vpow.pop %v477
    %v479 = vadd.f32 %v478, 1.0
    %v480 = vrcp.pop %v479
    %v481 = vmul.f32 1.0, %v480
    %482 = vrot.lane.b32.xlu0 %v473, 64
    %v483 = vpop.permute.xlu0 %482
    %v485 = vmul.f32 %v481, %v483
    %487 = vrot.lane.b32.xlu0 %v485, 64
    %v488 = vpop.permute.xlu0 %487
    %v490 = vadd.f32 %v153, %v488
    %v491 = vtanh.pop %v490
    %v492 = vsub.f32 1.0, %v481
    %494 = vrot.lane.b32.xlu0 %v491, 96
    %v495 = vpop.permute.xlu0 %494
    %v497 = vmul.f32 %v492, %v495
    %v498 = vrot.slane %v277, 6
    %v500 = vmul.f32 %v481, %v498
    %v501 = vadd.f32 %v497, %v500
    %v503 = vrot.slane %v390, 6
    %v504 = vsel %vm79, %v503, 0
    %506 = vmatprep.subr.mxu0 0.0
    %507 = vmatpush1.msra.mxu0 %v167
    %508 = vmatprep.subr.mxu0 0.0
    %509 = vmatpush1.msra.mxu0 %v168
    %510 = vmatprep.subr.mxu0 0.0
    %511 = vmatpush1.msra.mxu0 %v169
    %512 = vmatprep.subr.mxu0 0.0
    %513 = vmatpush1.msra.mxu0 %v170
    %514 = vmatprep.subr.mxu0 0.0
    %515 = vmatpush1.msra.mxu0 0.0
    %516 = vmatprep.subr.mxu0 0.0
    %517 = vmatpush1.msra.mxu0 0.0
    %518 = vmatprep.subr.mxu0 0.0
    %519 = vmatpush1.msra.mxu0 0.0
    %520 = vmatprep.subr.mxu0 0.0
    %521 = vmatpush1.msra.mxu0 0.0
    %522 = vmatprep.subr.mxu0 0.0
    %523 = vmatpush1.msra.mxu0 0.0
    %524 = vmatprep.subr.mxu0 0.0
    %525 = vmatpush1.msra.mxu0 0.0
    %526 = vmatprep.subr.mxu0 0.0
    %527 = vmatpush1.msra.mxu0 0.0
    %528 = vmatprep.subr.mxu0 0.0
    %529 = vmatpush1.msra.mxu0 0.0
    %530 = vmatprep.subr.mxu0 0.0
    %531 = vmatpush1.msra.mxu0 0.0
    %532 = vmatprep.subr.mxu0 0.0
    %533 = vmatpush1.msra.mxu0 0.0
    %534 = vmatprep.subr.mxu0 0.0
    %535 = vmatpush1.msra.mxu0 0.0
    %536 = vmatprep.subr.mxu0 0.0
    %537 = vmatpush1.msra.mxu0 0.0
    %538 = vmatprep.subr.mxu0 0.0
    %539 = vmatpush1.msra.mxu0 0.0
    %540 = vmatprep.subr.mxu0 0.0
    %541 = vmatpush1.msra.mxu0 0.0
    %542 = vmatprep.subr.mxu0 0.0
    %543 = vmatpush1.msra.mxu0 0.0
    %544 = vmatprep.subr.mxu0 0.0
    %545 = vmatpush1.msra.mxu0 0.0
    %546 = vmatprep.subr.mxu0 0.0
    %547 = vmatpush1.msra.mxu0 0.0
    %548 = vmatprep.subr.mxu0 0.0
    %549 = vmatpush1.msra.mxu0 0.0
    %550 = vmatprep.subr.mxu0 0.0
    %551 = vmatpush1.msra.mxu0 0.0
    %552 = vmatprep.subr.mxu0 0.0
    %553 = vmatpush1.msra.mxu0 0.0
    %554 = vmatprep.subr.mxu0 0.0
    %555 = vmatpush1.msra.mxu0 0.0
    %556 = vmatprep.subr.mxu0 0.0
    %557 = vmatpush1.msra.mxu0 0.0
    %558 = vmatprep.subr.mxu0 0.0
    %559 = vmatpush1.msra.mxu0 0.0
    %560 = vmatprep.subr.mxu0 0.0
    %561 = vmatpush1.msra.mxu0 0.0
    %562 = vmatprep.subr.mxu0 0.0
    %563 = vmatpush1.msra.mxu0 0.0
    %564 = vmatprep.subr.mxu0 0.0
    %565 = vmatpush1.msra.mxu0 0.0
    %566 = vmatprep.subr.mxu0 0.0
    %567 = vmatpush1.msra.mxu0 0.0
    %568 = vmatprep.subr.mxu0 0.0
    %569 = vmatpush1.msra.mxu0 0.0
    %570 = vmatprep.mubr.f32.mxu0 0.0
    %571 = vmatmul.mubr.f32.gmra.mrb[0].mxu0 %v504
    %v572 = vpop.f32.mrb[0].mxu0
    %v573 = vadd.f32 %v282, %v572
    %v574 = vpop.f32.mrb[0].mxu0
    %575 = vdwg.mxu0
    %v577 = vrot.slane %v573, 4
    %578 = vrot.lane.b32.xlu0 %v577, 96
    %v579 = vpop.permute.xlu0 %578
    %v581 = vadd.f32 %v159, %v579
    %v582 = vxor.u32 %v581, 2147483648
    %v583 = vmul.f32 %v582, 1.442695
    %v584 = vpow.pop %v583
    %v585 = vadd.f32 %v584, 1.0
    %v586 = vrcp.pop %v585
    %v587 = vmul.f32 1.0, %v586
    %v588 = vadd.f32 %v161, %v579
    %v589 = vxor.u32 %v588, 2147483648
    %v590 = vmul.f32 %v589, 1.442695
    %v591 = vpow.pop %v590
    %v592 = vadd.f32 %v591, 1.0
    %v593 = vrcp.pop %v592
    %v594 = vmul.f32 1.0, %v593
    %595 = vrot.lane.b32.xlu0 %v577, 32
    %v596 = vpop.permute.xlu0 %595
    %v598 = vmul.f32 %v587, %v596
    %600 = vrot.lane.b32.xlu0 %v598, 64
    %v601 = vpop.permute.xlu0 %600
    %v603 = vadd.f32 %v161, %v601
    %v604 = vtanh.pop %v603
    %v605 = vsub.f32 1.0, %v594
    %607 = vrot.lane.b32.xlu0 %v604, 96
    %v608 = vpop.permute.xlu0 %607
    %v610 = vmul.f32 %v605, %v608
    %v611 = vrot.slane %v390, 2
    %v613 = vmul.f32 %v594, %v611
    %v614 = vadd.f32 %v610, %v613
    %616 = vrot.lane.b32.xlu0 %v501, 96
    %v617 = vpop.permute.xlu0 %616
    %s619 = scalar_lea.vmem %s7, 2
    %vm620 = vcmask 257026
    %621 = vst.msk [vmem:[%s619 - $0x2] sm:$0xc] %vm620, %v617
    %s622 = scalar_lea.vmem %s8, 12
    %vm623 = vcmask 259076
    %624 = vst.msk [vmem:[%s622 - $0x4] sm:$0x30] %vm623, %v614
    %v625 = vrot.slane %v501, 2
    %626 = vrot.lane.b32.xlu0 %v625, 96
    %v627 = vpop.permute.xlu0 %626
    %v628 = vsel %vm79, %v627, 0
    %630 = vmatprep.subr.mxu0 0.0
    %631 = vmatpush1.msra.mxu0 %v163
    %632 = vmatprep.subr.mxu0 0.0
    %633 = vmatpush1.msra.mxu0 %v164
    %634 = vmatprep.subr.mxu0 0.0
    %635 = vmatpush1.msra.mxu0 %v165
    %636 = vmatprep.subr.mxu0 0.0
    %637 = vmatpush1.msra.mxu0 %v166
    %638 = vmatprep.subr.mxu0 0.0
    %639 = vmatpush1.msra.mxu0 0.0
    %640 = vmatprep.subr.mxu0 0.0
    %641 = vmatpush1.msra.mxu0 0.0
    %642 = vmatprep.subr.mxu0 0.0
    %643 = vmatpush1.msra.mxu0 0.0
    %644 = vmatprep.subr.mxu0 0.0
    %645 = vmatpush1.msra.mxu0 0.0
    %646 = vmatprep.subr.mxu0 0.0
    %647 = vmatpush1.msra.mxu0 0.0
    %648 = vmatprep.subr.mxu0 0.0
    %649 = vmatpush1.msra.mxu0 0.0
    %650 = vmatprep.subr.mxu0 0.0
    %651 = vmatpush1.msra.mxu0 0.0
    %652 = vmatprep.subr.mxu0 0.0
    %653 = vmatpush1.msra.mxu0 0.0
    %654 = vmatprep.subr.mxu0 0.0
    %655 = vmatpush1.msra.mxu0 0.0
    %656 = vmatprep.subr.mxu0 0.0
    %657 = vmatpush1.msra.mxu0 0.0
    %658 = vmatprep.subr.mxu0 0.0
    %659 = vmatpush1.msra.mxu0 0.0
    %660 = vmatprep.subr.mxu0 0.0
    %661 = vmatpush1.msra.mxu0 0.0
    %662 = vmatprep.subr.mxu0 0.0
    %663 = vmatpush1.msra.mxu0 0.0
    %664 = vmatprep.subr.mxu0 0.0
    %665 = vmatpush1.msra.mxu0 0.0
    %666 = vmatprep.subr.mxu0 0.0
    %667 = vmatpush1.msra.mxu0 0.0
    %668 = vmatprep.subr.mxu0 0.0
    %669 = vmatpush1.msra.mxu0 0.0
    %670 = vmatprep.subr.mxu0 0.0
    %671 = vmatpush1.msra.mxu0 0.0
    %672 = vmatprep.subr.mxu0 0.0
    %673 = vmatpush1.msra.mxu0 0.0
    %674 = vmatprep.subr.mxu0 0.0
    %675 = vmatpush1.msra.mxu0 0.0
    %676 = vmatprep.subr.mxu0 0.0
    %677 = vmatpush1.msra.mxu0 0.0
    %678 = vmatprep.subr.mxu0 0.0
    %679 = vmatpush1.msra.mxu0 0.0
    %680 = vmatprep.subr.mxu0 0.0
    %681 = vmatpush1.msra.mxu0 0.0
    %682 = vmatprep.subr.mxu0 0.0
    %683 = vmatpush1.msra.mxu0 0.0
    %684 = vmatprep.subr.mxu0 0.0
    %685 = vmatpush1.msra.mxu0 0.0
    %686 = vmatprep.subr.mxu0 0.0
    %687 = vmatpush1.msra.mxu0 0.0
    %688 = vmatprep.subr.mxu0 0.0
    %689 = vmatpush1.msra.mxu0 0.0
    %690 = vmatprep.subr.mxu0 0.0
    %691 = vmatpush1.msra.mxu0 0.0
    %692 = vmatprep.subr.mxu0 0.0
    %693 = vmatpush1.msra.mxu0 0.0
    %694 = vmatprep.mubr.f32.mxu0 0.0
    %695 = vmatmul.mubr.f32.gmra.mrb[0].mxu0 %v628
    %v696 = vpop.f32.mrb[0].mxu0
    %v697 = vadd.f32 %v177, %v696
    %v698 = vpop.f32.mrb[0].mxu0
    %699 = vdwg.mxu0
    %v701 = vrot.slane %v697, 4
    %v703 = vadd.f32 %v153, %v701
    %v704 = vxor.u32 %v703, 2147483648
    %v705 = vmul.f32 %v704, 1.442695
    %v706 = vpow.pop %v705
    %v707 = vadd.f32 %v706, 1.0
    %v708 = vrcp.pop %v707
    %v709 = vmul.f32 1.0, %v708
    %710 = vrot.lane.b32.xlu0 %v701, 64
    %v711 = vpop.permute.xlu0 %710
    %v713 = vmul.f32 %v709, %v711
    %715 = vrot.lane.b32.xlu0 %v713, 64
    %v716 = vpop.permute.xlu0 %715
    %v718 = vadd.f32 %v153, %v716
    %v719 = vtanh.pop %v718
    %v720 = vsub.f32 1.0, %v709
    %722 = vrot.lane.b32.xlu0 %v719, 96
    %v723 = vpop.permute.xlu0 %722
    %v725 = vmul.f32 %v720, %v723
    %v726 = vrot.slane %v501, 6
    %v728 = vmul.f32 %v709, %v726
    %v729 = vadd.f32 %v725, %v728
    %v731 = vrot.slane %v614, 4
    %v732 = vsel %vm79, %v731, 0
    %734 = vmatprep.subr.mxu0 0.0
    %735 = vmatpush1.msra.mxu0 %v167
    %736 = vmatprep.subr.mxu0 0.0
    %737 = vmatpush1.msra.mxu0 %v168
    %738 = vmatprep.subr.mxu0 0.0
    %739 = vmatpush1.msra.mxu0 %v169
    %740 = vmatprep.subr.mxu0 0.0
    %741 = vmatpush1.msra.mxu0 %v170
    %742 = vmatprep.subr.mxu0 0.0
    %743 = vmatpush1.msra.mxu0 0.0
    %744 = vmatprep.subr.mxu0 0.0
    %745 = vmatpush1.msra.mxu0 0.0
    %746 = vmatprep.subr.mxu0 0.0
    %747 = vmatpush1.msra.mxu0 0.0
    %748 = vmatprep.subr.mxu0 0.0
    %749 = vmatpush1.msra.mxu0 0.0
    %750 = vmatprep.subr.mxu0 0.0
    %751 = vmatpush1.msra.mxu0 0.0
    %752 = vmatprep.subr.mxu0 0.0
    %753 = vmatpush1.msra.mxu0 0.0
    %754 = vmatprep.subr.mxu0 0.0
    %755 = vmatpush1.msra.mxu0 0.0
    %756 = vmatprep.subr.mxu0 0.0
    %757 = vmatpush1.msra.mxu0 0.0
    %758 = vmatprep.subr.mxu0 0.0
    %759 = vmatpush1.msra.mxu0 0.0
    %760 = vmatprep.subr.mxu0 0.0
    %761 = vmatpush1.msra.mxu0 0.0
    %762 = vmatprep.subr.mxu0 0.0
    %763 = vmatpush1.msra.mxu0 0.0
    %764 = vmatprep.subr.mxu0 0.0
    %765 = vmatpush1.msra.mxu0 0.0
    %766 = vmatprep.subr.mxu0 0.0
    %767 = vmatpush1.msra.mxu0 0.0
    %768 = vmatprep.subr.mxu0 0.0
    %769 = vmatpush1.msra.mxu0 0.0
    %770 = vmatprep.subr.mxu0 0.0
    %771 = vmatpush1.msra.mxu0 0.0
    %772 = vmatprep.subr.mxu0 0.0
    %773 = vmatpush1.msra.mxu0 0.0
    %774 = vmatprep.subr.mxu0 0.0
    %775 = vmatpush1.msra.mxu0 0.0
    %776 = vmatprep.subr.mxu0 0.0
    %777 = vmatpush1.msra.mxu0 0.0
    %778 = vmatprep.subr.mxu0 0.0
    %779 = vmatpush1.msra.mxu0 0.0
    %780 = vmatprep.subr.mxu0 0.0
    %781 = vmatpush1.msra.mxu0 0.0
    %782 = vmatprep.subr.mxu0 0.0
    %783 = vmatpush1.msra.mxu0 0.0
    %784 = vmatprep.subr.mxu0 0.0
    %785 = vmatpush1.msra.mxu0 0.0
    %786 = vmatprep.subr.mxu0 0.0
    %787 = vmatpush1.msra.mxu0 0.0
    %788 = vmatprep.subr.mxu0 0.0
    %789 = vmatpush1.msra.mxu0 0.0
    %790 = vmatprep.subr.mxu0 0.0
    %791 = vmatpush1.msra.mxu0 0.0
    %792 = vmatprep.subr.mxu0 0.0
    %793 = vmatpush1.msra.mxu0 0.0
    %794 = vmatprep.subr.mxu0 0.0
    %795 = vmatpush1.msra.mxu0 0.0
    %796 = vmatprep.subr.mxu0 0.0
    %797 = vmatpush1.msra.mxu0 0.0
    %798 = vmatprep.mubr.f32.mxu0 0.0
    %799 = vmatmul.mubr.f32.gmra.mrb[0].mxu0 %v732
    %v800 = vpop.f32.mrb[0].mxu0
    %v801 = vadd.f32 %v282, %v800
    %v802 = vpop.f32.mrb[0].mxu0
    %803 = vdwg.mxu0
    %v805 = vrot.slane %v801, 6
    %806 = vrot.lane.b32.xlu0 %v805, 96
    %v807 = vpop.permute.xlu0 %806
    %v809 = vadd.f32 %v159, %v807
    %v810 = vxor.u32 %v809, 2147483648
    %v811 = vmul.f32 %v810, 1.442695
    %v812 = vpow.pop %v811
    %v813 = vadd.f32 %v812, 1.0
    %v814 = vrcp.pop %v813
    %v815 = vmul.f32 1.0, %v814
    %v816 = vadd.f32 %v161, %v807
    %v817 = vxor.u32 %v816, 2147483648
    %v818 = vmul.f32 %v817, 1.442695
    %v819 = vpow.pop %v818
    %v820 = vadd.f32 %v819, 1.0
    %v821 = vrcp.pop %v820
    %v822 = vmul.f32 1.0, %v821
    %823 = vrot.lane.b32.xlu0 %v805, 32
    %v824 = vpop.permute.xlu0 %823
    %v826 = vmul.f32 %v815, %v824
    %828 = vrot.lane.b32.xlu0 %v826, 64
    %v829 = vpop.permute.xlu0 %828
    %v831 = vadd.f32 %v161, %v829
    %v832 = vtanh.pop %v831
    %v833 = vsub.f32 1.0, %v822
    %835 = vrot.lane.b32.xlu0 %v832, 96
    %v836 = vpop.permute.xlu0 %835
    %v838 = vmul.f32 %v833, %v836
    %v839 = vrot.slane %v614, 2
    %v841 = vmul.f32 %v822, %v839
    %v842 = vadd.f32 %v838, %v841
    %844 = vrot.lane.b32.xlu0 %v729, 96
    %v845 = vpop.permute.xlu0 %844
    %s847 = scalar_lea.vmem %s7, 4
    %848 = vst.msk [vmem:[%s847 - $0x4] sm:$0x30] %vm623, %v845
    %s849 = scalar_lea.vmem %s8, 10
    %850 = vst.msk [vmem:[%s849 - $0x2] sm:$0xc] %vm620, %v842
    %v851 = vrot.slane %v729, 4
    %852 = vrot.lane.b32.xlu0 %v851, 96
    %v853 = vpop.permute.xlu0 %852
    %v854 = vsel %vm79, %v853, 0
    %856 = vmatprep.subr.mxu0 0.0
    %857 = vmatpush1.msra.mxu0 %v163
    %858 = vmatprep.subr.mxu0 0.0
    %859 = vmatpush1.msra.mxu0 %v164
    %860 = vmatprep.subr.mxu0 0.0
    %861 = vmatpush1.msra.mxu0 %v165
    %862 = vmatprep.subr.mxu0 0.0
    %863 = vmatpush1.msra.mxu0 %v166
    %864 = vmatprep.subr.mxu0 0.0
    %865 = vmatpush1.msra.mxu0 0.0
    %866 = vmatprep.subr.mxu0 0.0
    %867 = vmatpush1.msra.mxu0 0.0
    %868 = vmatprep.subr.mxu0 0.0
    %869 = vmatpush1.msra.mxu0 0.0
    %870 = vmatprep.subr.mxu0 0.0
    %871 = vmatpush1.msra.mxu0 0.0
    %872 = vmatprep.subr.mxu0 0.0
    %873 = vmatpush1.msra.mxu0 0.0
    %874 = vmatprep.subr.mxu0 0.0
    %875 = vmatpush1.msra.mxu0 0.0
    %876 = vmatprep.subr.mxu0 0.0
    %877 = vmatpush1.msra.mxu0 0.0
    %878 = vmatprep.subr.mxu0 0.0
    %879 = vmatpush1.msra.mxu0 0.0
    %880 = vmatprep.subr.mxu0 0.0
    %881 = vmatpush1.msra.mxu0 0.0
    %882 = vmatprep.subr.mxu0 0.0
    %883 = vmatpush1.msra.mxu0 0.0
    %884 = vmatprep.subr.mxu0 0.0
    %885 = vmatpush1.msra.mxu0 0.0
    %886 = vmatprep.subr.mxu0 0.0
    %887 = vmatpush1.msra.mxu0 0.0
    %888 = vmatprep.subr.mxu0 0.0
    %889 = vmatpush1.msra.mxu0 0.0
    %890 = vmatprep.subr.mxu0 0.0
    %891 = vmatpush1.msra.mxu0 0.0
    %892 = vmatprep.subr.mxu0 0.0
    %893 = vmatpush1.msra.mxu0 0.0
    %894 = vmatprep.subr.mxu0 0.0
    %895 = vmatpush1.msra.mxu0 0.0
    %896 = vmatprep.subr.mxu0 0.0
    %897 = vmatpush1.msra.mxu0 0.0
    %898 = vmatprep.subr.mxu0 0.0
    %899 = vmatpush1.msra.mxu0 0.0
    %900 = vmatprep.subr.mxu0 0.0
    %901 = vmatpush1.msra.mxu0 0.0
    %902 = vmatprep.subr.mxu0 0.0
    %903 = vmatpush1.msra.mxu0 0.0
    %904 = vmatprep.subr.mxu0 0.0
    %905 = vmatpush1.msra.mxu0 0.0
    %906 = vmatprep.subr.mxu0 0.0
    %907 = vmatpush1.msra.mxu0 0.0
    %908 = vmatprep.subr.mxu0 0.0
    %909 = vmatpush1.msra.mxu0 0.0
    %910 = vmatprep.subr.mxu0 0.0
    %911 = vmatpush1.msra.mxu0 0.0
    %912 = vmatprep.subr.mxu0 0.0
    %913 = vmatpush1.msra.mxu0 0.0
    %914 = vmatprep.subr.mxu0 0.0
    %915 = vmatpush1.msra.mxu0 0.0
    %916 = vmatprep.subr.mxu0 0.0
    %917 = vmatpush1.msra.mxu0 0.0
    %918 = vmatprep.subr.mxu0 0.0
    %919 = vmatpush1.msra.mxu0 0.0
    %920 = vmatprep.mubr.f32.mxu0 0.0
    %921 = vmatmul.mubr.f32.gmra.mrb[0].mxu0 %v854
    %v922 = vpop.f32.mrb[0].mxu0
    %v923 = vadd.f32 %v177, %v922
    %v924 = vpop.f32.mrb[0].mxu0
    %925 = vdwg.mxu0
    %v927 = vrot.slane %v923, 2
    %v929 = vadd.f32 %v153, %v927
    %v930 = vxor.u32 %v929, 2147483648
    %v931 = vmul.f32 %v930, 1.442695
    %v932 = vpow.pop %v931
    %v933 = vadd.f32 %v932, 1.0
    %v934 = vrcp.pop %v933
    %v935 = vmul.f32 1.0, %v934
    %936 = vrot.lane.b32.xlu0 %v927, 64
    %v937 = vpop.permute.xlu0 %936
    %v939 = vmul.f32 %v935, %v937
    %941 = vrot.lane.b32.xlu0 %v939, 64
    %v942 = vpop.permute.xlu0 %941
    %v944 = vadd.f32 %v153, %v942
    %v945 = vtanh.pop %v944
    %v946 = vsub.f32 1.0, %v935
    %948 = vrot.lane.b32.xlu0 %v945, 96
    %v949 = vpop.permute.xlu0 %948
    %v951 = vmul.f32 %v946, %v949
    %v952 = vrot.slane %v729, 6
    %v954 = vmul.f32 %v935, %v952
    %v955 = vadd.f32 %v951, %v954
    %v957 = vrot.slane %v842, 2
    %v958 = vsel %vm79, %v957, 0
    %960 = vmatprep.subr.mxu0 0.0
    %961 = vmatpush1.msra.mxu0 %v167
    %962 = vmatprep.subr.mxu0 0.0
    %963 = vmatpush1.msra.mxu0 %v168
    %964 = vmatprep.subr.mxu0 0.0
    %965 = vmatpush1.msra.mxu0 %v169
    %966 = vmatprep.subr.mxu0 0.0
    %967 = vmatpush1.msra.mxu0 %v170
    %968 = vmatprep.subr.mxu0 0.0
    %969 = vmatpush1.msra.mxu0 0.0
    %970 = vmatprep.subr.mxu0 0.0
    %971 = vmatpush1.msra.mxu0 0.0
    %972 = vmatprep.subr.mxu0 0.0
    %973 = vmatpush1.msra.mxu0 0.0
    %974 = vmatprep.subr.mxu0 0.0
    %975 = vmatpush1.msra.mxu0 0.0
    %976 = vmatprep.subr.mxu0 0.0
    %977 = vmatpush1.msra.mxu0 0.0
    %978 = vmatprep.subr.mxu0 0.0
    %979 = vmatpush1.msra.mxu0 0.0
    %980 = vmatprep.subr.mxu0 0.0
    %981 = vmatpush1.msra.mxu0 0.0
    %982 = vmatprep.subr.mxu0 0.0
    %983 = vmatpush1.msra.mxu0 0.0
    %984 = vmatprep.subr.mxu0 0.0
    %985 = vmatpush1.msra.mxu0 0.0
    %986 = vmatprep.subr.mxu0 0.0
    %987 = vmatpush1.msra.mxu0 0.0
    %988 = vmatprep.subr.mxu0 0.0
    %989 = vmatpush1.msra.mxu0 0.0
    %990 = vmatprep.subr.mxu0 0.0
    %991 = vmatpush1.msra.mxu0 0.0
    %992 = vmatprep.subr.mxu0 0.0
    %993 = vmatpush1.msra.mxu0 0.0
    %994 = vmatprep.subr.mxu0 0.0
    %995 = vmatpush1.msra.mxu0 0.0
    %996 = vmatprep.subr.mxu0 0.0
    %997 = vmatpush1.msra.mxu0 0.0
    %998 = vmatprep.subr.mxu0 0.0
    %999 = vmatpush1.msra.mxu0 0.0
    %1000 = vmatprep.subr.mxu0 0.0
    %1001 = vmatpush1.msra.mxu0 0.0
    %1002 = vmatprep.subr.mxu0 0.0
    %1003 = vmatpush1.msra.mxu0 0.0
    %1004 = vmatprep.subr.mxu0 0.0
    %1005 = vmatpush1.msra.mxu0 0.0
    %1006 = vmatprep.subr.mxu0 0.0
    %1007 = vmatpush1.msra.mxu0 0.0
    %1008 = vmatprep.subr.mxu0 0.0
    %1009 = vmatpush1.msra.mxu0 0.0
    %1010 = vmatprep.subr.mxu0 0.0
    %1011 = vmatpush1.msra.mxu0 0.0
    %1012 = vmatprep.subr.mxu0 0.0
    %1013 = vmatpush1.msra.mxu0 0.0
    %1014 = vmatprep.subr.mxu0 0.0
    %1015 = vmatpush1.msra.mxu0 0.0
    %1016 = vmatprep.subr.mxu0 0.0
    %1017 = vmatpush1.msra.mxu0 0.0
    %1018 = vmatprep.subr.mxu0 0.0
    %1019 = vmatpush1.msra.mxu0 0.0
    %1020 = vmatprep.subr.mxu0 0.0
    %1021 = vmatpush1.msra.mxu0 0.0
    %1022 = vmatprep.subr.mxu0 0.0
    %1023 = vmatpush1.msra.mxu0 0.0
    %1024 = vmatprep.mubr.f32.mxu0 0.0
    %1025 = vmatmul.mubr.f32.gmra.mrb[0].mxu0 %v958
    %v1026 = vpop.f32.mrb[0].mxu0
    %v1027 = vadd.f32 %v282, %v1026
    %v1028 = vpop.f32.mrb[0].mxu0
    %1029 = vdwg.mxu0
    %1031 = vrot.lane.b32.xlu0 %v1027, 96
    %v1032 = vpop.permute.xlu0 %1031
    %v1034 = vadd.f32 %v159, %v1032
    %v1035 = vxor.u32 %v1034, 2147483648
    %v1036 = vmul.f32 %v1035, 1.442695
    %v1037 = vpow.pop %v1036
    %v1038 = vadd.f32 %v1037, 1.0
    %v1039 = vrcp.pop %v1038
    %v1040 = vmul.f32 1.0, %v1039
    %v1041 = vadd.f32 %v161, %v1032
    %v1042 = vxor.u32 %v1041, 2147483648
    %v1043 = vmul.f32 %v1042, 1.442695
    %v1044 = vpow.pop %v1043
    %v1045 = vadd.f32 %v1044, 1.0
    %v1046 = vrcp.pop %v1045
    %v1047 = vmul.f32 1.0, %v1046
    %1048 = vrot.lane.b32.xlu0 %v1027, 32
    %v1049 = vpop.permute.xlu0 %1048
    %v1051 = vmul.f32 %v1040, %v1049
    %1053 = vrot.lane.b32.xlu0 %v1051, 64
    %v1054 = vpop.permute.xlu0 %1053
    %v1056 = vadd.f32 %v161, %v1054
    %v1057 = vtanh.pop %v1056
    %v1058 = vsub.f32 1.0, %v1047
    %1060 = vrot.lane.b32.xlu0 %v1057, 96
    %v1061 = vpop.permute.xlu0 %1060
    %v1063 = vmul.f32 %v1058, %v1061
    %v1065 = vmul.f32 %v1047, %v957
    %v1066 = vadd.f32 %v1063, %v1065
    %1068 = vrot.lane.b32.xlu0 %v955, 96
    %v1069 = vpop.permute.xlu0 %1068
    %s1071 = scalar_lea.vmem %s7, 6
    %1072 = vst.msk [vmem:[%s1071 - $0x6] sm:$0xc0] %vm398, %v1069
    %s1073 = scalar_lea.vmem %s8, 8
    %1074 = vst.msk [vmem:[%s1073] sm:$0x3] %vm395, %v1066
    %v1075 = vrot.slane %v955, 6
    %1076 = vrot.lane.b32.xlu0 %v1075, 96
    %v1077 = vpop.permute.xlu0 %1076
    %v1078 = vsel %vm79, %v1077, 0
    %1080 = vmatprep.subr.mxu0 0.0
    %1081 = vmatpush1.msra.mxu0 %v163
    %1082 = vmatprep.subr.mxu0 0.0
    %1083 = vmatpush1.msra.mxu0 %v164
    %1084 = vmatprep.subr.mxu0 0.0
    %1085 = vmatpush1.msra.mxu0 %v165
    %1086 = vmatprep.subr.mxu0 0.0
    %1087 = vmatpush1.msra.mxu0 %v166
    %1088 = vmatprep.subr.mxu0 0.0
    %1089 = vmatpush1.msra.mxu0 0.0
    %1090 = vmatprep.subr.mxu0 0.0
    %1091 = vmatpush1.msra.mxu0 0.0
    %1092 = vmatprep.subr.mxu0 0.0
    %1093 = vmatpush1.msra.mxu0 0.0
    %1094 = vmatprep.subr.mxu0 0.0
    %1095 = vmatpush1.msra.mxu0 0.0
    %1096 = vmatprep.subr.mxu0 0.0
    %1097 = vmatpush1.msra.mxu0 0.0
    %1098 = vmatprep.subr.mxu0 0.0
    %1099 = vmatpush1.msra.mxu0 0.0
    %1100 = vmatprep.subr.mxu0 0.0
    %1101 = vmatpush1.msra.mxu0 0.0
    %1102 = vmatprep.subr.mxu0 0.0
    %1103 = vmatpush1.msra.mxu0 0.0
    %1104 = vmatprep.subr.mxu0 0.0
    %1105 = vmatpush1.msra.mxu0 0.0
    %1106 = vmatprep.subr.mxu0 0.0
    %1107 = vmatpush1.msra.mxu0 0.0
    %1108 = vmatprep.subr.mxu0 0.0
    %1109 = vmatpush1.msra.mxu0 0.0
    %1110 = vmatprep.subr.mxu0 0.0
    %1111 = vmatpush1.msra.mxu0 0.0
    %1112 = vmatprep.subr.mxu0 0.0
    %1113 = vmatpush1.msra.mxu0 0.0
    %1114 = vmatprep.subr.mxu0 0.0
    %1115 = vmatpush1.msra.mxu0 0.0
    %1116 = vmatprep.subr.mxu0 0.0
    %1117 = vmatpush1.msra.mxu0 0.0
    %1118 = vmatprep.subr.mxu0 0.0
    %1119 = vmatpush1.msra.mxu0 0.0
    %1120 = vmatprep.subr.mxu0 0.0
    %1121 = vmatpush1.msra.mxu0 0.0
    %1122 = vmatprep.subr.mxu0 0.0
    %1123 = vmatpush1.msra.mxu0 0.0
    %1124 = vmatprep.subr.mxu0 0.0
    %1125 = vmatpush1.msra.mxu0 0.0
    %1126 = vmatprep.subr.mxu0 0.0
    %1127 = vmatpush1.msra.mxu0 0.0
    %1128 = vmatprep.subr.mxu0 0.0
    %1129 = vmatpush1.msra.mxu0 0.0
    %1130 = vmatprep.subr.mxu0 0.0
    %1131 = vmatpush1.msra.mxu0 0.0
    %1132 = vmatprep.subr.mxu0 0.0
    %1133 = vmatpush1.msra.mxu0 0.0
    %1134 = vmatprep.subr.mxu0 0.0
    %1135 = vmatpush1.msra.mxu0 0.0
    %1136 = vmatprep.subr.mxu0 0.0
    %1137 = vmatpush1.msra.mxu0 0.0
    %1138 = vmatprep.subr.mxu0 0.0
    %1139 = vmatpush1.msra.mxu0 0.0
    %1140 = vmatprep.subr.mxu0 0.0
    %1141 = vmatpush1.msra.mxu0 0.0
    %1142 = vmatprep.subr.mxu0 0.0
    %1143 = vmatpush1.msra.mxu0 0.0
    %1144 = vmatprep.mubr.f32.mxu0 0.0
    %1145 = vmatmul.mubr.f32.gmra.mrb[0].mxu0 %v1078
    %v1146 = vpop.f32.mrb[0].mxu0
    %v1147 = vadd.f32 %v177, %v1146
    %v1148 = vpop.f32.mrb[0].mxu0
    %1149 = vdwg.mxu0
    %v1150 = vadd.f32 %v159, %v1147
    %v1151 = vxor.u32 %v1150, 2147483648
    %v1152 = vmul.f32 %v1151, 1.442695
    %v1153 = vpow.pop %v1152
    %v1154 = vadd.f32 %v1153, 1.0
    %v1155 = vrcp.pop %v1154
    %v1156 = vmul.f32 1.0, %v1155
    %1158 = vrot.lane.b32.xlu0 %v1147, 64
    %v1159 = vpop.permute.xlu0 %1158
    %v1161 = vmul.f32 %v1156, %v1159
    %1163 = vrot.lane.b32.xlu0 %v1161, 64
    %v1164 = vpop.permute.xlu0 %1163
    %v1166 = vadd.f32 %v159, %v1164
    %v1167 = vtanh.pop %v1166
    %v1168 = vsub.f32 1.0, %v1156
    %1170 = vrot.lane.b32.xlu0 %v1167, 96
    %v1171 = vpop.permute.xlu0 %1170
    %v1173 = vmul.f32 %v1168, %v1171
    %v1175 = vmul.f32 %v1156, %v1075
    %v1176 = vadd.f32 %v1173, %v1175
    %v1178 = vsel %vm79, %v1066, 0
    %1180 = vmatprep.subr.mxu0 0.0
    %1181 = vmatpush1.msra.mxu0 %v167
    %1182 = vmatprep.subr.mxu0 0.0
    %1183 = vmatpush1.msra.mxu0 %v168
    %1184 = vmatprep.subr.mxu0 0.0
    %1185 = vmatpush1.msra.mxu0 %v169
    %1186 = vmatprep.subr.mxu0 0.0
    %1187 = vmatpush1.msra.mxu0 %v170
    %1188 = vmatprep.subr.mxu0 0.0
    %1189 = vmatpush1.msra.mxu0 0.0
    %1190 = vmatprep.subr.mxu0 0.0
    %1191 = vmatpush1.msra.mxu0 0.0
    %1192 = vmatprep.subr.mxu0 0.0
    %1193 = vmatpush1.msra.mxu0 0.0
    %1194 = vmatprep.subr.mxu0 0.0
    %1195 = vmatpush1.msra.mxu0 0.0
    %1196 = vmatprep.subr.mxu0 0.0
    %1197 = vmatpush1.msra.mxu0 0.0
    %1198 = vmatprep.subr.mxu0 0.0
    %1199 = vmatpush1.msra.mxu0 0.0
    %1200 = vmatprep.subr.mxu0 0.0
    %1201 = vmatpush1.msra.mxu0 0.0
    %1202 = vmatprep.subr.mxu0 0.0
    %1203 = vmatpush1.msra.mxu0 0.0
    %1204 = vmatprep.subr.mxu0 0.0
    %1205 = vmatpush1.msra.mxu0 0.0
    %1206 = vmatprep.subr.mxu0 0.0
    %1207 = vmatpush1.msra.mxu0 0.0
    %1208 = vmatprep.subr.mxu0 0.0
    %1209 = vmatpush1.msra.mxu0 0.0
    %1210 = vmatprep.subr.mxu0 0.0
    %1211 = vmatpush1.msra.mxu0 0.0
    %1212 = vmatprep.subr.mxu0 0.0
    %1213 = vmatpush1.msra.mxu0 0.0
    %1214 = vmatprep.subr.mxu0 0.0
    %1215 = vmatpush1.msra.mxu0 0.0
    %1216 = vmatprep.subr.mxu0 0.0
    %1217 = vmatpush1.msra.mxu0 0.0
    %1218 = vmatprep.subr.mxu0 0.0
    %1219 = vmatpush1.msra.mxu0 0.0
    %1220 = vmatprep.subr.mxu0 0.0
    %1221 = vmatpush1.msra.mxu0 0.0
    %1222 = vmatprep.subr.mxu0 0.0
    %1223 = vmatpush1.msra.mxu0 0.0
    %1224 = vmatprep.subr.mxu0 0.0
    %1225 = vmatpush1.msra.mxu0 0.0
    %1226 = vmatprep.subr.mxu0 0.0
    %1227 = vmatpush1.msra.mxu0 0.0
    %1228 = vmatprep.subr.mxu0 0.0
    %1229 = vmatpush1.msra.mxu0 0.0
    %1230 = vmatprep.subr.mxu0 0.0
    %1231 = vmatpush1.msra.mxu0 0.0
    %1232 = vmatprep.subr.mxu0 0.0
    %1233 = vmatpush1.msra.mxu0 0.0
    %1234 = vmatprep.subr.mxu0 0.0
    %1235 = vmatpush1.msra.mxu0 0.0
    %1236 = vmatprep.subr.mxu0 0.0
    %1237 = vmatpush1.msra.mxu0 0.0
    %1238 = vmatprep.subr.mxu0 0.0
    %1239 = vmatpush1.msra.mxu0 0.0
    %1240 = vmatprep.subr.mxu0 0.0
    %1241 = vmatpush1.msra.mxu0 0.0
    %1242 = vmatprep.subr.mxu0 0.0
    %1243 = vmatpush1.msra.mxu0 0.0
    %1244 = vmatprep.mubr.f32.mxu0 0.0
    %1245 = vmatmul.mubr.f32.gmra.mrb[0].mxu0 %v1178
    %v1246 = vpop.f32.mrb[0].mxu0
    %v1247 = vadd.f32 %v282, %v1246
    %v1248 = vpop.f32.mrb[0].mxu0
    %1249 = vdwg.mxu0
    %v1251 = vrot.slane %v1247, 2
    %1252 = vrot.lane.b32.xlu0 %v1251, 96
    %v1253 = vpop.permute.xlu0 %1252
    %v1255 = vadd.f32 %v153, %v1253
    %v1256 = vxor.u32 %v1255, 2147483648
    %v1257 = vmul.f32 %v1256, 1.442695
    %v1258 = vpow.pop %v1257
    %v1259 = vadd.f32 %v1258, 1.0
    %v1260 = vrcp.pop %v1259
    %v1261 = vmul.f32 1.0, %v1260
    %v1262 = vadd.f32 %v155, %v1253
    %v1263 = vxor.u32 %v1262, 2147483648
    %v1264 = vmul.f32 %v1263, 1.442695
    %v1265 = vpow.pop %v1264
    %v1266 = vadd.f32 %v1265, 1.0
    %v1267 = vrcp.pop %v1266
    %v1268 = vmul.f32 1.0, %v1267
    %1269 = vrot.lane.b32.xlu0 %v1251, 32
    %v1270 = vpop.permute.xlu0 %1269
    %v1272 = vmul.f32 %v1261, %v1270
    %1274 = vrot.lane.b32.xlu0 %v1272, 64
    %v1275 = vpop.permute.xlu0 %1274
    %v1277 = vadd.f32 %v155, %v1275
    %v1278 = vtanh.pop %v1277
    %v1279 = vsub.f32 1.0, %v1268
    %1281 = vrot.lane.b32.xlu0 %v1278, 96
    %v1282 = vpop.permute.xlu0 %1281
    %v1284 = vmul.f32 %v1279, %v1282
    %v1285 = vrot.slane %v1066, 2
    %v1287 = vmul.f32 %v1268, %v1285
    %v1288 = vadd.f32 %v1284, %v1287
    %1290 = vrot.lane.b32.xlu0 %v1176, 96
    %v1291 = vpop.permute.xlu0 %1290
    %s1293 = scalar_lea.vmem %s7, 8
    %1294 = vst.msk [vmem:[%s1293] sm:$0x3] %vm395, %v1291
    %s1295 = scalar_lea.vmem %s8, 6
    %1296 = vst.msk [vmem:[%s1295 - $0x6] sm:$0xc0] %vm398, %v1288
    %v1297 = vsel %vm79, %v1291, 0
    %1299 = vmatprep.subr.mxu0 0.0
    %1300 = vmatpush1.msra.mxu0 %v163
    %1301 = vmatprep.subr.mxu0 0.0
    %1302 = vmatpush1.msra.mxu0 %v164
    %1303 = vmatprep.subr.mxu0 0.0
    %1304 = vmatpush1.msra.mxu0 %v165
    %1305 = vmatprep.subr.mxu0 0.0
    %1306 = vmatpush1.msra.mxu0 %v166
    %1307 = vmatprep.subr.mxu0 0.0
    %1308 = vmatpush1.msra.mxu0 0.0
    %1309 = vmatprep.subr.mxu0 0.0
    %1310 = vmatpush1.msra.mxu0 0.0
    %1311 = vmatprep.subr.mxu0 0.0
    %1312 = vmatpush1.msra.mxu0 0.0
    %1313 = vmatprep.subr.mxu0 0.0
    %1314 = vmatpush1.msra.mxu0 0.0
    %1315 = vmatprep.subr.mxu0 0.0
    %1316 = vmatpush1.msra.mxu0 0.0
    %1317 = vmatprep.subr.mxu0 0.0
    %1318 = vmatpush1.msra.mxu0 0.0
    %1319 = vmatprep.subr.mxu0 0.0
    %1320 = vmatpush1.msra.mxu0 0.0
    %1321 = vmatprep.subr.mxu0 0.0
    %1322 = vmatpush1.msra.mxu0 0.0
    %1323 = vmatprep.subr.mxu0 0.0
    %1324 = vmatpush1.msra.mxu0 0.0
    %1325 = vmatprep.subr.mxu0 0.0
    %1326 = vmatpush1.msra.mxu0 0.0
    %1327 = vmatprep.subr.mxu0 0.0
    %1328 = vmatpush1.msra.mxu0 0.0
    %1329 = vmatprep.subr.mxu0 0.0
    %1330 = vmatpush1.msra.mxu0 0.0
    %1331 = vmatprep.subr.mxu0 0.0
    %1332 = vmatpush1.msra.mxu0 0.0
    %1333 = vmatprep.subr.mxu0 0.0
    %1334 = vmatpush1.msra.mxu0 0.0
    %1335 = vmatprep.subr.mxu0 0.0
    %1336 = vmatpush1.msra.mxu0 0.0
    %1337 = vmatprep.subr.mxu0 0.0
    %1338 = vmatpush1.msra.mxu0 0.0
    %1339 = vmatprep.subr.mxu0 0.0
    %1340 = vmatpush1.msra.mxu0 0.0
    %1341 = vmatprep.subr.mxu0 0.0
    %1342 = vmatpush1.msra.mxu0 0.0
    %1343 = vmatprep.subr.mxu0 0.0
    %1344 = vmatpush1.msra.mxu0 0.0
    %1345 = vmatprep.subr.mxu0 0.0
    %1346 = vmatpush1.msra.mxu0 0.0
    %1347 = vmatprep.subr.mxu0 0.0
    %1348 = vmatpush1.msra.mxu0 0.0
    %1349 = vmatprep.subr.mxu0 0.0
    %1350 = vmatpush1.msra.mxu0 0.0
    %1351 = vmatprep.subr.mxu0 0.0
    %1352 = vmatpush1.msra.mxu0 0.0
    %1353 = vmatprep.subr.mxu0 0.0
    %1354 = vmatpush1.msra.mxu0 0.0
    %1355 = vmatprep.subr.mxu0 0.0
    %1356 = vmatpush1.msra.mxu0 0.0
    %1357 = vmatprep.subr.mxu0 0.0
    %1358 = vmatpush1.msra.mxu0 0.0
    %1359 = vmatprep.subr.mxu0 0.0
    %1360 = vmatpush1.msra.mxu0 0.0
    %1361 = vmatprep.subr.mxu0 0.0
    %1362 = vmatpush1.msra.mxu0 0.0
    %1363 = vmatprep.mubr.f32.mxu0 0.0
    %1364 = vmatmul.mubr.f32.gmra.mrb[0].mxu0 %v1297
    %v1365 = vpop.f32.mrb[0].mxu0
    %v1366 = vadd.f32 %v177, %v1365
    %v1367 = vpop.f32.mrb[0].mxu0
    %1368 = vdwg.mxu0
    %v1370 = vrot.slane %v1366, 6
    %v1372 = vadd.f32 %v159, %v1370
    %v1373 = vxor.u32 %v1372, 2147483648
    %v1374 = vmul.f32 %v1373, 1.442695
    %v1375 = vpow.pop %v1374
    %v1376 = vadd.f32 %v1375, 1.0
    %v1377 = vrcp.pop %v1376
    %v1378 = vmul.f32 1.0, %v1377
    %1379 = vrot.lane.b32.xlu0 %v1370, 64
    %v1380 = vpop.permute.xlu0 %1379
    %v1382 = vmul.f32 %v1378, %v1380
    %1384 = vrot.lane.b32.xlu0 %v1382, 64
    %v1385 = vpop.permute.xlu0 %1384
    %v1387 = vadd.f32 %v159, %v1385
    %v1388 = vtanh.pop %v1387
    %v1389 = vsub.f32 1.0, %v1378
    %1391 = vrot.lane.b32.xlu0 %v1388, 96
    %v1392 = vpop.permute.xlu0 %1391
    %v1394 = vmul.f32 %v1389, %v1392
    %v1395 = vrot.slane %v1176, 6
    %v1397 = vmul.f32 %v1378, %v1395
    %v1398 = vadd.f32 %v1394, %v1397
    %v1400 = vrot.slane %v1288, 6
    %v1401 = vsel %vm79, %v1400, 0
    %1403 = vmatprep.subr.mxu0 0.0
    %1404 = vmatpush1.msra.mxu0 %v167
    %1405 = vmatprep.subr.mxu0 0.0
    %1406 = vmatpush1.msra.mxu0 %v168
    %1407 = vmatprep.subr.mxu0 0.0
    %1408 = vmatpush1.msra.mxu0 %v169
    %1409 = vmatprep.subr.mxu0 0.0
    %1410 = vmatpush1.msra.mxu0 %v170
    %1411 = vmatprep.subr.mxu0 0.0
    %1412 = vmatpush1.msra.mxu0 0.0
    %1413 = vmatprep.subr.mxu0 0.0
    %1414 = vmatpush1.msra.mxu0 0.0
    %1415 = vmatprep.subr.mxu0 0.0
    %1416 = vmatpush1.msra.mxu0 0.0
    %1417 = vmatprep.subr.mxu0 0.0
    %1418 = vmatpush1.msra.mxu0 0.0
    %1419 = vmatprep.subr.mxu0 0.0
    %1420 = vmatpush1.msra.mxu0 0.0
    %1421 = vmatprep.subr.mxu0 0.0
    %1422 = vmatpush1.msra.mxu0 0.0
    %1423 = vmatprep.subr.mxu0 0.0
    %1424 = vmatpush1.msra.mxu0 0.0
    %1425 = vmatprep.subr.mxu0 0.0
    %1426 = vmatpush1.msra.mxu0 0.0
    %1427 = vmatprep.subr.mxu0 0.0
    %1428 = vmatpush1.msra.mxu0 0.0
    %1429 = vmatprep.subr.mxu0 0.0
    %1430 = vmatpush1.msra.mxu0 0.0
    %1431 = vmatprep.subr.mxu0 0.0
    %1432 = vmatpush1.msra.mxu0 0.0
    %1433 = vmatprep.subr.mxu0 0.0
    %1434 = vmatpush1.msra.mxu0 0.0
    %1435 = vmatprep.subr.mxu0 0.0
    %1436 = vmatpush1.msra.mxu0 0.0
    %1437 = vmatprep.subr.mxu0 0.0
    %1438 = vmatpush1.msra.mxu0 0.0
    %1439 = vmatprep.subr.mxu0 0.0
    %1440 = vmatpush1.msra.mxu0 0.0
    %1441 = vmatprep.subr.mxu0 0.0
    %1442 = vmatpush1.msra.mxu0 0.0
    %1443 = vmatprep.subr.mxu0 0.0
    %1444 = vmatpush1.msra.mxu0 0.0
    %1445 = vmatprep.subr.mxu0 0.0
    %1446 = vmatpush1.msra.mxu0 0.0
    %1447 = vmatprep.subr.mxu0 0.0
    %1448 = vmatpush1.msra.mxu0 0.0
    %1449 = vmatprep.subr.mxu0 0.0
    %1450 = vmatpush1.msra.mxu0 0.0
    %1451 = vmatprep.subr.mxu0 0.0
    %1452 = vmatpush1.msra.mxu0 0.0
    %1453 = vmatprep.subr.mxu0 0.0
    %1454 = vmatpush1.msra.mxu0 0.0
    %1455 = vmatprep.subr.mxu0 0.0
    %1456 = vmatpush1.msra.mxu0 0.0
    %1457 = vmatprep.subr.mxu0 0.0
    %1458 = vmatpush1.msra.mxu0 0.0
    %1459 = vmatprep.subr.mxu0 0.0
    %1460 = vmatpush1.msra.mxu0 0.0
    %1461 = vmatprep.subr.mxu0 0.0
    %1462 = vmatpush1.msra.mxu0 0.0
    %1463 = vmatprep.subr.mxu0 0.0
    %1464 = vmatpush1.msra.mxu0 0.0
    %1465 = vmatprep.subr.mxu0 0.0
    %1466 = vmatpush1.msra.mxu0 0.0
    %1467 = vmatprep.mubr.f32.mxu0 0.0
    %1468 = vmatmul.mubr.f32.gmra.mrb[0].mxu0 %v1401
    %v1469 = vpop.f32.mrb[0].mxu0
    %v1470 = vadd.f32 %v282, %v1469
    %v1471 = vpop.f32.mrb[0].mxu0
    %1472 = vdwg.mxu0
    %v1474 = vrot.slane %v1470, 4
    %1475 = vrot.lane.b32.xlu0 %v1474, 96
    %v1476 = vpop.permute.xlu0 %1475
    %v1478 = vadd.f32 %v153, %v1476
    %v1479 = vxor.u32 %v1478, 2147483648
    %v1480 = vmul.f32 %v1479, 1.442695
    %v1481 = vpow.pop %v1480
    %v1482 = vadd.f32 %v1481, 1.0
    %v1483 = vrcp.pop %v1482
    %v1484 = vmul.f32 1.0, %v1483
    %v1485 = vadd.f32 %v155, %v1476
    %v1486 = vxor.u32 %v1485, 2147483648
    %v1487 = vmul.f32 %v1486, 1.442695
    %v1488 = vpow.pop %v1487
    %v1489 = vadd.f32 %v1488, 1.0
    %v1490 = vrcp.pop %v1489
    %v1491 = vmul.f32 1.0, %v1490
    %1492 = vrot.lane.b32.xlu0 %v1474, 32
    %v1493 = vpop.permute.xlu0 %1492
    %v1495 = vmul.f32 %v1484, %v1493
    %1497 = vrot.lane.b32.xlu0 %v1495, 64
    %v1498 = vpop.permute.xlu0 %1497
    %v1500 = vadd.f32 %v155, %v1498
    %v1501 = vtanh.pop %v1500
    %v1502 = vsub.f32 1.0, %v1491
    %1504 = vrot.lane.b32.xlu0 %v1501, 96
    %v1505 = vpop.permute.xlu0 %1504
    %v1507 = vmul.f32 %v1502, %v1505
    %v1508 = vrot.slane %v1288, 2
    %v1510 = vmul.f32 %v1491, %v1508
    %v1511 = vadd.f32 %v1507, %v1510
    %1513 = vrot.lane.b32.xlu0 %v1398, 96
    %v1514 = vpop.permute.xlu0 %1513
    %s1516 = scalar_lea.vmem %s7, 10
    %1517 = vst.msk [vmem:[%s1516 - $0x2] sm:$0xc] %vm620, %v1514
    %s1518 = scalar_lea.vmem %s8, 4
    %1519 = vst.msk [vmem:[%s1518 - $0x4] sm:$0x30] %vm623, %v1511
    %v1520 = vrot.slane %v1398, 2
    %1521 = vrot.lane.b32.xlu0 %v1520, 96
    %v1522 = vpop.permute.xlu0 %1521
    %v1523 = vsel %vm79, %v1522, 0
    %1525 = vmatprep.subr.mxu0 0.0
    %1526 = vmatpush1.msra.mxu0 %v163
    %1527 = vmatprep.subr.mxu0 0.0
    %1528 = vmatpush1.msra.mxu0 %v164
    %1529 = vmatprep.subr.mxu0 0.0
    %1530 = vmatpush1.msra.mxu0 %v165
    %1531 = vmatprep.subr.mxu0 0.0
    %1532 = vmatpush1.msra.mxu0 %v166
    %1533 = vmatprep.subr.mxu0 0.0
    %1534 = vmatpush1.msra.mxu0 0.0
    %1535 = vmatprep.subr.mxu0 0.0
    %1536 = vmatpush1.msra.mxu0 0.0
    %1537 = vmatprep.subr.mxu0 0.0
    %1538 = vmatpush1.msra.mxu0 0.0
    %1539 = vmatprep.subr.mxu0 0.0
    %1540 = vmatpush1.msra.mxu0 0.0
    %1541 = vmatprep.subr.mxu0 0.0
    %1542 = vmatpush1.msra.mxu0 0.0
    %1543 = vmatprep.subr.mxu0 0.0
    %1544 = vmatpush1.msra.mxu0 0.0
    %1545 = vmatprep.subr.mxu0 0.0
    %1546 = vmatpush1.msra.mxu0 0.0
    %1547 = vmatprep.subr.mxu0 0.0
    %1548 = vmatpush1.msra.mxu0 0.0
    %1549 = vmatprep.subr.mxu0 0.0
    %1550 = vmatpush1.msra.mxu0 0.0
    %1551 = vmatprep.subr.mxu0 0.0
    %1552 = vmatpush1.msra.mxu0 0.0
    %1553 = vmatprep.subr.mxu0 0.0
    %1554 = vmatpush1.msra.mxu0 0.0
    %1555 = vmatprep.subr.mxu0 0.0
    %1556 = vmatpush1.msra.mxu0 0.0
    %1557 = vmatprep.subr.mxu0 0.0
    %1558 = vmatpush1.msra.mxu0 0.0
    %1559 = vmatprep.subr.mxu0 0.0
    %1560 = vmatpush1.msra.mxu0 0.0
    %1561 = vmatprep.subr.mxu0 0.0
    %1562 = vmatpush1.msra.mxu0 0.0
    %1563 = vmatprep.subr.mxu0 0.0
    %1564 = vmatpush1.msra.mxu0 0.0
    %1565 = vmatprep.subr.mxu0 0.0
    %1566 = vmatpush1.msra.mxu0 0.0
    %1567 = vmatprep.subr.mxu0 0.0
    %1568 = vmatpush1.msra.mxu0 0.0
    %1569 = vmatprep.subr.mxu0 0.0
    %1570 = vmatpush1.msra.mxu0 0.0
    %1571 = vmatprep.subr.mxu0 0.0
    %1572 = vmatpush1.msra.mxu0 0.0
    %1573 = vmatprep.subr.mxu0 0.0
    %1574 = vmatpush1.msra.mxu0 0.0
    %1575 = vmatprep.subr.mxu0 0.0
    %1576 = vmatpush1.msra.mxu0 0.0
    %1577 = vmatprep.subr.mxu0 0.0
    %1578 = vmatpush1.msra.mxu0 0.0
    %1579 = vmatprep.subr.mxu0 0.0
    %1580 = vmatpush1.msra.mxu0 0.0
    %1581 = vmatprep.subr.mxu0 0.0
    %1582 = vmatpush1.msra.mxu0 0.0
    %1583 = vmatprep.subr.mxu0 0.0
    %1584 = vmatpush1.msra.mxu0 0.0
    %1585 = vmatprep.subr.mxu0 0.0
    %1586 = vmatpush1.msra.mxu0 0.0
    %1587 = vmatprep.subr.mxu0 0.0
    %1588 = vmatpush1.msra.mxu0 0.0
    %1589 = vmatprep.mubr.f32.mxu0 0.0
    %1590 = vmatmul.mubr.f32.gmra.mrb[0].mxu0 %v1523
    %v1591 = vpop.f32.mrb[0].mxu0
    %v1592 = vadd.f32 %v177, %v1591
    %v1593 = vpop.f32.mrb[0].mxu0
    %1594 = vdwg.mxu0
    %v1596 = vrot.slane %v1592, 4
    %v1598 = vadd.f32 %v159, %v1596
    %v1599 = vxor.u32 %v1598, 2147483648
    %v1600 = vmul.f32 %v1599, 1.442695
    %v1601 = vpow.pop %v1600
    %v1602 = vadd.f32 %v1601, 1.0
    %v1603 = vrcp.pop %v1602
    %v1604 = vmul.f32 1.0, %v1603
    %1605 = vrot.lane.b32.xlu0 %v1596, 64
    %v1606 = vpop.permute.xlu0 %1605
    %v1608 = vmul.f32 %v1604, %v1606
    %1610 = vrot.lane.b32.xlu0 %v1608, 64
    %v1611 = vpop.permute.xlu0 %1610
    %v1613 = vadd.f32 %v159, %v1611
    %v1614 = vtanh.pop %v1613
    %v1615 = vsub.f32 1.0, %v1604
    %1617 = vrot.lane.b32.xlu0 %v1614, 96
    %v1618 = vpop.permute.xlu0 %1617
    %v1620 = vmul.f32 %v1615, %v1618
    %v1621 = vrot.slane %v1398, 6
    %v1623 = vmul.f32 %v1604, %v1621
    %v1624 = vadd.f32 %v1620, %v1623
    %v1626 = vrot.slane %v1511, 4
    %v1627 = vsel %vm79, %v1626, 0
    %1629 = vmatprep.subr.mxu0 0.0
    %1630 = vmatpush1.msra.mxu0 %v167
    %1631 = vmatprep.subr.mxu0 0.0
    %1632 = vmatpush1.msra.mxu0 %v168
    %1633 = vmatprep.subr.mxu0 0.0
    %1634 = vmatpush1.msra.mxu0 %v169
    %1635 = vmatprep.subr.mxu0 0.0
    %1636 = vmatpush1.msra.mxu0 %v170
    %1637 = vmatprep.subr.mxu0 0.0
    %1638 = vmatpush1.msra.mxu0 0.0
    %1639 = vmatprep.subr.mxu0 0.0
    %1640 = vmatpush1.msra.mxu0 0.0
    %1641 = vmatprep.subr.mxu0 0.0
    %1642 = vmatpush1.msra.mxu0 0.0
    %1643 = vmatprep.subr.mxu0 0.0
    %1644 = vmatpush1.msra.mxu0 0.0
    %1645 = vmatprep.subr.mxu0 0.0
    %1646 = vmatpush1.msra.mxu0 0.0
    %1647 = vmatprep.subr.mxu0 0.0
    %1648 = vmatpush1.msra.mxu0 0.0
    %1649 = vmatprep.subr.mxu0 0.0
    %1650 = vmatpush1.msra.mxu0 0.0
    %1651 = vmatprep.subr.mxu0 0.0
    %1652 = vmatpush1.msra.mxu0 0.0
    %1653 = vmatprep.subr.mxu0 0.0
    %1654 = vmatpush1.msra.mxu0 0.0
    %1655 = vmatprep.subr.mxu0 0.0
    %1656 = vmatpush1.msra.mxu0 0.0
    %1657 = vmatprep.subr.mxu0 0.0
    %1658 = vmatpush1.msra.mxu0 0.0
    %1659 = vmatprep.subr.mxu0 0.0
    %1660 = vmatpush1.msra.mxu0 0.0
    %1661 = vmatprep.subr.mxu0 0.0
    %1662 = vmatpush1.msra.mxu0 0.0
    %1663 = vmatprep.subr.mxu0 0.0
    %1664 = vmatpush1.msra.mxu0 0.0
    %1665 = vmatprep.subr.mxu0 0.0
    %1666 = vmatpush1.msra.mxu0 0.0
    %1667 = vmatprep.subr.mxu0 0.0
    %1668 = vmatpush1.msra.mxu0 0.0
    %1669 = vmatprep.subr.mxu0 0.0
    %1670 = vmatpush1.msra.mxu0 0.0
    %1671 = vmatprep.subr.mxu0 0.0
    %1672 = vmatpush1.msra.mxu0 0.0
    %1673 = vmatprep.subr.mxu0 0.0
    %1674 = vmatpush1.msra.mxu0 0.0
    %1675 = vmatprep.subr.mxu0 0.0
    %1676 = vmatpush1.msra.mxu0 0.0
    %1677 = vmatprep.subr.mxu0 0.0
    %1678 = vmatpush1.msra.mxu0 0.0
    %1679 = vmatprep.subr.mxu0 0.0
    %1680 = vmatpush1.msra.mxu0 0.0
    %1681 = vmatprep.subr.mxu0 0.0
    %1682 = vmatpush1.msra.mxu0 0.0
    %1683 = vmatprep.subr.mxu0 0.0
    %1684 = vmatpush1.msra.mxu0 0.0
    %1685 = vmatprep.subr.mxu0 0.0
    %1686 = vmatpush1.msra.mxu0 0.0
    %1687 = vmatprep.subr.mxu0 0.0
    %1688 = vmatpush1.msra.mxu0 0.0
    %1689 = vmatprep.subr.mxu0 0.0
    %1690 = vmatpush1.msra.mxu0 0.0
    %1691 = vmatprep.subr.mxu0 0.0
    %1692 = vmatpush1.msra.mxu0 0.0
    %1693 = vmatprep.mubr.f32.mxu0 0.0
    %1694 = vmatmul.mubr.f32.gmra.mrb[0].mxu0 %v1627
    %v1695 = vpop.f32.mrb[0].mxu0
    %v1696 = vadd.f32 %v282, %v1695
    %v1697 = vpop.f32.mrb[0].mxu0
    %1698 = vdwg.mxu0
    %v1700 = vrot.slane %v1696, 6
    %1701 = vrot.lane.b32.xlu0 %v1700, 96
    %v1702 = vpop.permute.xlu0 %1701
    %v1704 = vadd.f32 %v153, %v1702
    %v1705 = vxor.u32 %v1704, 2147483648
    %v1706 = vmul.f32 %v1705, 1.442695
    %v1707 = vpow.pop %v1706
    %v1708 = vadd.f32 %v1707, 1.0
    %v1709 = vrcp.pop %v1708
    %v1710 = vmul.f32 1.0, %v1709
    %v1711 = vadd.f32 %v155, %v1702
    %v1712 = vxor.u32 %v1711, 2147483648
    %v1713 = vmul.f32 %v1712, 1.442695
    %v1714 = vpow.pop %v1713
    %v1715 = vadd.f32 %v1714, 1.0
    %v1716 = vrcp.pop %v1715
    %v1717 = vmul.f32 1.0, %v1716
    %1718 = vrot.lane.b32.xlu0 %v1700, 32
    %v1719 = vpop.permute.xlu0 %1718
    %v1721 = vmul.f32 %v1710, %v1719
    %1723 = vrot.lane.b32.xlu0 %v1721, 64
    %v1724 = vpop.permute.xlu0 %1723
    %v1726 = vadd.f32 %v155, %v1724
    %v1727 = vtanh.pop %v1726
    %v1728 = vsub.f32 1.0, %v1717
    %1730 = vrot.lane.b32.xlu0 %v1727, 96
    %v1731 = vpop.permute.xlu0 %1730
    %v1733 = vmul.f32 %v1728, %v1731
    %v1734 = vrot.slane %v1511, 2
    %v1736 = vmul.f32 %v1717, %v1734
    %v1737 = vadd.f32 %v1733, %v1736
    %1739 = vrot.lane.b32.xlu0 %v1624, 96
    %v1740 = vpop.permute.xlu0 %1739
    %s1742 = scalar_lea.vmem %s7, 12
    %1743 = vst.msk [vmem:[%s1742 - $0x4] sm:$0x30] %vm623, %v1740
    %s1744 = scalar_lea.vmem %s8, 2
    %1745 = vst.msk [vmem:[%s1744 - $0x2] sm:$0xc] %vm620, %v1737
    %v1746 = vrot.slane %v1624, 4
    %1747 = vrot.lane.b32.xlu0 %v1746, 96
    %v1748 = vpop.permute.xlu0 %1747
    %v1749 = vsel %vm79, %v1748, 0
    %1751 = vmatprep.subr.mxu0 0.0
    %1752 = vmatpush1.msra.mxu0 %v163
    %1753 = vmatprep.subr.mxu0 0.0
    %1754 = vmatpush1.msra.mxu0 %v164
    %1755 = vmatprep.subr.mxu0 0.0
    %1756 = vmatpush1.msra.mxu0 %v165
    %1757 = vmatprep.subr.mxu0 0.0
    %1758 = vmatpush1.msra.mxu0 %v166
    %1759 = vmatprep.subr.mxu0 0.0
    %1760 = vmatpush1.msra.mxu0 0.0
    %1761 = vmatprep.subr.mxu0 0.0
    %1762 = vmatpush1.msra.mxu0 0.0
    %1763 = vmatprep.subr.mxu0 0.0
    %1764 = vmatpush1.msra.mxu0 0.0
    %1765 = vmatprep.subr.mxu0 0.0
    %1766 = vmatpush1.msra.mxu0 0.0
    %1767 = vmatprep.subr.mxu0 0.0
    %1768 = vmatpush1.msra.mxu0 0.0
    %1769 = vmatprep.subr.mxu0 0.0
    %1770 = vmatpush1.msra.mxu0 0.0
    %1771 = vmatprep.subr.mxu0 0.0
    %1772 = vmatpush1.msra.mxu0 0.0
    %1773 = vmatprep.subr.mxu0 0.0
    %1774 = vmatpush1.msra.mxu0 0.0
    %1775 = vmatprep.subr.mxu0 0.0
    %1776 = vmatpush1.msra.mxu0 0.0
    %1777 = vmatprep.subr.mxu0 0.0
    %1778 = vmatpush1.msra.mxu0 0.0
    %1779 = vmatprep.subr.mxu0 0.0
    %1780 = vmatpush1.msra.mxu0 0.0
    %1781 = vmatprep.subr.mxu0 0.0
    %1782 = vmatpush1.msra.mxu0 0.0
    %1783 = vmatprep.subr.mxu0 0.0
    %1784 = vmatpush1.msra.mxu0 0.0
    %1785 = vmatprep.subr.mxu0 0.0
    %1786 = vmatpush1.msra.mxu0 0.0
    %1787 = vmatprep.subr.mxu0 0.0
    %1788 = vmatpush1.msra.mxu0 0.0
    %1789 = vmatprep.subr.mxu0 0.0
    %1790 = vmatpush1.msra.mxu0 0.0
    %1791 = vmatprep.subr.mxu0 0.0
    %1792 = vmatpush1.msra.mxu0 0.0
    %1793 = vmatprep.subr.mxu0 0.0
    %1794 = vmatpush1.msra.mxu0 0.0
    %1795 = vmatprep.subr.mxu0 0.0
    %1796 = vmatpush1.msra.mxu0 0.0
    %1797 = vmatprep.subr.mxu0 0.0
    %1798 = vmatpush1.msra.mxu0 0.0
    %1799 = vmatprep.subr.mxu0 0.0
    %1800 = vmatpush1.msra.mxu0 0.0
    %1801 = vmatprep.subr.mxu0 0.0
    %1802 = vmatpush1.msra.mxu0 0.0
    %1803 = vmatprep.subr.mxu0 0.0
    %1804 = vmatpush1.msra.mxu0 0.0
    %1805 = vmatprep.subr.mxu0 0.0
    %1806 = vmatpush1.msra.mxu0 0.0
    %1807 = vmatprep.subr.mxu0 0.0
    %1808 = vmatpush1.msra.mxu0 0.0
    %1809 = vmatprep.subr.mxu0 0.0
    %1810 = vmatpush1.msra.mxu0 0.0
    %1811 = vmatprep.subr.mxu0 0.0
    %1812 = vmatpush1.msra.mxu0 0.0
    %1813 = vmatprep.subr.mxu0 0.0
    %1814 = vmatpush1.msra.mxu0 0.0
    %1815 = vmatprep.mubr.f32.mxu0 0.0
    %1816 = vmatmul.mubr.f32.gmra.mrb[0].mxu0 %v1749
    %v1817 = vpop.f32.mrb[0].mxu0
    %v1818 = vadd.f32 %v177, %v1817
    %v1819 = vpop.f32.mrb[0].mxu0
    %1820 = vdwg.mxu0
    %v1822 = vrot.slane %v1818, 2
    %v1824 = vadd.f32 %v159, %v1822
    %v1825 = vxor.u32 %v1824, 2147483648
    %v1826 = vmul.f32 %v1825, 1.442695
    %v1827 = vpow.pop %v1826
    %v1828 = vadd.f32 %v1827, 1.0
    %v1829 = vrcp.pop %v1828
    %v1830 = vmul.f32 1.0, %v1829
    %1831 = vrot.lane.b32.xlu0 %v1822, 64
    %v1832 = vpop.permute.xlu0 %1831
    %v1834 = vmul.f32 %v1830, %v1832
    %1836 = vrot.lane.b32.xlu0 %v1834, 64
    %v1837 = vpop.permute.xlu0 %1836
    %v1839 = vadd.f32 %v159, %v1837
    %v1840 = vtanh.pop %v1839
    %v1841 = vsub.f32 1.0, %v1830
    %1843 = vrot.lane.b32.xlu0 %v1840, 96
    %v1844 = vpop.permute.xlu0 %1843
    %v1846 = vmul.f32 %v1841, %v1844
    %v1847 = vrot.slane %v1624, 6
    %v1849 = vmul.f32 %v1830, %v1847
    %v1850 = vadd.f32 %v1846, %v1849
    %v1852 = vrot.slane %v1737, 2
    %v1853 = vsel %vm79, %v1852, 0
    %1855 = vmatprep.subr.mxu0 0.0
    %1856 = vmatpush1.msra.mxu0 %v167
    %1857 = vmatprep.subr.mxu0 0.0
    %1858 = vmatpush1.msra.mxu0 %v168
    %1859 = vmatprep.subr.mxu0 0.0
    %1860 = vmatpush1.msra.mxu0 %v169
    %1861 = vmatprep.subr.mxu0 0.0
    %1862 = vmatpush1.msra.mxu0 %v170
    %1863 = vmatprep.subr.mxu0 0.0
    %1864 = vmatpush1.msra.mxu0 0.0
    %1865 = vmatprep.subr.mxu0 0.0
    %1866 = vmatpush1.msra.mxu0 0.0
    %1867 = vmatprep.subr.mxu0 0.0
    %1868 = vmatpush1.msra.mxu0 0.0
    %1869 = vmatprep.subr.mxu0 0.0
    %1870 = vmatpush1.msra.mxu0 0.0
    %1871 = vmatprep.subr.mxu0 0.0
    %1872 = vmatpush1.msra.mxu0 0.0
    %1873 = vmatprep.subr.mxu0 0.0
    %1874 = vmatpush1.msra.mxu0 0.0
    %1875 = vmatprep.subr.mxu0 0.0
    %1876 = vmatpush1.msra.mxu0 0.0
    %1877 = vmatprep.subr.mxu0 0.0
    %1878 = vmatpush1.msra.mxu0 0.0
    %1879 = vmatprep.subr.mxu0 0.0
    %1880 = vmatpush1.msra.mxu0 0.0
    %1881 = vmatprep.subr.mxu0 0.0
    %1882 = vmatpush1.msra.mxu0 0.0
    %1883 = vmatprep.subr.mxu0 0.0
    %1884 = vmatpush1.msra.mxu0 0.0
    %1885 = vmatprep.subr.mxu0 0.0
    %1886 = vmatpush1.msra.mxu0 0.0
    %1887 = vmatprep.subr.mxu0 0.0
    %1888 = vmatpush1.msra.mxu0 0.0
    %1889 = vmatprep.subr.mxu0 0.0
    %1890 = vmatpush1.msra.mxu0 0.0
    %1891 = vmatprep.subr.mxu0 0.0
    %1892 = vmatpush1.msra.mxu0 0.0
    %1893 = vmatprep.subr.mxu0 0.0
    %1894 = vmatpush1.msra.mxu0 0.0
    %1895 = vmatprep.subr.mxu0 0.0
    %1896 = vmatpush1.msra.mxu0 0.0
    %1897 = vmatprep.subr.mxu0 0.0
    %1898 = vmatpush1.msra.mxu0 0.0
    %1899 = vmatprep.subr.mxu0 0.0
    %1900 = vmatpush1.msra.mxu0 0.0
    %1901 = vmatprep.subr.mxu0 0.0
    %1902 = vmatpush1.msra.mxu0 0.0
    %1903 = vmatprep.subr.mxu0 0.0
    %1904 = vmatpush1.msra.mxu0 0.0
    %1905 = vmatprep.subr.mxu0 0.0
    %1906 = vmatpush1.msra.mxu0 0.0
    %1907 = vmatprep.subr.mxu0 0.0
    %1908 = vmatpush1.msra.mxu0 0.0
    %1909 = vmatprep.subr.mxu0 0.0
    %1910 = vmatpush1.msra.mxu0 0.0
    %1911 = vmatprep.subr.mxu0 0.0
    %1912 = vmatpush1.msra.mxu0 0.0
    %1913 = vmatprep.subr.mxu0 0.0
    %1914 = vmatpush1.msra.mxu0 0.0
    %1915 = vmatprep.subr.mxu0 0.0
    %1916 = vmatpush1.msra.mxu0 0.0
    %1917 = vmatprep.subr.mxu0 0.0
    %1918 = vmatpush1.msra.mxu0 0.0
    %1919 = vmatprep.mubr.f32.mxu0 0.0
    %1920 = vmatmul.mubr.f32.gmra.mrb[0].mxu0 %v1853
    %v1921 = vpop.f32.mrb[0].mxu0
    %v1922 = vadd.f32 %v282, %v1921
    %v1923 = vpop.f32.mrb[0].mxu0
    %1924 = vdwg.mxu0
    %1926 = vrot.lane.b32.xlu0 %v1922, 96
    %v1927 = vpop.permute.xlu0 %1926
    %v1929 = vadd.f32 %v153, %v1927
    %v1930 = vxor.u32 %v1929, 2147483648
    %v1931 = vmul.f32 %v1930, 1.442695
    %v1932 = vpow.pop %v1931
    %v1933 = vadd.f32 %v1932, 1.0
    %v1934 = vrcp.pop %v1933
    %v1935 = vmul.f32 1.0, %v1934
    %v1936 = vadd.f32 %v155, %v1927
    %v1937 = vxor.u32 %v1936, 2147483648
    %v1938 = vmul.f32 %v1937, 1.442695
    %v1939 = vpow.pop %v1938
    %v1940 = vadd.f32 %v1939, 1.0
    %v1941 = vrcp.pop %v1940
    %v1942 = vmul.f32 1.0, %v1941
    %1943 = vrot.lane.b32.xlu0 %v1922, 32
    %v1944 = vpop.permute.xlu0 %1943
    %v1946 = vmul.f32 %v1935, %v1944
    %1948 = vrot.lane.b32.xlu0 %v1946, 64
    %v1949 = vpop.permute.xlu0 %1948
    %v1951 = vadd.f32 %v155, %v1949
    %v1952 = vtanh.pop %v1951
    %v1953 = vsub.f32 1.0, %v1942
    %1955 = vrot.lane.b32.xlu0 %v1952, 96
    %v1956 = vpop.permute.xlu0 %1955
    %v1958 = vmul.f32 %v1953, %v1956
    %v1960 = vmul.f32 %v1942, %v1852
    %v1961 = vadd.f32 %v1958, %v1960
    %1963 = vrot.lane.b32.xlu0 %v1850, 96
    %v1964 = vpop.permute.xlu0 %1963
    %s1966 = scalar_lea.vmem %s7, 14
    %1967 = vst.msk [vmem:[%s1966 - $0x6] sm:$0xc0] %vm398, %v1964
    %1968 = vst.msk [vmem:[%s8] sm:$0x3] %vm395, %v1961
    %v1970 = vrot.slane %v1961, 2
    %1971 = vrot.lane.b32.xlu0 %v1970, 32
    %v1972 = vpop.permute.xlu0 %1971
    %v1974 = vsel %vm79, %v1964, %v1972
    %vm1975 = vcmask 523270
    %1976 = vst.msk [vmem:[%s9 - $0x6] sm:$0xc0] %vm1975, %v1974
    // Predicated region
    $region38: #{_lambda_.2} parent=1 // pred_check
      _
    $region39: #{_lambda_.2} parent=1 // pred_check_branch
      %1978 = sbr.rel (0) target = $region41
    $region40: #{_lambda_.2} parent=1 // pred_region
      _
    $region41: #{_lambda_.2} parent=1 // pred_fallthru
      _
    // Predicated region
    $region42: #{_lambda_.2} parent=1 // pred_check
      _
    $region43: #{_lambda_.2} parent=1 // pred_check_branch
      %1980 = sbr.rel (0) target = $region45
    $region44: #{_lambda_.2} parent=1 // pred_region
      _
    $region45: #{_lambda_.2} parent=1 // pred_fallthru
      _
    // Predicated region
    $region46: #{_lambda_.2} parent=1 // pred_check
      _
    $region47: #{_lambda_.2} parent=1 // pred_check_branch
      %1982 = sbr.rel (0) target = $region49
    $region48: #{_lambda_.2} parent=1 // pred_region
      _
    $region49: #{_lambda_.2} parent=1 // pred_fallthru
      _
    // Predicated region
    $region50: #{_lambda_.2} parent=1 // pred_check
      _
    $region51: #{_lambda_.2} parent=1 // pred_check_branch
      %1984 = sbr.rel (0) target = $region53
    $region52: #{_lambda_.2} parent=1 // pred_region
      _
    $region53: #{_lambda_.2} parent=1 // pred_fallthru
      _
    // Predicated region
    $region54: #{_lambda_.2} parent=1 // pred_check
      _
    $region55: #{_lambda_.2} parent=1 // pred_check_branch
      %1986 = sbr.rel (0) target = $region57
    $region56: #{_lambda_.2} parent=1 // pred_region
      _
    $region57: #{_lambda_.2} parent=1 // pred_fallthru
      _
    // Predicated region
    $region58: #{_lambda_.2} parent=1 // pred_check
      _
    $region59: #{_lambda_.2} parent=1 // pred_check_branch
      %1988 = sbr.rel (0) target = $region61
    $region60: #{_lambda_.2} parent=1 // pred_region
      _
    $region61: #{_lambda_.2} parent=1 // pred_fallthru
      _
    %1989 = vsyncpa [#allocation3], 1
    %1990 = vsyncpa [#allocation5], 1

// kernel: _lambda_.3
$region0: #{_lambda_.3}
  #allocation0 [shape = 'u32[]', space=smem, size = 0x4, offset = 0x4, fixed_abs, tag = 'smem constant byte address 0x4 - core index']
  #allocation1 [shape = 'u32[144,128]{1,0:T(1,128)}', space=vmem, size = 0x12000, scoped, tag = 'internal scratch']
  #allocation2 [shape = 'f32[1,1]{1,0:T(1,128)S(1)}', space=vmem, size = 0x200, scoped, tag = 'scoped memory for _lambda_.3']
  %s0 = inlined_call_operand.vmem [shape: f32[16,32], index: 0, kind: input, shape index: {}]
  %s1 = inlined_call_operand.vmem [shape: f32[16,32], index: 1, kind: input, shape index: {}]
  %s2 = inlined_call_operand.vmem [shape: f32[2,64], index: 2, kind: input, shape index: {}]
  %s3 = inlined_call_operand.vmem [shape: f32[64,192], index: 3, kind: input, shape index: {}]
  %s4 = inlined_call_operand.hbm [shape: f32[32,96], index: 4, kind: input, shape index: {}]
  %s5 = inlined_call_operand.vmem [shape: f32[32,96], index: 5, kind: input, shape index: {}]
  %s6 = inlined_call_operand.vmem [shape: f32[1,192], index: 6, kind: input, shape index: {}]
  %s7 = inlined_call_operand.vmem [shape: f32[1,96], index: 7, kind: input, shape index: {}]
  %s8 = inlined_call_operand.vmem [shape: f32[1,96], index: 8, kind: input, shape index: {}]
  %s9 = inlined_call_operand.vmem [shape: f32[128,1], index: 9, kind: input, shape index: {}]
  %s10 = inlined_call_operand.<no memory space> [shape: f32[1,1], index: 10, kind: input, shape index: {}]
  %s11 = inlined_call_operand.vmem [shape: f32[2,1], index: 11, kind: output, shape index: {}]
  %s12 = sld [smem:[#allocation0]]
  $region58: #{_lambda_.3} parent=0
    _
  %s14 = ssub.s32 1, %s12
  %s15 = scalar_select 0, %s14, %s12
  %v16 = vstv %s10
  %17 = vst [vmem:[#allocation2] sm:$0x1] %v16
  $region1: #{_lambda_.3} parent=0
    #allocation3 [shape = 'u8[16384]{0}', space=vmem, size = 0x4000, scoped, tag = 'input window, operand 4, single buffered']
    #allocation4 [shape = 's32[1]{0}', space=sflag, size = 0x4, scoped, tag = 'scoped memory for _lambda_.3']
    %18 = vsyncpa [#allocation4], 0
    // Predicated region
    $region2: #{_lambda_.3} parent=1 // pred_check
      _
    $region3: #{_lambda_.3} parent=1 // pred_check_branch
      %20 = sbr.rel (0) target = $region5
    $region4: #{_lambda_.3} parent=1 // pred_region
      _
    $region5: #{_lambda_.3} parent=1 // pred_fallthru
      _
    // Predicated region
    $region6: #{_lambda_.3} parent=1 // pred_check
      _
    $region7: #{_lambda_.3} parent=1 // pred_check_branch
      %22 = sbr.rel (0) target = $region9
    $region8: #{_lambda_.3} parent=1 // pred_region
      _
    $region9: #{_lambda_.3} parent=1 // pred_fallthru
      _
    // Predicated region
    $region10: #{_lambda_.3} parent=1 // pred_check
      _
    $region11: #{_lambda_.3} parent=1 // pred_check_branch
      %24 = sbr.rel (0) target = $region13
    $region12: #{_lambda_.3} parent=1 // pred_region
      _
    $region13: #{_lambda_.3} parent=1 // pred_fallthru
      _
    // Predicated region
    $region14: #{_lambda_.3} parent=1 // pred_check
      _
    $region15: #{_lambda_.3} parent=1 // pred_check_branch
      %26 = sbr.rel (0) target = $region17
    $region16: #{_lambda_.3} parent=1 // pred_region
      _
    $region17: #{_lambda_.3} parent=1 // pred_fallthru
      _
    // Predicated region
    $region18: #{_lambda_.3} parent=1 // pred_check
      _
    $region19: #{_lambda_.3} parent=1 // pred_check_branch
      %28 = sbr.rel (0) target = $region21
    $region20: #{_lambda_.3} parent=1 // pred_region
      %s30 = ssub.s32 512, 512
      %31 = vsyncadd [#allocation4], %s30
      %s32 = sshll.u32 [#allocation3], 4
      %s33 = int_to_ptr.vmem [resolvable:$true] %s32
      %38 = dma.hbm_to_vmem [thread:$0]  %s4, 512, %s33, [#allocation4], 128, 128, 8
    $region21: #{_lambda_.3} parent=1 // pred_fallthru
      _
    // Predicated region
    $region22: #{_lambda_.3} parent=1 // pred_check
      _
    $region23: #{_lambda_.3} parent=1 // pred_check_branch
      %40 = sbr.rel (0) target = $region25
    $region24: #{_lambda_.3} parent=1 // pred_region
      _
    $region25: #{_lambda_.3} parent=1 // pred_fallthru
      _
    // Predicated region
    $region26: #{_lambda_.3} parent=1 // pred_check
      _
    $region27: #{_lambda_.3} parent=1 // pred_check_branch
      %42 = sbr.rel (0) target = $region29
    $region28: #{_lambda_.3} parent=1 // pred_region
      _
    $region29: #{_lambda_.3} parent=1 // pred_fallthru
      _
    // Predicated region
    $region30: #{_lambda_.3} parent=1 // pred_check
      _
    $region31: #{_lambda_.3} parent=1 // pred_check_branch
      %44 = sbr.rel (0) target = $region33
    $region32: #{_lambda_.3} parent=1 // pred_region
      _
    $region33: #{_lambda_.3} parent=1 // pred_fallthru
      _
    // Predicated region
    $region34: #{_lambda_.3} parent=1 // pred_check
      _
    $region35: #{_lambda_.3} parent=1 // pred_check_branch
      %46 = sbr.rel (0) target = $region37
    $region36: #{_lambda_.3} parent=1 // pred_region
      _
    $region37: #{_lambda_.3} parent=1 // pred_fallthru
      _
    // Predicated region
    $region38: #{_lambda_.3} parent=1 // pred_check
      _
    $region39: #{_lambda_.3} parent=1 // pred_check_branch
      %48 = sbr.rel (0) target = $region41
    $region40: #{_lambda_.3} parent=1 // pred_region
      _
    $region41: #{_lambda_.3} parent=1 // pred_fallthru
      _
    // Predicated region
    $region42: #{_lambda_.3} parent=1 // pred_check
      _
    $region43: #{_lambda_.3} parent=1 // pred_check_branch
      %50 = sbr.rel (0) target = $region45
    $region44: #{_lambda_.3} parent=1 // pred_region
      _
    $region45: #{_lambda_.3} parent=1 // pred_fallthru
      _
    // Predicated region
    $region46: #{_lambda_.3} parent=1 // pred_check
      _
    $region47: #{_lambda_.3} parent=1 // pred_check_branch
      %52 = sbr.rel (0) target = $region49
    $region48: #{_lambda_.3} parent=1 // pred_region
      %53 = dma.done [#allocation4], 512
    $region49: #{_lambda_.3} parent=1 // pred_fallthru
      _
    %v54 = vld [vmem:[%s0] sm:$0xff]
    %v55 = vld [vmem:[%s0 + $0x8] sm:$0xff]
    %v56 = vld [vmem:[%s3] sm:$0xff]
    %v57 = vld [vmem:[%s3 + $0x8] sm:$0xff]
    %v58 = vld [vmem:[%s3 + $0x10] sm:$0xff]
    %v59 = vld [vmem:[%s3 + $0x18] sm:$0xff]
    %v60 = vld [vmem:[%s3 + $0x20] sm:$0xff]
    %v61 = vld [vmem:[%s3 + $0x28] sm:$0xff]
    %v62 = vld [vmem:[%s3 + $0x30] sm:$0xff]
    %v63 = vld [vmem:[%s3 + $0x38] sm:$0xff]
    %v64 = vld [vmem:[%s1] sm:$0xff]
    %v65 = vld [vmem:[%s1 + $0x8] sm:$0xff]
    %v66 = vld [vmem:[%s3 + $0x40] sm:$0xff]
    %v67 = vld [vmem:[%s3 + $0x48] sm:$0xff]
    %v68 = vld [vmem:[%s3 + $0x50] sm:$0xff]
    %v69 = vld [vmem:[%s3 + $0x58] sm:$0xff]
    %v70 = vld [vmem:[%s3 + $0x60] sm:$0xff]
    %v71 = vld [vmem:[%s3 + $0x68] sm:$0xff]
    %v72 = vld [vmem:[%s3 + $0x70] sm:$0xff]
    %v73 = vld [vmem:[%s3 + $0x78] sm:$0xff]
    %vm74 = vcmask 261120
    %v76 = vsel %vm74, %v64, 0
    %v79 = vsel %vm74, %v65, 0
    %81 = vmatprep.subr.mxu0 %v67
    %82 = vmatpush1.msra.mxu0 %v66
    %83 = vmatprep.subr.mxu0 %v69
    %84 = vmatpush1.msra.mxu0 %v68
    %85 = vmatprep.subr.mxu0 %v71
    %86 = vmatpush1.msra.mxu0 %v70
    %87 = vmatprep.subr.mxu0 %v73
    %88 = vmatpush1.msra.mxu0 %v72
    %89 = vmatprep.subr.mxu0 0.0
    %90 = vmatpush1.msra.mxu0 0.0
    %91 = vmatprep.subr.mxu0 0.0
    %92 = vmatpush1.msra.mxu0 0.0
    %93 = vmatprep.subr.mxu0 0.0
    %94 = vmatpush1.msra.mxu0 0.0
    %95 = vmatprep.subr.mxu0 0.0
    %96 = vmatpush1.msra.mxu0 0.0
    %97 = vmatprep.subr.mxu0 0.0
    %98 = vmatpush1.msra.mxu0 0.0
    %99 = vmatprep.subr.mxu0 0.0
    %100 = vmatpush1.msra.mxu0 0.0
    %101 = vmatprep.subr.mxu0 0.0
    %102 = vmatpush1.msra.mxu0 0.0
    %103 = vmatprep.subr.mxu0 0.0
    %104 = vmatpush1.msra.mxu0 0.0
    %105 = vmatprep.subr.mxu0 0.0
    %106 = vmatpush1.msra.mxu0 0.0
    %107 = vmatprep.subr.mxu0 0.0
    %108 = vmatpush1.msra.mxu0 0.0
    %109 = vmatprep.subr.mxu0 0.0
    %110 = vmatpush1.msra.mxu0 0.0
    %111 = vmatprep.subr.mxu0 0.0
    %112 = vmatpush1.msra.mxu0 0.0
    %113 = vmatprep.subr.mxu0 0.0
    %114 = vmatpush1.msra.mxu0 0.0
    %115 = vmatprep.subr.mxu0 0.0
    %116 = vmatpush1.msra.mxu0 0.0
    %117 = vmatprep.subr.mxu0 0.0
    %118 = vmatpush1.msra.mxu0 0.0
    %119 = vmatprep.subr.mxu0 0.0
    %120 = vmatpush1.msra.mxu0 0.0
    %121 = vmatprep.subr.mxu0 0.0
    %122 = vmatpush1.msra.mxu0 0.0
    %123 = vmatprep.subr.mxu0 0.0
    %124 = vmatpush1.msra.mxu0 0.0
    %125 = vmatprep.subr.mxu0 0.0
    %126 = vmatpush1.msra.mxu0 0.0
    %127 = vmatprep.subr.mxu0 0.0
    %128 = vmatpush1.msra.mxu0 0.0
    %129 = vmatprep.subr.mxu0 0.0
    %130 = vmatpush1.msra.mxu0 0.0
    %131 = vmatprep.subr.mxu0 0.0
    %132 = vmatpush1.msra.mxu0 0.0
    %133 = vmatprep.subr.mxu0 0.0
    %134 = vmatpush1.msra.mxu0 0.0
    %135 = vmatprep.subr.mxu0 0.0
    %136 = vmatpush1.msra.mxu0 0.0
    %137 = vmatprep.subr.mxu0 0.0
    %138 = vmatpush1.msra.mxu0 0.0
    %139 = vmatprep.subr.mxu0 0.0
    %140 = vmatpush1.msra.mxu0 0.0
    %141 = vmatprep.subr.mxu0 0.0
    %142 = vmatpush1.msra.mxu0 0.0
    %143 = vmatprep.subr.mxu0 0.0
    %144 = vmatpush1.msra.mxu0 0.0
    %145 = vmatprep.mubr.f32.mxu0 0.0
    %146 = vmatmul.mubr.f32.gmra.mrb[0].mxu0 %v76
    %v147 = vpop.f32.mrb[0].mxu0
    %v148 = vadd.f32 0.0, %v147
    %v149 = vpop.f32.mrb[0].mxu0
    %v150 = vadd.f32 0.0, %v149
    %151 = vmatprep.mubr.f32.mxu0 0.0
    %152 = vmatmul.mubr.f32.gmra.mrb[0].mxu0 %v79
    %v153 = vpop.f32.mrb[0].mxu0
    %v154 = vadd.f32 0.0, %v153
    %v155 = vpop.f32.mrb[0].mxu0
    %v156 = vadd.f32 0.0, %v155
    %157 = vdwg.mxu0
    %v159 = vsel %vm74, %v54, 0
    %v162 = vsel %vm74, %v55, 0
    %164 = vmatprep.subr.mxu0 %v57
    %165 = vmatpush1.msra.mxu0 %v56
    %166 = vmatprep.subr.mxu0 %v59
    %167 = vmatpush1.msra.mxu0 %v58
    %168 = vmatprep.subr.mxu0 %v61
    %169 = vmatpush1.msra.mxu0 %v60
    %170 = vmatprep.subr.mxu0 %v63
    %171 = vmatpush1.msra.mxu0 %v62
    %172 = vmatprep.subr.mxu0 0.0
    %173 = vmatpush1.msra.mxu0 0.0
    %174 = vmatprep.subr.mxu0 0.0
    %175 = vmatpush1.msra.mxu0 0.0
    %176 = vmatprep.subr.mxu0 0.0
    %177 = vmatpush1.msra.mxu0 0.0
    %178 = vmatprep.subr.mxu0 0.0
    %179 = vmatpush1.msra.mxu0 0.0
    %180 = vmatprep.subr.mxu0 0.0
    %181 = vmatpush1.msra.mxu0 0.0
    %182 = vmatprep.subr.mxu0 0.0
    %183 = vmatpush1.msra.mxu0 0.0
    %184 = vmatprep.subr.mxu0 0.0
    %185 = vmatpush1.msra.mxu0 0.0
    %186 = vmatprep.subr.mxu0 0.0
    %187 = vmatpush1.msra.mxu0 0.0
    %188 = vmatprep.subr.mxu0 0.0
    %189 = vmatpush1.msra.mxu0 0.0
    %190 = vmatprep.subr.mxu0 0.0
    %191 = vmatpush1.msra.mxu0 0.0
    %192 = vmatprep.subr.mxu0 0.0
    %193 = vmatpush1.msra.mxu0 0.0
    %194 = vmatprep.subr.mxu0 0.0
    %195 = vmatpush1.msra.mxu0 0.0
    %196 = vmatprep.subr.mxu0 0.0
    %197 = vmatpush1.msra.mxu0 0.0
    %198 = vmatprep.subr.mxu0 0.0
    %199 = vmatpush1.msra.mxu0 0.0
    %200 = vmatprep.subr.mxu0 0.0
    %201 = vmatpush1.msra.mxu0 0.0
    %202 = vmatprep.subr.mxu0 0.0
    %203 = vmatpush1.msra.mxu0 0.0
    %204 = vmatprep.subr.mxu0 0.0
    %205 = vmatpush1.msra.mxu0 0.0
    %206 = vmatprep.subr.mxu0 0.0
    %207 = vmatpush1.msra.mxu0 0.0
    %208 = vmatprep.subr.mxu0 0.0
    %209 = vmatpush1.msra.mxu0 0.0
    %210 = vmatprep.subr.mxu0 0.0
    %211 = vmatpush1.msra.mxu0 0.0
    %212 = vmatprep.subr.mxu0 0.0
    %213 = vmatpush1.msra.mxu0 0.0
    %214 = vmatprep.subr.mxu0 0.0
    %215 = vmatpush1.msra.mxu0 0.0
    %216 = vmatprep.subr.mxu0 0.0
    %217 = vmatpush1.msra.mxu0 0.0
    %218 = vmatprep.subr.mxu0 0.0
    %219 = vmatpush1.msra.mxu0 0.0
    %220 = vmatprep.subr.mxu0 0.0
    %221 = vmatpush1.msra.mxu0 0.0
    %222 = vmatprep.subr.mxu0 0.0
    %223 = vmatpush1.msra.mxu0 0.0
    %224 = vmatprep.subr.mxu0 0.0
    %225 = vmatpush1.msra.mxu0 0.0
    %226 = vmatprep.subr.mxu0 0.0
    %227 = vmatpush1.msra.mxu0 0.0
    %228 = vmatprep.mubr.f32.mxu0 0.0
    %229 = vmatmul.mubr.f32.gmra.mrb[0].mxu0 %v159
    %v230 = vpop.f32.mrb[0].mxu0
    %v231 = vadd.f32 %v148, %v230
    %v232 = vpop.f32.mrb[0].mxu0
    %v233 = vadd.f32 %v150, %v232
    %234 = vmatprep.mubr.f32.mxu0 0.0
    %235 = vmatmul.mubr.f32.gmra.mrb[0].mxu0 %v162
    %v236 = vpop.f32.mrb[0].mxu0
    %v237 = vadd.f32 %v154, %v236
    %v238 = vpop.f32.mrb[0].mxu0
    %v239 = vadd.f32 %v156, %v238
    %240 = vdwg.mxu0
    %v241 = vld [vmem:[%s6] sm:$0x3]
    %v243 = vlaneseq
    %v244 = vshrl.u32 %v243, 7
    %v245 = vsub.s32 0, %v244
    %v246 = vrot.slane %v241, %v245
    %v247 = vlaneseq
    %v248 = vshrl.u32 %v247, 7
    %v249 = vsub.s32 1, %v248
    %v250 = vrot.slane %v241, %v249
    %v253 = vadd.f32 %v231, %v246
    %v254 = vadd.f32 %v233, %v250
    %v255 = vadd.f32 %v237, %v246
    %v256 = vadd.f32 %v239, %v250
    %v257 = vld [vmem:[#allocation3] sm:$0xff]
    %v258 = vld [vmem:[#allocation3 + $0x8] sm:$0xff]
    %v259 = vld [vmem:[#allocation3 + $0x10] sm:$0xff]
    %v260 = vld [vmem:[#allocation3 + $0x18] sm:$0xff]
    %v261 = vld [vmem:[%s5] sm:$0xff]
    %v262 = vld [vmem:[%s5 + $0x8] sm:$0xff]
    %v263 = vld [vmem:[%s5 + $0x10] sm:$0xff]
    %v264 = vld [vmem:[%s5 + $0x18] sm:$0xff]
    %v265 = vld [vmem:[%s7] sm:$0x1]
    %v266 = vld [vmem:[%s8] sm:$0x1]
    %v268 = vlaneseq
    %v269 = vshrl.u32 %v268, 7
    %v270 = vsub.s32 0, %v269
    %v271 = vrot.slane %v265, %v270
    %v274 = vsel %vm74, 0.0, 0
    %276 = vmatprep.subr.mxu0 0.0
    %277 = vmatpush1.msra.mxu0 %v257
    %278 = vmatprep.subr.mxu0 0.0
    %279 = vmatpush1.msra.mxu0 %v258
    %280 = vmatprep.subr.mxu0 0.0
    %281 = vmatpush1.msra.mxu0 %v259
    %282 = vmatprep.subr.mxu0 0.0
    %283 = vmatpush1.msra.mxu0 %v260
    %284 = vmatprep.subr.mxu0 0.0
    %285 = vmatpush1.msra.mxu0 0.0
    %286 = vmatprep.subr.mxu0 0.0
    %287 = vmatpush1.msra.mxu0 0.0
    %288 = vmatprep.subr.mxu0 0.0
    %289 = vmatpush1.msra.mxu0 0.0
    %290 = vmatprep.subr.mxu0 0.0
    %291 = vmatpush1.msra.mxu0 0.0
    %292 = vmatprep.subr.mxu0 0.0
    %293 = vmatpush1.msra.mxu0 0.0
    %294 = vmatprep.subr.mxu0 0.0
    %295 = vmatpush1.msra.mxu0 0.0
    %296 = vmatprep.subr.mxu0 0.0
    %297 = vmatpush1.msra.mxu0 0.0
    %298 = vmatprep.subr.mxu0 0.0
    %299 = vmatpush1.msra.mxu0 0.0
    %300 = vmatprep.subr.mxu0 0.0
    %301 = vmatpush1.msra.mxu0 0.0
    %302 = vmatprep.subr.mxu0 0.0
    %303 = vmatpush1.msra.mxu0 0.0
    %304 = vmatprep.subr.mxu0 0.0
    %305 = vmatpush1.msra.mxu0 0.0
    %306 = vmatprep.subr.mxu0 0.0
    %307 = vmatpush1.msra.mxu0 0.0
    %308 = vmatprep.subr.mxu0 0.0
    %309 = vmatpush1.msra.mxu0 0.0
    %310 = vmatprep.subr.mxu0 0.0
    %311 = vmatpush1.msra.mxu0 0.0
    %312 = vmatprep.subr.mxu0 0.0
    %313 = vmatpush1.msra.mxu0 0.0
    %314 = vmatprep.subr.mxu0 0.0
    %315 = vmatpush1.msra.mxu0 0.0
    %316 = vmatprep.subr.mxu0 0.0
    %317 = vmatpush1.msra.mxu0 0.0
    %318 = vmatprep.subr.mxu0 0.0
    %319 = vmatpush1.msra.mxu0 0.0
    %320 = vmatprep.subr.mxu0 0.0
    %321 = vmatpush1.msra.mxu0 0.0
    %322 = vmatprep.subr.mxu0 0.0
    %323 = vmatpush1.msra.mxu0 0.0
    %324 = vmatprep.subr.mxu0 0.0
    %325 = vmatpush1.msra.mxu0 0.0
    %326 = vmatprep.subr.mxu0 0.0
    %327 = vmatpush1.msra.mxu0 0.0
    %328 = vmatprep.subr.mxu0 0.0
    %329 = vmatpush1.msra.mxu0 0.0
    %330 = vmatprep.subr.mxu0 0.0
    %331 = vmatpush1.msra.mxu0 0.0
    %332 = vmatprep.subr.mxu0 0.0
    %333 = vmatpush1.msra.mxu0 0.0
    %334 = vmatprep.subr.mxu0 0.0
    %335 = vmatpush1.msra.mxu0 0.0
    %336 = vmatprep.subr.mxu0 0.0
    %337 = vmatpush1.msra.mxu0 0.0
    %338 = vmatprep.subr.mxu0 0.0
    %339 = vmatpush1.msra.mxu0 0.0
    %340 = vmatprep.mubr.f32.mxu0 0.0
    %341 = vmatmul.mubr.f32.gmra.mrb[0].mxu0 %v274
    %v342 = vpop.f32.mrb[0].mxu0
    %v343 = vadd.f32 %v271, %v342
    %v344 = vpop.f32.mrb[0].mxu0
    %345 = vdwg.mxu0
    %v346 = vadd.f32 %v253, %v343
    %v347 = vxor.u32 %v346, 2147483648
    %v348 = vmul.f32 %v347, 1.442695
    %v349 = vpow.pop %v348
    %v350 = vadd.f32 %v349, 1.0
    %v351 = vrcp.pop %v350
    %v352 = vmul.f32 1.0, %v351
    %354 = vrot.lane.b32.xlu0 %v343, 64
    %v355 = vpop.permute.xlu0 %354
    %v357 = vmul.f32 %v352, %v355
    %359 = vrot.lane.b32.xlu0 %v357, 64
    %v360 = vpop.permute.xlu0 %359
    %v362 = vadd.f32 %v253, %v360
    %v363 = vtanh.pop %v362
    %v364 = vsub.f32 1.0, %v352
    %366 = vrot.lane.b32.xlu0 %v363, 96
    %v367 = vpop.permute.xlu0 %366
    %v369 = vmul.f32 %v364, %v367
    %v370 = vmul.f32 %v352, 0.0
    %v371 = vadd.f32 %v369, %v370
    %v373 = vlaneseq
    %v374 = vshrl.u32 %v373, 7
    %v375 = vsub.s32 0, %v374
    %v376 = vrot.slane %v266, %v375
    %378 = vmatprep.subr.mxu0 0.0
    %379 = vmatpush1.msra.mxu0 %v261
    %380 = vmatprep.subr.mxu0 0.0
    %381 = vmatpush1.msra.mxu0 %v262
    %382 = vmatprep.subr.mxu0 0.0
    %383 = vmatpush1.msra.mxu0 %v263
    %384 = vmatprep.subr.mxu0 0.0
    %385 = vmatpush1.msra.mxu0 %v264
    %386 = vmatprep.subr.mxu0 0.0
    %387 = vmatpush1.msra.mxu0 0.0
    %388 = vmatprep.subr.mxu0 0.0
    %389 = vmatpush1.msra.mxu0 0.0
    %390 = vmatprep.subr.mxu0 0.0
    %391 = vmatpush1.msra.mxu0 0.0
    %392 = vmatprep.subr.mxu0 0.0
    %393 = vmatpush1.msra.mxu0 0.0
    %394 = vmatprep.subr.mxu0 0.0
    %395 = vmatpush1.msra.mxu0 0.0
    %396 = vmatprep.subr.mxu0 0.0
    %397 = vmatpush1.msra.mxu0 0.0
    %398 = vmatprep.subr.mxu0 0.0
    %399 = vmatpush1.msra.mxu0 0.0
    %400 = vmatprep.subr.mxu0 0.0
    %401 = vmatpush1.msra.mxu0 0.0
    %402 = vmatprep.subr.mxu0 0.0
    %403 = vmatpush1.msra.mxu0 0.0
    %404 = vmatprep.subr.mxu0 0.0
    %405 = vmatpush1.msra.mxu0 0.0
    %406 = vmatprep.subr.mxu0 0.0
    %407 = vmatpush1.msra.mxu0 0.0
    %408 = vmatprep.subr.mxu0 0.0
    %409 = vmatpush1.msra.mxu0 0.0
    %410 = vmatprep.subr.mxu0 0.0
    %411 = vmatpush1.msra.mxu0 0.0
    %412 = vmatprep.subr.mxu0 0.0
    %413 = vmatpush1.msra.mxu0 0.0
    %414 = vmatprep.subr.mxu0 0.0
    %415 = vmatpush1.msra.mxu0 0.0
    %416 = vmatprep.subr.mxu0 0.0
    %417 = vmatpush1.msra.mxu0 0.0
    %418 = vmatprep.subr.mxu0 0.0
    %419 = vmatpush1.msra.mxu0 0.0
    %420 = vmatprep.subr.mxu0 0.0
    %421 = vmatpush1.msra.mxu0 0.0
    %422 = vmatprep.subr.mxu0 0.0
    %423 = vmatpush1.msra.mxu0 0.0
    %424 = vmatprep.subr.mxu0 0.0
    %425 = vmatpush1.msra.mxu0 0.0
    %426 = vmatprep.subr.mxu0 0.0
    %427 = vmatpush1.msra.mxu0 0.0
    %428 = vmatprep.subr.mxu0 0.0
    %429 = vmatpush1.msra.mxu0 0.0
    %430 = vmatprep.subr.mxu0 0.0
    %431 = vmatpush1.msra.mxu0 0.0
    %432 = vmatprep.subr.mxu0 0.0
    %433 = vmatpush1.msra.mxu0 0.0
    %434 = vmatprep.subr.mxu0 0.0
    %435 = vmatpush1.msra.mxu0 0.0
    %436 = vmatprep.subr.mxu0 0.0
    %437 = vmatpush1.msra.mxu0 0.0
    %438 = vmatprep.subr.mxu0 0.0
    %439 = vmatpush1.msra.mxu0 0.0
    %440 = vmatprep.subr.mxu0 0.0
    %441 = vmatpush1.msra.mxu0 0.0
    %442 = vmatprep.mubr.f32.mxu0 0.0
    %443 = vmatmul.mubr.f32.gmra.mrb[0].mxu0 %v274
    %v444 = vpop.f32.mrb[0].mxu0
    %v445 = vadd.f32 %v376, %v444
    %v446 = vpop.f32.mrb[0].mxu0
    %447 = vdwg.mxu0
    %v449 = vrot.slane %v445, 2
    %450 = vrot.lane.b32.xlu0 %v449, 96
    %v451 = vpop.permute.xlu0 %450
    %v453 = vadd.f32 %v255, %v451
    %v454 = vxor.u32 %v453, 2147483648
    %v455 = vmul.f32 %v454, 1.442695
    %v456 = vpow.pop %v455
    %v457 = vadd.f32 %v456, 1.0
    %v458 = vrcp.pop %v457
    %v459 = vmul.f32 1.0, %v458
    %v460 = vadd.f32 %v256, %v451
    %v461 = vxor.u32 %v460, 2147483648
    %v462 = vmul.f32 %v461, 1.442695
    %v463 = vpow.pop %v462
    %v464 = vadd.f32 %v463, 1.0
    %v465 = vrcp.pop %v464
    %v466 = vmul.f32 1.0, %v465
    %467 = vrot.lane.b32.xlu0 %v449, 32
    %v468 = vpop.permute.xlu0 %467
    %v470 = vmul.f32 %v459, %v468
    %472 = vrot.lane.b32.xlu0 %v470, 64
    %v473 = vpop.permute.xlu0 %472
    %v475 = vadd.f32 %v256, %v473
    %v476 = vtanh.pop %v475
    %v477 = vsub.f32 1.0, %v466
    %479 = vrot.lane.b32.xlu0 %v476, 96
    %v480 = vpop.permute.xlu0 %479
    %v482 = vmul.f32 %v477, %v480
    %v483 = vmul.f32 %v466, 0.0
    %v484 = vadd.f32 %v482, %v483
    %486 = vrot.lane.b32.xlu0 %v371, 96
    %v487 = vpop.permute.xlu0 %486
    %v488 = vsel %vm74, %v487, 0
    %490 = vmatprep.subr.mxu0 0.0
    %491 = vmatpush1.msra.mxu0 %v257
    %492 = vmatprep.subr.mxu0 0.0
    %493 = vmatpush1.msra.mxu0 %v258
    %494 = vmatprep.subr.mxu0 0.0
    %495 = vmatpush1.msra.mxu0 %v259
    %496 = vmatprep.subr.mxu0 0.0
    %497 = vmatpush1.msra.mxu0 %v260
    %498 = vmatprep.subr.mxu0 0.0
    %499 = vmatpush1.msra.mxu0 0.0
    %500 = vmatprep.subr.mxu0 0.0
    %501 = vmatpush1.msra.mxu0 0.0
    %502 = vmatprep.subr.mxu0 0.0
    %503 = vmatpush1.msra.mxu0 0.0
    %504 = vmatprep.subr.mxu0 0.0
    %505 = vmatpush1.msra.mxu0 0.0
    %506 = vmatprep.subr.mxu0 0.0
    %507 = vmatpush1.msra.mxu0 0.0
    %508 = vmatprep.subr.mxu0 0.0
    %509 = vmatpush1.msra.mxu0 0.0
    %510 = vmatprep.subr.mxu0 0.0
    %511 = vmatpush1.msra.mxu0 0.0
    %512 = vmatprep.subr.mxu0 0.0
    %513 = vmatpush1.msra.mxu0 0.0
    %514 = vmatprep.subr.mxu0 0.0
    %515 = vmatpush1.msra.mxu0 0.0
    %516 = vmatprep.subr.mxu0 0.0
    %517 = vmatpush1.msra.mxu0 0.0
    %518 = vmatprep.subr.mxu0 0.0
    %519 = vmatpush1.msra.mxu0 0.0
    %520 = vmatprep.subr.mxu0 0.0
    %521 = vmatpush1.msra.mxu0 0.0
    %522 = vmatprep.subr.mxu0 0.0
    %523 = vmatpush1.msra.mxu0 0.0
    %524 = vmatprep.subr.mxu0 0.0
    %525 = vmatpush1.msra.mxu0 0.0
    %526 = vmatprep.subr.mxu0 0.0
    %527 = vmatpush1.msra.mxu0 0.0
    %528 = vmatprep.subr.mxu0 0.0
    %529 = vmatpush1.msra.mxu0 0.0
    %530 = vmatprep.subr.mxu0 0.0
    %531 = vmatpush1.msra.mxu0 0.0
    %532 = vmatprep.subr.mxu0 0.0
    %533 = vmatpush1.msra.mxu0 0.0
    %534 = vmatprep.subr.mxu0 0.0
    %535 = vmatpush1.msra.mxu0 0.0
    %536 = vmatprep.subr.mxu0 0.0
    %537 = vmatpush1.msra.mxu0 0.0
    %538 = vmatprep.subr.mxu0 0.0
    %539 = vmatpush1.msra.mxu0 0.0
    %540 = vmatprep.subr.mxu0 0.0
    %541 = vmatpush1.msra.mxu0 0.0
    %542 = vmatprep.subr.mxu0 0.0
    %543 = vmatpush1.msra.mxu0 0.0
    %544 = vmatprep.subr.mxu0 0.0
    %545 = vmatpush1.msra.mxu0 0.0
    %546 = vmatprep.subr.mxu0 0.0
    %547 = vmatpush1.msra.mxu0 0.0
    %548 = vmatprep.subr.mxu0 0.0
    %549 = vmatpush1.msra.mxu0 0.0
    %550 = vmatprep.subr.mxu0 0.0
    %551 = vmatpush1.msra.mxu0 0.0
    %552 = vmatprep.subr.mxu0 0.0
    %553 = vmatpush1.msra.mxu0 0.0
    %554 = vmatprep.mubr.f32.mxu0 0.0
    %555 = vmatmul.mubr.f32.gmra.mrb[0].mxu0 %v488
    %v556 = vpop.f32.mrb[0].mxu0
    %v557 = vadd.f32 %v271, %v556
    %v558 = vpop.f32.mrb[0].mxu0
    %559 = vdwg.mxu0
    %v561 = vrot.slane %v557, 6
    %v563 = vadd.f32 %v253, %v561
    %v564 = vxor.u32 %v563, 2147483648
    %v565 = vmul.f32 %v564, 1.442695
    %v566 = vpow.pop %v565
    %v567 = vadd.f32 %v566, 1.0
    %v568 = vrcp.pop %v567
    %v569 = vmul.f32 1.0, %v568
    %570 = vrot.lane.b32.xlu0 %v561, 64
    %v571 = vpop.permute.xlu0 %570
    %v573 = vmul.f32 %v569, %v571
    %575 = vrot.lane.b32.xlu0 %v573, 64
    %v576 = vpop.permute.xlu0 %575
    %v578 = vadd.f32 %v253, %v576
    %v579 = vtanh.pop %v578
    %v580 = vsub.f32 1.0, %v569
    %582 = vrot.lane.b32.xlu0 %v579, 96
    %v583 = vpop.permute.xlu0 %582
    %v585 = vmul.f32 %v580, %v583
    %v586 = vrot.slane %v371, 6
    %v588 = vmul.f32 %v569, %v586
    %v589 = vadd.f32 %v585, %v588
    %v591 = vrot.slane %v484, 6
    %v592 = vsel %vm74, %v591, 0
    %594 = vmatprep.subr.mxu0 0.0
    %595 = vmatpush1.msra.mxu0 %v261
    %596 = vmatprep.subr.mxu0 0.0
    %597 = vmatpush1.msra.mxu0 %v262
    %598 = vmatprep.subr.mxu0 0.0
    %599 = vmatpush1.msra.mxu0 %v263
    %600 = vmatprep.subr.mxu0 0.0
    %601 = vmatpush1.msra.mxu0 %v264
    %602 = vmatprep.subr.mxu0 0.0
    %603 = vmatpush1.msra.mxu0 0.0
    %604 = vmatprep.subr.mxu0 0.0
    %605 = vmatpush1.msra.mxu0 0.0
    %606 = vmatprep.subr.mxu0 0.0
    %607 = vmatpush1.msra.mxu0 0.0
    %608 = vmatprep.subr.mxu0 0.0
    %609 = vmatpush1.msra.mxu0 0.0
    %610 = vmatprep.subr.mxu0 0.0
    %611 = vmatpush1.msra.mxu0 0.0
    %612 = vmatprep.subr.mxu0 0.0
    %613 = vmatpush1.msra.mxu0 0.0
    %614 = vmatprep.subr.mxu0 0.0
    %615 = vmatpush1.msra.mxu0 0.0
    %616 = vmatprep.subr.mxu0 0.0
    %617 = vmatpush1.msra.mxu0 0.0
    %618 = vmatprep.subr.mxu0 0.0
    %619 = vmatpush1.msra.mxu0 0.0
    %620 = vmatprep.subr.mxu0 0.0
    %621 = vmatpush1.msra.mxu0 0.0
    %622 = vmatprep.subr.mxu0 0.0
    %623 = vmatpush1.msra.mxu0 0.0
    %624 = vmatprep.subr.mxu0 0.0
    %625 = vmatpush1.msra.mxu0 0.0
    %626 = vmatprep.subr.mxu0 0.0
    %627 = vmatpush1.msra.mxu0 0.0
    %628 = vmatprep.subr.mxu0 0.0
    %629 = vmatpush1.msra.mxu0 0.0
    %630 = vmatprep.subr.mxu0 0.0
    %631 = vmatpush1.msra.mxu0 0.0
    %632 = vmatprep.subr.mxu0 0.0
    %633 = vmatpush1.msra.mxu0 0.0
    %634 = vmatprep.subr.mxu0 0.0
    %635 = vmatpush1.msra.mxu0 0.0
    %636 = vmatprep.subr.mxu0 0.0
    %637 = vmatpush1.msra.mxu0 0.0
    %638 = vmatprep.subr.mxu0 0.0
    %639 = vmatpush1.msra.mxu0 0.0
    %640 = vmatprep.subr.mxu0 0.0
    %641 = vmatpush1.msra.mxu0 0.0
    %642 = vmatprep.subr.mxu0 0.0
    %643 = vmatpush1.msra.mxu0 0.0
    %644 = vmatprep.subr.mxu0 0.0
    %645 = vmatpush1.msra.mxu0 0.0
    %646 = vmatprep.subr.mxu0 0.0
    %647 = vmatpush1.msra.mxu0 0.0
    %648 = vmatprep.subr.mxu0 0.0
    %649 = vmatpush1.msra.mxu0 0.0
    %650 = vmatprep.subr.mxu0 0.0
    %651 = vmatpush1.msra.mxu0 0.0
    %652 = vmatprep.subr.mxu0 0.0
    %653 = vmatpush1.msra.mxu0 0.0
    %654 = vmatprep.subr.mxu0 0.0
    %655 = vmatpush1.msra.mxu0 0.0
    %656 = vmatprep.subr.mxu0 0.0
    %657 = vmatpush1.msra.mxu0 0.0
    %658 = vmatprep.mubr.f32.mxu0 0.0
    %659 = vmatmul.mubr.f32.gmra.mrb[0].mxu0 %v592
    %v660 = vpop.f32.mrb[0].mxu0
    %v661 = vadd.f32 %v376, %v660
    %v662 = vpop.f32.mrb[0].mxu0
    %663 = vdwg.mxu0
    %v665 = vrot.slane %v661, 4
    %666 = vrot.lane.b32.xlu0 %v665, 96
    %v667 = vpop.permute.xlu0 %666
    %v669 = vadd.f32 %v255, %v667
    %v670 = vxor.u32 %v669, 2147483648
    %v671 = vmul.f32 %v670, 1.442695
    %v672 = vpow.pop %v671
    %v673 = vadd.f32 %v672, 1.0
    %v674 = vrcp.pop %v673
    %v675 = vmul.f32 1.0, %v674
    %v676 = vadd.f32 %v256, %v667
    %v677 = vxor.u32 %v676, 2147483648
    %v678 = vmul.f32 %v677, 1.442695
    %v679 = vpow.pop %v678
    %v680 = vadd.f32 %v679, 1.0
    %v681 = vrcp.pop %v680
    %v682 = vmul.f32 1.0, %v681
    %683 = vrot.lane.b32.xlu0 %v665, 32
    %v684 = vpop.permute.xlu0 %683
    %v686 = vmul.f32 %v675, %v684
    %688 = vrot.lane.b32.xlu0 %v686, 64
    %v689 = vpop.permute.xlu0 %688
    %v691 = vadd.f32 %v256, %v689
    %v692 = vtanh.pop %v691
    %v693 = vsub.f32 1.0, %v682
    %695 = vrot.lane.b32.xlu0 %v692, 96
    %v696 = vpop.permute.xlu0 %695
    %v698 = vmul.f32 %v693, %v696
    %v699 = vrot.slane %v484, 2
    %v701 = vmul.f32 %v682, %v699
    %v702 = vadd.f32 %v698, %v701
    %v704 = vrot.slane %v589, 2
    %705 = vrot.lane.b32.xlu0 %v704, 96
    %v706 = vpop.permute.xlu0 %705
    %v707 = vsel %vm74, %v706, 0
    %709 = vmatprep.subr.mxu0 0.0
    %710 = vmatpush1.msra.mxu0 %v257
    %711 = vmatprep.subr.mxu0 0.0
    %712 = vmatpush1.msra.mxu0 %v258
    %713 = vmatprep.subr.mxu0 0.0
    %714 = vmatpush1.msra.mxu0 %v259
    %715 = vmatprep.subr.mxu0 0.0
    %716 = vmatpush1.msra.mxu0 %v260
    %717 = vmatprep.subr.mxu0 0.0
    %718 = vmatpush1.msra.mxu0 0.0
    %719 = vmatprep.subr.mxu0 0.0
    %720 = vmatpush1.msra.mxu0 0.0
    %721 = vmatprep.subr.mxu0 0.0
    %722 = vmatpush1.msra.mxu0 0.0
    %723 = vmatprep.subr.mxu0 0.0
    %724 = vmatpush1.msra.mxu0 0.0
    %725 = vmatprep.subr.mxu0 0.0
    %726 = vmatpush1.msra.mxu0 0.0
    %727 = vmatprep.subr.mxu0 0.0
    %728 = vmatpush1.msra.mxu0 0.0
    %729 = vmatprep.subr.mxu0 0.0
    %730 = vmatpush1.msra.mxu0 0.0
    %731 = vmatprep.subr.mxu0 0.0
    %732 = vmatpush1.msra.mxu0 0.0
    %733 = vmatprep.subr.mxu0 0.0
    %734 = vmatpush1.msra.mxu0 0.0
    %735 = vmatprep.subr.mxu0 0.0
    %736 = vmatpush1.msra.mxu0 0.0
    %737 = vmatprep.subr.mxu0 0.0
    %738 = vmatpush1.msra.mxu0 0.0
    %739 = vmatprep.subr.mxu0 0.0
    %740 = vmatpush1.msra.mxu0 0.0
    %741 = vmatprep.subr.mxu0 0.0
    %742 = vmatpush1.msra.mxu0 0.0
    %743 = vmatprep.subr.mxu0 0.0
    %744 = vmatpush1.msra.mxu0 0.0
    %745 = vmatprep.subr.mxu0 0.0
    %746 = vmatpush1.msra.mxu0 0.0
    %747 = vmatprep.subr.mxu0 0.0
    %748 = vmatpush1.msra.mxu0 0.0
    %749 = vmatprep.subr.mxu0 0.0
    %750 = vmatpush1.msra.mxu0 0.0
    %751 = vmatprep.subr.mxu0 0.0
    %752 = vmatpush1.msra.mxu0 0.0
    %753 = vmatprep.subr.mxu0 0.0
    %754 = vmatpush1.msra.mxu0 0.0
    %755 = vmatprep.subr.mxu0 0.0
    %756 = vmatpush1.msra.mxu0 0.0
    %757 = vmatprep.subr.mxu0 0.0
    %758 = vmatpush1.msra.mxu0 0.0
    %759 = vmatprep.subr.mxu0 0.0
    %760 = vmatpush1.msra.mxu0 0.0
    %761 = vmatprep.subr.mxu0 0.0
    %762 = vmatpush1.msra.mxu0 0.0
    %763 = vmatprep.subr.mxu0 0.0
    %764 = vmatpush1.msra.mxu0 0.0
    %765 = vmatprep.subr.mxu0 0.0
    %766 = vmatpush1.msra.mxu0 0.0
    %767 = vmatprep.subr.mxu0 0.0
    %768 = vmatpush1.msra.mxu0 0.0
    %769 = vmatprep.subr.mxu0 0.0
    %770 = vmatpush1.msra.mxu0 0.0
    %771 = vmatprep.subr.mxu0 0.0
    %772 = vmatpush1.msra.mxu0 0.0
    %773 = vmatprep.mubr.f32.mxu0 0.0
    %774 = vmatmul.mubr.f32.gmra.mrb[0].mxu0 %v707
    %v775 = vpop.f32.mrb[0].mxu0
    %v776 = vadd.f32 %v271, %v775
    %v777 = vpop.f32.mrb[0].mxu0
    %778 = vdwg.mxu0
    %v780 = vrot.slane %v776, 4
    %v782 = vadd.f32 %v253, %v780
    %v783 = vxor.u32 %v782, 2147483648
    %v784 = vmul.f32 %v783, 1.442695
    %v785 = vpow.pop %v784
    %v786 = vadd.f32 %v785, 1.0
    %v787 = vrcp.pop %v786
    %v788 = vmul.f32 1.0, %v787
    %789 = vrot.lane.b32.xlu0 %v780, 64
    %v790 = vpop.permute.xlu0 %789
    %v792 = vmul.f32 %v788, %v790
    %794 = vrot.lane.b32.xlu0 %v792, 64
    %v795 = vpop.permute.xlu0 %794
    %v797 = vadd.f32 %v253, %v795
    %v798 = vtanh.pop %v797
    %v799 = vsub.f32 1.0, %v788
    %801 = vrot.lane.b32.xlu0 %v798, 96
    %v802 = vpop.permute.xlu0 %801
    %v804 = vmul.f32 %v799, %v802
    %v805 = vrot.slane %v589, 6
    %v807 = vmul.f32 %v788, %v805
    %v808 = vadd.f32 %v804, %v807
    %v810 = vrot.slane %v702, 4
    %v811 = vsel %vm74, %v810, 0
    %813 = vmatprep.subr.mxu0 0.0
    %814 = vmatpush1.msra.mxu0 %v261
    %815 = vmatprep.subr.mxu0 0.0
    %816 = vmatpush1.msra.mxu0 %v262
    %817 = vmatprep.subr.mxu0 0.0
    %818 = vmatpush1.msra.mxu0 %v263
    %819 = vmatprep.subr.mxu0 0.0
    %820 = vmatpush1.msra.mxu0 %v264
    %821 = vmatprep.subr.mxu0 0.0
    %822 = vmatpush1.msra.mxu0 0.0
    %823 = vmatprep.subr.mxu0 0.0
    %824 = vmatpush1.msra.mxu0 0.0
    %825 = vmatprep.subr.mxu0 0.0
    %826 = vmatpush1.msra.mxu0 0.0
    %827 = vmatprep.subr.mxu0 0.0
    %828 = vmatpush1.msra.mxu0 0.0
    %829 = vmatprep.subr.mxu0 0.0
    %830 = vmatpush1.msra.mxu0 0.0
    %831 = vmatprep.subr.mxu0 0.0
    %832 = vmatpush1.msra.mxu0 0.0
    %833 = vmatprep.subr.mxu0 0.0
    %834 = vmatpush1.msra.mxu0 0.0
    %835 = vmatprep.subr.mxu0 0.0
    %836 = vmatpush1.msra.mxu0 0.0
    %837 = vmatprep.subr.mxu0 0.0
    %838 = vmatpush1.msra.mxu0 0.0
    %839 = vmatprep.subr.mxu0 0.0
    %840 = vmatpush1.msra.mxu0 0.0
    %841 = vmatprep.subr.mxu0 0.0
    %842 = vmatpush1.msra.mxu0 0.0
    %843 = vmatprep.subr.mxu0 0.0
    %844 = vmatpush1.msra.mxu0 0.0
    %845 = vmatprep.subr.mxu0 0.0
    %846 = vmatpush1.msra.mxu0 0.0
    %847 = vmatprep.subr.mxu0 0.0
    %848 = vmatpush1.msra.mxu0 0.0
    %849 = vmatprep.subr.mxu0 0.0
    %850 = vmatpush1.msra.mxu0 0.0
    %851 = vmatprep.subr.mxu0 0.0
    %852 = vmatpush1.msra.mxu0 0.0
    %853 = vmatprep.subr.mxu0 0.0
    %854 = vmatpush1.msra.mxu0 0.0
    %855 = vmatprep.subr.mxu0 0.0
    %856 = vmatpush1.msra.mxu0 0.0
    %857 = vmatprep.subr.mxu0 0.0
    %858 = vmatpush1.msra.mxu0 0.0
    %859 = vmatprep.subr.mxu0 0.0
    %860 = vmatpush1.msra.mxu0 0.0
    %861 = vmatprep.subr.mxu0 0.0
    %862 = vmatpush1.msra.mxu0 0.0
    %863 = vmatprep.subr.mxu0 0.0
    %864 = vmatpush1.msra.mxu0 0.0
    %865 = vmatprep.subr.mxu0 0.0
    %866 = vmatpush1.msra.mxu0 0.0
    %867 = vmatprep.subr.mxu0 0.0
    %868 = vmatpush1.msra.mxu0 0.0
    %869 = vmatprep.subr.mxu0 0.0
    %870 = vmatpush1.msra.mxu0 0.0
    %871 = vmatprep.subr.mxu0 0.0
    %872 = vmatpush1.msra.mxu0 0.0
    %873 = vmatprep.subr.mxu0 0.0
    %874 = vmatpush1.msra.mxu0 0.0
    %875 = vmatprep.subr.mxu0 0.0
    %876 = vmatpush1.msra.mxu0 0.0
    %877 = vmatprep.mubr.f32.mxu0 0.0
    %878 = vmatmul.mubr.f32.gmra.mrb[0].mxu0 %v811
    %v879 = vpop.f32.mrb[0].mxu0
    %v880 = vadd.f32 %v376, %v879
    %v881 = vpop.f32.mrb[0].mxu0
    %882 = vdwg.mxu0
    %v884 = vrot.slane %v880, 6
    %885 = vrot.lane.b32.xlu0 %v884, 96
    %v886 = vpop.permute.xlu0 %885
    %v888 = vadd.f32 %v255, %v886
    %v889 = vxor.u32 %v888, 2147483648
    %v890 = vmul.f32 %v889, 1.442695
    %v891 = vpow.pop %v890
    %v892 = vadd.f32 %v891, 1.0
    %v893 = vrcp.pop %v892
    %v894 = vmul.f32 1.0, %v893
    %v895 = vadd.f32 %v256, %v886
    %v896 = vxor.u32 %v895, 2147483648
    %v897 = vmul.f32 %v896, 1.442695
    %v898 = vpow.pop %v897
    %v899 = vadd.f32 %v898, 1.0
    %v900 = vrcp.pop %v899
    %v901 = vmul.f32 1.0, %v900
    %902 = vrot.lane.b32.xlu0 %v884, 32
    %v903 = vpop.permute.xlu0 %902
    %v905 = vmul.f32 %v894, %v903
    %907 = vrot.lane.b32.xlu0 %v905, 64
    %v908 = vpop.permute.xlu0 %907
    %v910 = vadd.f32 %v256, %v908
    %v911 = vtanh.pop %v910
    %v912 = vsub.f32 1.0, %v901
    %914 = vrot.lane.b32.xlu0 %v911, 96
    %v915 = vpop.permute.xlu0 %914
    %v917 = vmul.f32 %v912, %v915
    %v918 = vrot.slane %v702, 2
    %v920 = vmul.f32 %v901, %v918
    %v921 = vadd.f32 %v917, %v920
    %v923 = vrot.slane %v808, 4
    %924 = vrot.lane.b32.xlu0 %v923, 96
    %v925 = vpop.permute.xlu0 %924
    %v926 = vsel %vm74, %v925, 0
    %928 = vmatprep.subr.mxu0 0.0
    %929 = vmatpush1.msra.mxu0 %v257
    %930 = vmatprep.subr.mxu0 0.0
    %931 = vmatpush1.msra.mxu0 %v258
    %932 = vmatprep.subr.mxu0 0.0
    %933 = vmatpush1.msra.mxu0 %v259
    %934 = vmatprep.subr.mxu0 0.0
    %935 = vmatpush1.msra.mxu0 %v260
    %936 = vmatprep.subr.mxu0 0.0
    %937 = vmatpush1.msra.mxu0 0.0
    %938 = vmatprep.subr.mxu0 0.0
    %939 = vmatpush1.msra.mxu0 0.0
    %940 = vmatprep.subr.mxu0 0.0
    %941 = vmatpush1.msra.mxu0 0.0
    %942 = vmatprep.subr.mxu0 0.0
    %943 = vmatpush1.msra.mxu0 0.0
    %944 = vmatprep.subr.mxu0 0.0
    %945 = vmatpush1.msra.mxu0 0.0
    %946 = vmatprep.subr.mxu0 0.0
    %947 = vmatpush1.msra.mxu0 0.0
    %948 = vmatprep.subr.mxu0 0.0
    %949 = vmatpush1.msra.mxu0 0.0
    %950 = vmatprep.subr.mxu0 0.0
    %951 = vmatpush1.msra.mxu0 0.0
    %952 = vmatprep.subr.mxu0 0.0
    %953 = vmatpush1.msra.mxu0 0.0
    %954 = vmatprep.subr.mxu0 0.0
    %955 = vmatpush1.msra.mxu0 0.0
    %956 = vmatprep.subr.mxu0 0.0
    %957 = vmatpush1.msra.mxu0 0.0
    %958 = vmatprep.subr.mxu0 0.0
    %959 = vmatpush1.msra.mxu0 0.0
    %960 = vmatprep.subr.mxu0 0.0
    %961 = vmatpush1.msra.mxu0 0.0
    %962 = vmatprep.subr.mxu0 0.0
    %963 = vmatpush1.msra.mxu0 0.0
    %964 = vmatprep.subr.mxu0 0.0
    %965 = vmatpush1.msra.mxu0 0.0
    %966 = vmatprep.subr.mxu0 0.0
    %967 = vmatpush1.msra.mxu0 0.0
    %968 = vmatprep.subr.mxu0 0.0
    %969 = vmatpush1.msra.mxu0 0.0
    %970 = vmatprep.subr.mxu0 0.0
    %971 = vmatpush1.msra.mxu0 0.0
    %972 = vmatprep.subr.mxu0 0.0
    %973 = vmatpush1.msra.mxu0 0.0
    %974 = vmatprep.subr.mxu0 0.0
    %975 = vmatpush1.msra.mxu0 0.0
    %976 = vmatprep.subr.mxu0 0.0
    %977 = vmatpush1.msra.mxu0 0.0
    %978 = vmatprep.subr.mxu0 0.0
    %979 = vmatpush1.msra.mxu0 0.0
    %980 = vmatprep.subr.mxu0 0.0
    %981 = vmatpush1.msra.mxu0 0.0
    %982 = vmatprep.subr.mxu0 0.0
    %983 = vmatpush1.msra.mxu0 0.0
    %984 = vmatprep.subr.mxu0 0.0
    %985 = vmatpush1.msra.mxu0 0.0
    %986 = vmatprep.subr.mxu0 0.0
    %987 = vmatpush1.msra.mxu0 0.0
    %988 = vmatprep.subr.mxu0 0.0
    %989 = vmatpush1.msra.mxu0 0.0
    %990 = vmatprep.subr.mxu0 0.0
    %991 = vmatpush1.msra.mxu0 0.0
    %992 = vmatprep.mubr.f32.mxu0 0.0
    %993 = vmatmul.mubr.f32.gmra.mrb[0].mxu0 %v926
    %v994 = vpop.f32.mrb[0].mxu0
    %v995 = vadd.f32 %v271, %v994
    %v996 = vpop.f32.mrb[0].mxu0
    %997 = vdwg.mxu0
    %v999 = vrot.slane %v995, 2
    %v1001 = vadd.f32 %v253, %v999
    %v1002 = vxor.u32 %v1001, 2147483648
    %v1003 = vmul.f32 %v1002, 1.442695
    %v1004 = vpow.pop %v1003
    %v1005 = vadd.f32 %v1004, 1.0
    %v1006 = vrcp.pop %v1005
    %v1007 = vmul.f32 1.0, %v1006
    %1008 = vrot.lane.b32.xlu0 %v999, 64
    %v1009 = vpop.permute.xlu0 %1008
    %v1011 = vmul.f32 %v1007, %v1009
    %1013 = vrot.lane.b32.xlu0 %v1011, 64
    %v1014 = vpop.permute.xlu0 %1013
    %v1016 = vadd.f32 %v253, %v1014
    %v1017 = vtanh.pop %v1016
    %v1018 = vsub.f32 1.0, %v1007
    %1020 = vrot.lane.b32.xlu0 %v1017, 96
    %v1021 = vpop.permute.xlu0 %1020
    %v1023 = vmul.f32 %v1018, %v1021
    %v1024 = vrot.slane %v808, 6
    %v1026 = vmul.f32 %v1007, %v1024
    %v1027 = vadd.f32 %v1023, %v1026
    %v1029 = vrot.slane %v921, 2
    %v1030 = vsel %vm74, %v1029, 0
    %1032 = vmatprep.subr.mxu0 0.0
    %1033 = vmatpush1.msra.mxu0 %v261
    %1034 = vmatprep.subr.mxu0 0.0
    %1035 = vmatpush1.msra.mxu0 %v262
    %1036 = vmatprep.subr.mxu0 0.0
    %1037 = vmatpush1.msra.mxu0 %v263
    %1038 = vmatprep.subr.mxu0 0.0
    %1039 = vmatpush1.msra.mxu0 %v264
    %1040 = vmatprep.subr.mxu0 0.0
    %1041 = vmatpush1.msra.mxu0 0.0
    %1042 = vmatprep.subr.mxu0 0.0
    %1043 = vmatpush1.msra.mxu0 0.0
    %1044 = vmatprep.subr.mxu0 0.0
    %1045 = vmatpush1.msra.mxu0 0.0
    %1046 = vmatprep.subr.mxu0 0.0
    %1047 = vmatpush1.msra.mxu0 0.0
    %1048 = vmatprep.subr.mxu0 0.0
    %1049 = vmatpush1.msra.mxu0 0.0
    %1050 = vmatprep.subr.mxu0 0.0
    %1051 = vmatpush1.msra.mxu0 0.0
    %1052 = vmatprep.subr.mxu0 0.0
    %1053 = vmatpush1.msra.mxu0 0.0
    %1054 = vmatprep.subr.mxu0 0.0
    %1055 = vmatpush1.msra.mxu0 0.0
    %1056 = vmatprep.subr.mxu0 0.0
    %1057 = vmatpush1.msra.mxu0 0.0
    %1058 = vmatprep.subr.mxu0 0.0
    %1059 = vmatpush1.msra.mxu0 0.0
    %1060 = vmatprep.subr.mxu0 0.0
    %1061 = vmatpush1.msra.mxu0 0.0
    %1062 = vmatprep.subr.mxu0 0.0
    %1063 = vmatpush1.msra.mxu0 0.0
    %1064 = vmatprep.subr.mxu0 0.0
    %1065 = vmatpush1.msra.mxu0 0.0
    %1066 = vmatprep.subr.mxu0 0.0
    %1067 = vmatpush1.msra.mxu0 0.0
    %1068 = vmatprep.subr.mxu0 0.0
    %1069 = vmatpush1.msra.mxu0 0.0
    %1070 = vmatprep.subr.mxu0 0.0
    %1071 = vmatpush1.msra.mxu0 0.0
    %1072 = vmatprep.subr.mxu0 0.0
    %1073 = vmatpush1.msra.mxu0 0.0
    %1074 = vmatprep.subr.mxu0 0.0
    %1075 = vmatpush1.msra.mxu0 0.0
    %1076 = vmatprep.subr.mxu0 0.0
    %1077 = vmatpush1.msra.mxu0 0.0
    %1078 = vmatprep.subr.mxu0 0.0
    %1079 = vmatpush1.msra.mxu0 0.0
    %1080 = vmatprep.subr.mxu0 0.0
    %1081 = vmatpush1.msra.mxu0 0.0
    %1082 = vmatprep.subr.mxu0 0.0
    %1083 = vmatpush1.msra.mxu0 0.0
    %1084 = vmatprep.subr.mxu0 0.0
    %1085 = vmatpush1.msra.mxu0 0.0
    %1086 = vmatprep.subr.mxu0 0.0
    %1087 = vmatpush1.msra.mxu0 0.0
    %1088 = vmatprep.subr.mxu0 0.0
    %1089 = vmatpush1.msra.mxu0 0.0
    %1090 = vmatprep.subr.mxu0 0.0
    %1091 = vmatpush1.msra.mxu0 0.0
    %1092 = vmatprep.subr.mxu0 0.0
    %1093 = vmatpush1.msra.mxu0 0.0
    %1094 = vmatprep.subr.mxu0 0.0
    %1095 = vmatpush1.msra.mxu0 0.0
    %1096 = vmatprep.mubr.f32.mxu0 0.0
    %1097 = vmatmul.mubr.f32.gmra.mrb[0].mxu0 %v1030
    %v1098 = vpop.f32.mrb[0].mxu0
    %v1099 = vadd.f32 %v376, %v1098
    %v1100 = vpop.f32.mrb[0].mxu0
    %1101 = vdwg.mxu0
    %1103 = vrot.lane.b32.xlu0 %v1099, 96
    %v1104 = vpop.permute.xlu0 %1103
    %v1106 = vadd.f32 %v255, %v1104
    %v1107 = vxor.u32 %v1106, 2147483648
    %v1108 = vmul.f32 %v1107, 1.442695
    %v1109 = vpow.pop %v1108
    %v1110 = vadd.f32 %v1109, 1.0
    %v1111 = vrcp.pop %v1110
    %v1112 = vmul.f32 1.0, %v1111
    %v1113 = vadd.f32 %v256, %v1104
    %v1114 = vxor.u32 %v1113, 2147483648
    %v1115 = vmul.f32 %v1114, 1.442695
    %v1116 = vpow.pop %v1115
    %v1117 = vadd.f32 %v1116, 1.0
    %v1118 = vrcp.pop %v1117
    %v1119 = vmul.f32 1.0, %v1118
    %1120 = vrot.lane.b32.xlu0 %v1099, 32
    %v1121 = vpop.permute.xlu0 %1120
    %v1123 = vmul.f32 %v1112, %v1121
    %1125 = vrot.lane.b32.xlu0 %v1123, 64
    %v1126 = vpop.permute.xlu0 %1125
    %v1128 = vadd.f32 %v256, %v1126
    %v1129 = vtanh.pop %v1128
    %v1130 = vsub.f32 1.0, %v1119
    %1132 = vrot.lane.b32.xlu0 %v1129, 96
    %v1133 = vpop.permute.xlu0 %1132
    %v1135 = vmul.f32 %v1130, %v1133
    %v1137 = vmul.f32 %v1119, %v1029
    %v1138 = vadd.f32 %v1135, %v1137
    %v1140 = vrot.slane %v1027, 6
    %1141 = vrot.lane.b32.xlu0 %v1140, 96
    %v1142 = vpop.permute.xlu0 %1141
    %v1143 = vsel %vm74, %v1142, 0
    %1145 = vmatprep.subr.mxu0 0.0
    %1146 = vmatpush1.msra.mxu0 %v257
    %1147 = vmatprep.subr.mxu0 0.0
    %1148 = vmatpush1.msra.mxu0 %v258
    %1149 = vmatprep.subr.mxu0 0.0
    %1150 = vmatpush1.msra.mxu0 %v259
    %1151 = vmatprep.subr.mxu0 0.0
    %1152 = vmatpush1.msra.mxu0 %v260
    %1153 = vmatprep.subr.mxu0 0.0
    %1154 = vmatpush1.msra.mxu0 0.0
    %1155 = vmatprep.subr.mxu0 0.0
    %1156 = vmatpush1.msra.mxu0 0.0
    %1157 = vmatprep.subr.mxu0 0.0
    %1158 = vmatpush1.msra.mxu0 0.0
    %1159 = vmatprep.subr.mxu0 0.0
    %1160 = vmatpush1.msra.mxu0 0.0
    %1161 = vmatprep.subr.mxu0 0.0
    %1162 = vmatpush1.msra.mxu0 0.0
    %1163 = vmatprep.subr.mxu0 0.0
    %1164 = vmatpush1.msra.mxu0 0.0
    %1165 = vmatprep.subr.mxu0 0.0
    %1166 = vmatpush1.msra.mxu0 0.0
    %1167 = vmatprep.subr.mxu0 0.0
    %1168 = vmatpush1.msra.mxu0 0.0
    %1169 = vmatprep.subr.mxu0 0.0
    %1170 = vmatpush1.msra.mxu0 0.0
    %1171 = vmatprep.subr.mxu0 0.0
    %1172 = vmatpush1.msra.mxu0 0.0
    %1173 = vmatprep.subr.mxu0 0.0
    %1174 = vmatpush1.msra.mxu0 0.0
    %1175 = vmatprep.subr.mxu0 0.0
    %1176 = vmatpush1.msra.mxu0 0.0
    %1177 = vmatprep.subr.mxu0 0.0
    %1178 = vmatpush1.msra.mxu0 0.0
    %1179 = vmatprep.subr.mxu0 0.0
    %1180 = vmatpush1.msra.mxu0 0.0
    %1181 = vmatprep.subr.mxu0 0.0
    %1182 = vmatpush1.msra.mxu0 0.0
    %1183 = vmatprep.subr.mxu0 0.0
    %1184 = vmatpush1.msra.mxu0 0.0
    %1185 = vmatprep.subr.mxu0 0.0
    %1186 = vmatpush1.msra.mxu0 0.0
    %1187 = vmatprep.subr.mxu0 0.0
    %1188 = vmatpush1.msra.mxu0 0.0
    %1189 = vmatprep.subr.mxu0 0.0
    %1190 = vmatpush1.msra.mxu0 0.0
    %1191 = vmatprep.subr.mxu0 0.0
    %1192 = vmatpush1.msra.mxu0 0.0
    %1193 = vmatprep.subr.mxu0 0.0
    %1194 = vmatpush1.msra.mxu0 0.0
    %1195 = vmatprep.subr.mxu0 0.0
    %1196 = vmatpush1.msra.mxu0 0.0
    %1197 = vmatprep.subr.mxu0 0.0
    %1198 = vmatpush1.msra.mxu0 0.0
    %1199 = vmatprep.subr.mxu0 0.0
    %1200 = vmatpush1.msra.mxu0 0.0
    %1201 = vmatprep.subr.mxu0 0.0
    %1202 = vmatpush1.msra.mxu0 0.0
    %1203 = vmatprep.subr.mxu0 0.0
    %1204 = vmatpush1.msra.mxu0 0.0
    %1205 = vmatprep.subr.mxu0 0.0
    %1206 = vmatpush1.msra.mxu0 0.0
    %1207 = vmatprep.subr.mxu0 0.0
    %1208 = vmatpush1.msra.mxu0 0.0
    %1209 = vmatprep.mubr.f32.mxu0 0.0
    %1210 = vmatmul.mubr.f32.gmra.mrb[0].mxu0 %v1143
    %v1211 = vpop.f32.mrb[0].mxu0
    %v1212 = vadd.f32 %v271, %v1211
    %v1213 = vpop.f32.mrb[0].mxu0
    %1214 = vdwg.mxu0
    %v1215 = vadd.f32 %v255, %v1212
    %v1216 = vxor.u32 %v1215, 2147483648
    %v1217 = vmul.f32 %v1216, 1.442695
    %v1218 = vpow.pop %v1217
    %v1219 = vadd.f32 %v1218, 1.0
    %v1220 = vrcp.pop %v1219
    %v1221 = vmul.f32 1.0, %v1220
    %1223 = vrot.lane.b32.xlu0 %v1212, 64
    %v1224 = vpop.permute.xlu0 %1223
    %v1226 = vmul.f32 %v1221, %v1224
    %1228 = vrot.lane.b32.xlu0 %v1226, 64
    %v1229 = vpop.permute.xlu0 %1228
    %v1231 = vadd.f32 %v255, %v1229
    %v1232 = vtanh.pop %v1231
    %v1233 = vsub.f32 1.0, %v1221
    %1235 = vrot.lane.b32.xlu0 %v1232, 96
    %v1236 = vpop.permute.xlu0 %1235
    %v1238 = vmul.f32 %v1233, %v1236
    %v1240 = vmul.f32 %v1221, %v1140
    %v1241 = vadd.f32 %v1238, %v1240
    %v1243 = vsel %vm74, %v1138, 0
    %1245 = vmatprep.subr.mxu0 0.0
    %1246 = vmatpush1.msra.mxu0 %v261
    %1247 = vmatprep.subr.mxu0 0.0
    %1248 = vmatpush1.msra.mxu0 %v262
    %1249 = vmatprep.subr.mxu0 0.0
    %1250 = vmatpush1.msra.mxu0 %v263
    %1251 = vmatprep.subr.mxu0 0.0
    %1252 = vmatpush1.msra.mxu0 %v264
    %1253 = vmatprep.subr.mxu0 0.0
    %1254 = vmatpush1.msra.mxu0 0.0
    %1255 = vmatprep.subr.mxu0 0.0
    %1256 = vmatpush1.msra.mxu0 0.0
    %1257 = vmatprep.subr.mxu0 0.0
    %1258 = vmatpush1.msra.mxu0 0.0
    %1259 = vmatprep.subr.mxu0 0.0
    %1260 = vmatpush1.msra.mxu0 0.0
    %1261 = vmatprep.subr.mxu0 0.0
    %1262 = vmatpush1.msra.mxu0 0.0
    %1263 = vmatprep.subr.mxu0 0.0
    %1264 = vmatpush1.msra.mxu0 0.0
    %1265 = vmatprep.subr.mxu0 0.0
    %1266 = vmatpush1.msra.mxu0 0.0
    %1267 = vmatprep.subr.mxu0 0.0
    %1268 = vmatpush1.msra.mxu0 0.0
    %1269 = vmatprep.subr.mxu0 0.0
    %1270 = vmatpush1.msra.mxu0 0.0
    %1271 = vmatprep.subr.mxu0 0.0
    %1272 = vmatpush1.msra.mxu0 0.0
    %1273 = vmatprep.subr.mxu0 0.0
    %1274 = vmatpush1.msra.mxu0 0.0
    %1275 = vmatprep.subr.mxu0 0.0
    %1276 = vmatpush1.msra.mxu0 0.0
    %1277 = vmatprep.subr.mxu0 0.0
    %1278 = vmatpush1.msra.mxu0 0.0
    %1279 = vmatprep.subr.mxu0 0.0
    %1280 = vmatpush1.msra.mxu0 0.0
    %1281 = vmatprep.subr.mxu0 0.0
    %1282 = vmatpush1.msra.mxu0 0.0
    %1283 = vmatprep.subr.mxu0 0.0
    %1284 = vmatpush1.msra.mxu0 0.0
    %1285 = vmatprep.subr.mxu0 0.0
    %1286 = vmatpush1.msra.mxu0 0.0
    %1287 = vmatprep.subr.mxu0 0.0
    %1288 = vmatpush1.msra.mxu0 0.0
    %1289 = vmatprep.subr.mxu0 0.0
    %1290 = vmatpush1.msra.mxu0 0.0
    %1291 = vmatprep.subr.mxu0 0.0
    %1292 = vmatpush1.msra.mxu0 0.0
    %1293 = vmatprep.subr.mxu0 0.0
    %1294 = vmatpush1.msra.mxu0 0.0
    %1295 = vmatprep.subr.mxu0 0.0
    %1296 = vmatpush1.msra.mxu0 0.0
    %1297 = vmatprep.subr.mxu0 0.0
    %1298 = vmatpush1.msra.mxu0 0.0
    %1299 = vmatprep.subr.mxu0 0.0
    %1300 = vmatpush1.msra.mxu0 0.0
    %1301 = vmatprep.subr.mxu0 0.0
    %1302 = vmatpush1.msra.mxu0 0.0
    %1303 = vmatprep.subr.mxu0 0.0
    %1304 = vmatpush1.msra.mxu0 0.0
    %1305 = vmatprep.subr.mxu0 0.0
    %1306 = vmatpush1.msra.mxu0 0.0
    %1307 = vmatprep.subr.mxu0 0.0
    %1308 = vmatpush1.msra.mxu0 0.0
    %1309 = vmatprep.mubr.f32.mxu0 0.0
    %1310 = vmatmul.mubr.f32.gmra.mrb[0].mxu0 %v1243
    %v1311 = vpop.f32.mrb[0].mxu0
    %v1312 = vadd.f32 %v376, %v1311
    %v1313 = vpop.f32.mrb[0].mxu0
    %1314 = vdwg.mxu0
    %v1316 = vrot.slane %v1312, 2
    %1317 = vrot.lane.b32.xlu0 %v1316, 96
    %v1318 = vpop.permute.xlu0 %1317
    %v1320 = vadd.f32 %v253, %v1318
    %v1321 = vxor.u32 %v1320, 2147483648
    %v1322 = vmul.f32 %v1321, 1.442695
    %v1323 = vpow.pop %v1322
    %v1324 = vadd.f32 %v1323, 1.0
    %v1325 = vrcp.pop %v1324
    %v1326 = vmul.f32 1.0, %v1325
    %v1327 = vadd.f32 %v254, %v1318
    %v1328 = vxor.u32 %v1327, 2147483648
    %v1329 = vmul.f32 %v1328, 1.442695
    %v1330 = vpow.pop %v1329
    %v1331 = vadd.f32 %v1330, 1.0
    %v1332 = vrcp.pop %v1331
    %v1333 = vmul.f32 1.0, %v1332
    %1334 = vrot.lane.b32.xlu0 %v1316, 32
    %v1335 = vpop.permute.xlu0 %1334
    %v1337 = vmul.f32 %v1326, %v1335
    %1339 = vrot.lane.b32.xlu0 %v1337, 64
    %v1340 = vpop.permute.xlu0 %1339
    %v1342 = vadd.f32 %v254, %v1340
    %v1343 = vtanh.pop %v1342
    %v1344 = vsub.f32 1.0, %v1333
    %1346 = vrot.lane.b32.xlu0 %v1343, 96
    %v1347 = vpop.permute.xlu0 %1346
    %v1349 = vmul.f32 %v1344, %v1347
    %v1350 = vrot.slane %v1138, 2
    %v1352 = vmul.f32 %v1333, %v1350
    %v1353 = vadd.f32 %v1349, %v1352
    %1355 = vrot.lane.b32.xlu0 %v1241, 96
    %v1356 = vpop.permute.xlu0 %1355
    %v1357 = vsel %vm74, %v1356, 0
    %1359 = vmatprep.subr.mxu0 0.0
    %1360 = vmatpush1.msra.mxu0 %v257
    %1361 = vmatprep.subr.mxu0 0.0
    %1362 = vmatpush1.msra.mxu0 %v258
    %1363 = vmatprep.subr.mxu0 0.0
    %1364 = vmatpush1.msra.mxu0 %v259
    %1365 = vmatprep.subr.mxu0 0.0
    %1366 = vmatpush1.msra.mxu0 %v260
    %1367 = vmatprep.subr.mxu0 0.0
    %1368 = vmatpush1.msra.mxu0 0.0
    %1369 = vmatprep.subr.mxu0 0.0
    %1370 = vmatpush1.msra.mxu0 0.0
    %1371 = vmatprep.subr.mxu0 0.0
    %1372 = vmatpush1.msra.mxu0 0.0
    %1373 = vmatprep.subr.mxu0 0.0
    %1374 = vmatpush1.msra.mxu0 0.0
    %1375 = vmatprep.subr.mxu0 0.0
    %1376 = vmatpush1.msra.mxu0 0.0
    %1377 = vmatprep.subr.mxu0 0.0
    %1378 = vmatpush1.msra.mxu0 0.0
    %1379 = vmatprep.subr.mxu0 0.0
    %1380 = vmatpush1.msra.mxu0 0.0
    %1381 = vmatprep.subr.mxu0 0.0
    %1382 = vmatpush1.msra.mxu0 0.0
    %1383 = vmatprep.subr.mxu0 0.0
    %1384 = vmatpush1.msra.mxu0 0.0
    %1385 = vmatprep.subr.mxu0 0.0
    %1386 = vmatpush1.msra.mxu0 0.0
    %1387 = vmatprep.subr.mxu0 0.0
    %1388 = vmatpush1.msra.mxu0 0.0
    %1389 = vmatprep.subr.mxu0 0.0
    %1390 = vmatpush1.msra.mxu0 0.0
    %1391 = vmatprep.subr.mxu0 0.0
    %1392 = vmatpush1.msra.mxu0 0.0
    %1393 = vmatprep.subr.mxu0 0.0
    %1394 = vmatpush1.msra.mxu0 0.0
    %1395 = vmatprep.subr.mxu0 0.0
    %1396 = vmatpush1.msra.mxu0 0.0
    %1397 = vmatprep.subr.mxu0 0.0
    %1398 = vmatpush1.msra.mxu0 0.0
    %1399 = vmatprep.subr.mxu0 0.0
    %1400 = vmatpush1.msra.mxu0 0.0
    %1401 = vmatprep.subr.mxu0 0.0
    %1402 = vmatpush1.msra.mxu0 0.0
    %1403 = vmatprep.subr.mxu0 0.0
    %1404 = vmatpush1.msra.mxu0 0.0
    %1405 = vmatprep.subr.mxu0 0.0
    %1406 = vmatpush1.msra.mxu0 0.0
    %1407 = vmatprep.subr.mxu0 0.0
    %1408 = vmatpush1.msra.mxu0 0.0
    %1409 = vmatprep.subr.mxu0 0.0
    %1410 = vmatpush1.msra.mxu0 0.0
    %1411 = vmatprep.subr.mxu0 0.0
    %1412 = vmatpush1.msra.mxu0 0.0
    %1413 = vmatprep.subr.mxu0 0.0
    %1414 = vmatpush1.msra.mxu0 0.0
    %1415 = vmatprep.subr.mxu0 0.0
    %1416 = vmatpush1.msra.mxu0 0.0
    %1417 = vmatprep.subr.mxu0 0.0
    %1418 = vmatpush1.msra.mxu0 0.0
    %1419 = vmatprep.subr.mxu0 0.0
    %1420 = vmatpush1.msra.mxu0 0.0
    %1421 = vmatprep.subr.mxu0 0.0
    %1422 = vmatpush1.msra.mxu0 0.0
    %1423 = vmatprep.mubr.f32.mxu0 0.0
    %1424 = vmatmul.mubr.f32.gmra.mrb[0].mxu0 %v1357
    %v1425 = vpop.f32.mrb[0].mxu0
    %v1426 = vadd.f32 %v271, %v1425
    %v1427 = vpop.f32.mrb[0].mxu0
    %1428 = vdwg.mxu0
    %v1430 = vrot.slane %v1426, 6
    %v1432 = vadd.f32 %v255, %v1430
    %v1433 = vxor.u32 %v1432, 2147483648
    %v1434 = vmul.f32 %v1433, 1.442695
    %v1435 = vpow.pop %v1434
    %v1436 = vadd.f32 %v1435, 1.0
    %v1437 = vrcp.pop %v1436
    %v1438 = vmul.f32 1.0, %v1437
    %1439 = vrot.lane.b32.xlu0 %v1430, 64
    %v1440 = vpop.permute.xlu0 %1439
    %v1442 = vmul.f32 %v1438, %v1440
    %1444 = vrot.lane.b32.xlu0 %v1442, 64
    %v1445 = vpop.permute.xlu0 %1444
    %v1447 = vadd.f32 %v255, %v1445
    %v1448 = vtanh.pop %v1447
    %v1449 = vsub.f32 1.0, %v1438
    %1451 = vrot.lane.b32.xlu0 %v1448, 96
    %v1452 = vpop.permute.xlu0 %1451
    %v1454 = vmul.f32 %v1449, %v1452
    %v1455 = vrot.slane %v1241, 6
    %v1457 = vmul.f32 %v1438, %v1455
    %v1458 = vadd.f32 %v1454, %v1457
    %v1460 = vrot.slane %v1353, 6
    %v1461 = vsel %vm74, %v1460, 0
    %1463 = vmatprep.subr.mxu0 0.0
    %1464 = vmatpush1.msra.mxu0 %v261
    %1465 = vmatprep.subr.mxu0 0.0
    %1466 = vmatpush1.msra.mxu0 %v262
    %1467 = vmatprep.subr.mxu0 0.0
    %1468 = vmatpush1.msra.mxu0 %v263
    %1469 = vmatprep.subr.mxu0 0.0
    %1470 = vmatpush1.msra.mxu0 %v264
    %1471 = vmatprep.subr.mxu0 0.0
    %1472 = vmatpush1.msra.mxu0 0.0
    %1473 = vmatprep.subr.mxu0 0.0
    %1474 = vmatpush1.msra.mxu0 0.0
    %1475 = vmatprep.subr.mxu0 0.0
    %1476 = vmatpush1.msra.mxu0 0.0
    %1477 = vmatprep.subr.mxu0 0.0
    %1478 = vmatpush1.msra.mxu0 0.0
    %1479 = vmatprep.subr.mxu0 0.0
    %1480 = vmatpush1.msra.mxu0 0.0
    %1481 = vmatprep.subr.mxu0 0.0
    %1482 = vmatpush1.msra.mxu0 0.0
    %1483 = vmatprep.subr.mxu0 0.0
    %1484 = vmatpush1.msra.mxu0 0.0
    %1485 = vmatprep.subr.mxu0 0.0
    %1486 = vmatpush1.msra.mxu0 0.0
    %1487 = vmatprep.subr.mxu0 0.0
    %1488 = vmatpush1.msra.mxu0 0.0
    %1489 = vmatprep.subr.mxu0 0.0
    %1490 = vmatpush1.msra.mxu0 0.0
    %1491 = vmatprep.subr.mxu0 0.0
    %1492 = vmatpush1.msra.mxu0 0.0
    %1493 = vmatprep.subr.mxu0 0.0
    %1494 = vmatpush1.msra.mxu0 0.0
    %1495 = vmatprep.subr.mxu0 0.0
    %1496 = vmatpush1.msra.mxu0 0.0
    %1497 = vmatprep.subr.mxu0 0.0
    %1498 = vmatpush1.msra.mxu0 0.0
    %1499 = vmatprep.subr.mxu0 0.0
    %1500 = vmatpush1.msra.mxu0 0.0
    %1501 = vmatprep.subr.mxu0 0.0
    %1502 = vmatpush1.msra.mxu0 0.0
    %1503 = vmatprep.subr.mxu0 0.0
    %1504 = vmatpush1.msra.mxu0 0.0
    %1505 = vmatprep.subr.mxu0 0.0
    %1506 = vmatpush1.msra.mxu0 0.0
    %1507 = vmatprep.subr.mxu0 0.0
    %1508 = vmatpush1.msra.mxu0 0.0
    %1509 = vmatprep.subr.mxu0 0.0
    %1510 = vmatpush1.msra.mxu0 0.0
    %1511 = vmatprep.subr.mxu0 0.0
    %1512 = vmatpush1.msra.mxu0 0.0
    %1513 = vmatprep.subr.mxu0 0.0
    %1514 = vmatpush1.msra.mxu0 0.0
    %1515 = vmatprep.subr.mxu0 0.0
    %1516 = vmatpush1.msra.mxu0 0.0
    %1517 = vmatprep.subr.mxu0 0.0
    %1518 = vmatpush1.msra.mxu0 0.0
    %1519 = vmatprep.subr.mxu0 0.0
    %1520 = vmatpush1.msra.mxu0 0.0
    %1521 = vmatprep.subr.mxu0 0.0
    %1522 = vmatpush1.msra.mxu0 0.0
    %1523 = vmatprep.subr.mxu0 0.0
    %1524 = vmatpush1.msra.mxu0 0.0
    %1525 = vmatprep.subr.mxu0 0.0
    %1526 = vmatpush1.msra.mxu0 0.0
    %1527 = vmatprep.mubr.f32.mxu0 0.0
    %1528 = vmatmul.mubr.f32.gmra.mrb[0].mxu0 %v1461
    %v1529 = vpop.f32.mrb[0].mxu0
    %v1530 = vadd.f32 %v376, %v1529
    %v1531 = vpop.f32.mrb[0].mxu0
    %1532 = vdwg.mxu0
    %v1534 = vrot.slane %v1530, 4
    %1535 = vrot.lane.b32.xlu0 %v1534, 96
    %v1536 = vpop.permute.xlu0 %1535
    %v1538 = vadd.f32 %v253, %v1536
    %v1539 = vxor.u32 %v1538, 2147483648
    %v1540 = vmul.f32 %v1539, 1.442695
    %v1541 = vpow.pop %v1540
    %v1542 = vadd.f32 %v1541, 1.0
    %v1543 = vrcp.pop %v1542
    %v1544 = vmul.f32 1.0, %v1543
    %v1545 = vadd.f32 %v254, %v1536
    %v1546 = vxor.u32 %v1545, 2147483648
    %v1547 = vmul.f32 %v1546, 1.442695
    %v1548 = vpow.pop %v1547
    %v1549 = vadd.f32 %v1548, 1.0
    %v1550 = vrcp.pop %v1549
    %v1551 = vmul.f32 1.0, %v1550
    %1552 = vrot.lane.b32.xlu0 %v1534, 32
    %v1553 = vpop.permute.xlu0 %1552
    %v1555 = vmul.f32 %v1544, %v1553
    %1557 = vrot.lane.b32.xlu0 %v1555, 64
    %v1558 = vpop.permute.xlu0 %1557
    %v1560 = vadd.f32 %v254, %v1558
    %v1561 = vtanh.pop %v1560
    %v1562 = vsub.f32 1.0, %v1551
    %1564 = vrot.lane.b32.xlu0 %v1561, 96
    %v1565 = vpop.permute.xlu0 %1564
    %v1567 = vmul.f32 %v1562, %v1565
    %v1568 = vrot.slane %v1353, 2
    %v1570 = vmul.f32 %v1551, %v1568
    %v1571 = vadd.f32 %v1567, %v1570
    %v1573 = vrot.slane %v1458, 2
    %1574 = vrot.lane.b32.xlu0 %v1573, 96
    %v1575 = vpop.permute.xlu0 %1574
    %v1576 = vsel %vm74, %v1575, 0
    %1578 = vmatprep.subr.mxu0 0.0
    %1579 = vmatpush1.msra.mxu0 %v257
    %1580 = vmatprep.subr.mxu0 0.0
    %1581 = vmatpush1.msra.mxu0 %v258
    %1582 = vmatprep.subr.mxu0 0.0
    %1583 = vmatpush1.msra.mxu0 %v259
    %1584 = vmatprep.subr.mxu0 0.0
    %1585 = vmatpush1.msra.mxu0 %v260
    %1586 = vmatprep.subr.mxu0 0.0
    %1587 = vmatpush1.msra.mxu0 0.0
    %1588 = vmatprep.subr.mxu0 0.0
    %1589 = vmatpush1.msra.mxu0 0.0
    %1590 = vmatprep.subr.mxu0 0.0
    %1591 = vmatpush1.msra.mxu0 0.0
    %1592 = vmatprep.subr.mxu0 0.0
    %1593 = vmatpush1.msra.mxu0 0.0
    %1594 = vmatprep.subr.mxu0 0.0
    %1595 = vmatpush1.msra.mxu0 0.0
    %1596 = vmatprep.subr.mxu0 0.0
    %1597 = vmatpush1.msra.mxu0 0.0
    %1598 = vmatprep.subr.mxu0 0.0
    %1599 = vmatpush1.msra.mxu0 0.0
    %1600 = vmatprep.subr.mxu0 0.0
    %1601 = vmatpush1.msra.mxu0 0.0
    %1602 = vmatprep.subr.mxu0 0.0
    %1603 = vmatpush1.msra.mxu0 0.0
    %1604 = vmatprep.subr.mxu0 0.0
    %1605 = vmatpush1.msra.mxu0 0.0
    %1606 = vmatprep.subr.mxu0 0.0
    %1607 = vmatpush1.msra.mxu0 0.0
    %1608 = vmatprep.subr.mxu0 0.0
    %1609 = vmatpush1.msra.mxu0 0.0
    %1610 = vmatprep.subr.mxu0 0.0
    %1611 = vmatpush1.msra.mxu0 0.0
    %1612 = vmatprep.subr.mxu0 0.0
    %1613 = vmatpush1.msra.mxu0 0.0
    %1614 = vmatprep.subr.mxu0 0.0
    %1615 = vmatpush1.msra.mxu0 0.0
    %1616 = vmatprep.subr.mxu0 0.0
    %1617 = vmatpush1.msra.mxu0 0.0
    %1618 = vmatprep.subr.mxu0 0.0
    %1619 = vmatpush1.msra.mxu0 0.0
    %1620 = vmatprep.subr.mxu0 0.0
    %1621 = vmatpush1.msra.mxu0 0.0
    %1622 = vmatprep.subr.mxu0 0.0
    %1623 = vmatpush1.msra.mxu0 0.0
    %1624 = vmatprep.subr.mxu0 0.0
    %1625 = vmatpush1.msra.mxu0 0.0
    %1626 = vmatprep.subr.mxu0 0.0
    %1627 = vmatpush1.msra.mxu0 0.0
    %1628 = vmatprep.subr.mxu0 0.0
    %1629 = vmatpush1.msra.mxu0 0.0
    %1630 = vmatprep.subr.mxu0 0.0
    %1631 = vmatpush1.msra.mxu0 0.0
    %1632 = vmatprep.subr.mxu0 0.0
    %1633 = vmatpush1.msra.mxu0 0.0
    %1634 = vmatprep.subr.mxu0 0.0
    %1635 = vmatpush1.msra.mxu0 0.0
    %1636 = vmatprep.subr.mxu0 0.0
    %1637 = vmatpush1.msra.mxu0 0.0
    %1638 = vmatprep.subr.mxu0 0.0
    %1639 = vmatpush1.msra.mxu0 0.0
    %1640 = vmatprep.subr.mxu0 0.0
    %1641 = vmatpush1.msra.mxu0 0.0
    %1642 = vmatprep.mubr.f32.mxu0 0.0
    %1643 = vmatmul.mubr.f32.gmra.mrb[0].mxu0 %v1576
    %v1644 = vpop.f32.mrb[0].mxu0
    %v1645 = vadd.f32 %v271, %v1644
    %v1646 = vpop.f32.mrb[0].mxu0
    %1647 = vdwg.mxu0
    %v1649 = vrot.slane %v1645, 4
    %v1651 = vadd.f32 %v255, %v1649
    %v1652 = vxor.u32 %v1651, 2147483648
    %v1653 = vmul.f32 %v1652, 1.442695
    %v1654 = vpow.pop %v1653
    %v1655 = vadd.f32 %v1654, 1.0
    %v1656 = vrcp.pop %v1655
    %v1657 = vmul.f32 1.0, %v1656
    %1658 = vrot.lane.b32.xlu0 %v1649, 64
    %v1659 = vpop.permute.xlu0 %1658
    %v1661 = vmul.f32 %v1657, %v1659
    %1663 = vrot.lane.b32.xlu0 %v1661, 64
    %v1664 = vpop.permute.xlu0 %1663
    %v1666 = vadd.f32 %v255, %v1664
    %v1667 = vtanh.pop %v1666
    %v1668 = vsub.f32 1.0, %v1657
    %1670 = vrot.lane.b32.xlu0 %v1667, 96
    %v1671 = vpop.permute.xlu0 %1670
    %v1673 = vmul.f32 %v1668, %v1671
    %v1674 = vrot.slane %v1458, 6
    %v1676 = vmul.f32 %v1657, %v1674
    %v1677 = vadd.f32 %v1673, %v1676
    %v1679 = vrot.slane %v1571, 4
    %v1680 = vsel %vm74, %v1679, 0
    %1682 = vmatprep.subr.mxu0 0.0
    %1683 = vmatpush1.msra.mxu0 %v261
    %1684 = vmatprep.subr.mxu0 0.0
    %1685 = vmatpush1.msra.mxu0 %v262
    %1686 = vmatprep.subr.mxu0 0.0
    %1687 = vmatpush1.msra.mxu0 %v263
    %1688 = vmatprep.subr.mxu0 0.0
    %1689 = vmatpush1.msra.mxu0 %v264
    %1690 = vmatprep.subr.mxu0 0.0
    %1691 = vmatpush1.msra.mxu0 0.0
    %1692 = vmatprep.subr.mxu0 0.0
    %1693 = vmatpush1.msra.mxu0 0.0
    %1694 = vmatprep.subr.mxu0 0.0
    %1695 = vmatpush1.msra.mxu0 0.0
    %1696 = vmatprep.subr.mxu0 0.0
    %1697 = vmatpush1.msra.mxu0 0.0
    %1698 = vmatprep.subr.mxu0 0.0
    %1699 = vmatpush1.msra.mxu0 0.0
    %1700 = vmatprep.subr.mxu0 0.0
    %1701 = vmatpush1.msra.mxu0 0.0
    %1702 = vmatprep.subr.mxu0 0.0
    %1703 = vmatpush1.msra.mxu0 0.0
    %1704 = vmatprep.subr.mxu0 0.0
    %1705 = vmatpush1.msra.mxu0 0.0
    %1706 = vmatprep.subr.mxu0 0.0
    %1707 = vmatpush1.msra.mxu0 0.0
    %1708 = vmatprep.subr.mxu0 0.0
    %1709 = vmatpush1.msra.mxu0 0.0
    %1710 = vmatprep.subr.mxu0 0.0
    %1711 = vmatpush1.msra.mxu0 0.0
    %1712 = vmatprep.subr.mxu0 0.0
    %1713 = vmatpush1.msra.mxu0 0.0
    %1714 = vmatprep.subr.mxu0 0.0
    %1715 = vmatpush1.msra.mxu0 0.0
    %1716 = vmatprep.subr.mxu0 0.0
    %1717 = vmatpush1.msra.mxu0 0.0
    %1718 = vmatprep.subr.mxu0 0.0
    %1719 = vmatpush1.msra.mxu0 0.0
    %1720 = vmatprep.subr.mxu0 0.0
    %1721 = vmatpush1.msra.mxu0 0.0
    %1722 = vmatprep.subr.mxu0 0.0
    %1723 = vmatpush1.msra.mxu0 0.0
    %1724 = vmatprep.subr.mxu0 0.0
    %1725 = vmatpush1.msra.mxu0 0.0
    %1726 = vmatprep.subr.mxu0 0.0
    %1727 = vmatpush1.msra.mxu0 0.0
    %1728 = vmatprep.subr.mxu0 0.0
    %1729 = vmatpush1.msra.mxu0 0.0
    %1730 = vmatprep.subr.mxu0 0.0
    %1731 = vmatpush1.msra.mxu0 0.0
    %1732 = vmatprep.subr.mxu0 0.0
    %1733 = vmatpush1.msra.mxu0 0.0
    %1734 = vmatprep.subr.mxu0 0.0
    %1735 = vmatpush1.msra.mxu0 0.0
    %1736 = vmatprep.subr.mxu0 0.0
    %1737 = vmatpush1.msra.mxu0 0.0
    %1738 = vmatprep.subr.mxu0 0.0
    %1739 = vmatpush1.msra.mxu0 0.0
    %1740 = vmatprep.subr.mxu0 0.0
    %1741 = vmatpush1.msra.mxu0 0.0
    %1742 = vmatprep.subr.mxu0 0.0
    %1743 = vmatpush1.msra.mxu0 0.0
    %1744 = vmatprep.subr.mxu0 0.0
    %1745 = vmatpush1.msra.mxu0 0.0
    %1746 = vmatprep.mubr.f32.mxu0 0.0
    %1747 = vmatmul.mubr.f32.gmra.mrb[0].mxu0 %v1680
    %v1748 = vpop.f32.mrb[0].mxu0
    %v1749 = vadd.f32 %v376, %v1748
    %v1750 = vpop.f32.mrb[0].mxu0
    %1751 = vdwg.mxu0
    %v1753 = vrot.slane %v1749, 6
    %1754 = vrot.lane.b32.xlu0 %v1753, 96
    %v1755 = vpop.permute.xlu0 %1754
    %v1757 = vadd.f32 %v253, %v1755
    %v1758 = vxor.u32 %v1757, 2147483648
    %v1759 = vmul.f32 %v1758, 1.442695
    %v1760 = vpow.pop %v1759
    %v1761 = vadd.f32 %v1760, 1.0
    %v1762 = vrcp.pop %v1761
    %v1763 = vmul.f32 1.0, %v1762
    %v1764 = vadd.f32 %v254, %v1755
    %v1765 = vxor.u32 %v1764, 2147483648
    %v1766 = vmul.f32 %v1765, 1.442695
    %v1767 = vpow.pop %v1766
    %v1768 = vadd.f32 %v1767, 1.0
    %v1769 = vrcp.pop %v1768
    %v1770 = vmul.f32 1.0, %v1769
    %1771 = vrot.lane.b32.xlu0 %v1753, 32
    %v1772 = vpop.permute.xlu0 %1771
    %v1774 = vmul.f32 %v1763, %v1772
    %1776 = vrot.lane.b32.xlu0 %v1774, 64
    %v1777 = vpop.permute.xlu0 %1776
    %v1779 = vadd.f32 %v254, %v1777
    %v1780 = vtanh.pop %v1779
    %v1781 = vsub.f32 1.0, %v1770
    %1783 = vrot.lane.b32.xlu0 %v1780, 96
    %v1784 = vpop.permute.xlu0 %1783
    %v1786 = vmul.f32 %v1781, %v1784
    %v1787 = vrot.slane %v1571, 2
    %v1789 = vmul.f32 %v1770, %v1787
    %v1790 = vadd.f32 %v1786, %v1789
    %v1792 = vrot.slane %v1677, 4
    %1793 = vrot.lane.b32.xlu0 %v1792, 96
    %v1794 = vpop.permute.xlu0 %1793
    %v1795 = vsel %vm74, %v1794, 0
    %1797 = vmatprep.subr.mxu0 0.0
    %1798 = vmatpush1.msra.mxu0 %v257
    %1799 = vmatprep.subr.mxu0 0.0
    %1800 = vmatpush1.msra.mxu0 %v258
    %1801 = vmatprep.subr.mxu0 0.0
    %1802 = vmatpush1.msra.mxu0 %v259
    %1803 = vmatprep.subr.mxu0 0.0
    %1804 = vmatpush1.msra.mxu0 %v260
    %1805 = vmatprep.subr.mxu0 0.0
    %1806 = vmatpush1.msra.mxu0 0.0
    %1807 = vmatprep.subr.mxu0 0.0
    %1808 = vmatpush1.msra.mxu0 0.0
    %1809 = vmatprep.subr.mxu0 0.0
    %1810 = vmatpush1.msra.mxu0 0.0
    %1811 = vmatprep.subr.mxu0 0.0
    %1812 = vmatpush1.msra.mxu0 0.0
    %1813 = vmatprep.subr.mxu0 0.0
    %1814 = vmatpush1.msra.mxu0 0.0
    %1815 = vmatprep.subr.mxu0 0.0
    %1816 = vmatpush1.msra.mxu0 0.0
    %1817 = vmatprep.subr.mxu0 0.0
    %1818 = vmatpush1.msra.mxu0 0.0
    %1819 = vmatprep.subr.mxu0 0.0
    %1820 = vmatpush1.msra.mxu0 0.0
    %1821 = vmatprep.subr.mxu0 0.0
    %1822 = vmatpush1.msra.mxu0 0.0
    %1823 = vmatprep.subr.mxu0 0.0
    %1824 = vmatpush1.msra.mxu0 0.0
    %1825 = vmatprep.subr.mxu0 0.0
    %1826 = vmatpush1.msra.mxu0 0.0
    %1827 = vmatprep.subr.mxu0 0.0
    %1828 = vmatpush1.msra.mxu0 0.0
    %1829 = vmatprep.subr.mxu0 0.0
    %1830 = vmatpush1.msra.mxu0 0.0
    %1831 = vmatprep.subr.mxu0 0.0
    %1832 = vmatpush1.msra.mxu0 0.0
    %1833 = vmatprep.subr.mxu0 0.0
    %1834 = vmatpush1.msra.mxu0 0.0
    %1835 = vmatprep.subr.mxu0 0.0
    %1836 = vmatpush1.msra.mxu0 0.0
    %1837 = vmatprep.subr.mxu0 0.0
    %1838 = vmatpush1.msra.mxu0 0.0
    %1839 = vmatprep.subr.mxu0 0.0
    %1840 = vmatpush1.msra.mxu0 0.0
    %1841 = vmatprep.subr.mxu0 0.0
    %1842 = vmatpush1.msra.mxu0 0.0
    %1843 = vmatprep.subr.mxu0 0.0
    %1844 = vmatpush1.msra.mxu0 0.0
    %1845 = vmatprep.subr.mxu0 0.0
    %1846 = vmatpush1.msra.mxu0 0.0
    %1847 = vmatprep.subr.mxu0 0.0
    %1848 = vmatpush1.msra.mxu0 0.0
    %1849 = vmatprep.subr.mxu0 0.0
    %1850 = vmatpush1.msra.mxu0 0.0
    %1851 = vmatprep.subr.mxu0 0.0
    %1852 = vmatpush1.msra.mxu0 0.0
    %1853 = vmatprep.subr.mxu0 0.0
    %1854 = vmatpush1.msra.mxu0 0.0
    %1855 = vmatprep.subr.mxu0 0.0
    %1856 = vmatpush1.msra.mxu0 0.0
    %1857 = vmatprep.subr.mxu0 0.0
    %1858 = vmatpush1.msra.mxu0 0.0
    %1859 = vmatprep.subr.mxu0 0.0
    %1860 = vmatpush1.msra.mxu0 0.0
    %1861 = vmatprep.mubr.f32.mxu0 0.0
    %1862 = vmatmul.mubr.f32.gmra.mrb[0].mxu0 %v1795
    %v1863 = vpop.f32.mrb[0].mxu0
    %v1864 = vadd.f32 %v271, %v1863
    %v1865 = vpop.f32.mrb[0].mxu0
    %1866 = vdwg.mxu0
    %v1868 = vrot.slane %v1864, 2
    %v1870 = vadd.f32 %v255, %v1868
    %v1871 = vxor.u32 %v1870, 2147483648
    %v1872 = vmul.f32 %v1871, 1.442695
    %v1873 = vpow.pop %v1872
    %v1874 = vadd.f32 %v1873, 1.0
    %v1875 = vrcp.pop %v1874
    %v1876 = vmul.f32 1.0, %v1875
    %1877 = vrot.lane.b32.xlu0 %v1868, 64
    %v1878 = vpop.permute.xlu0 %1877
    %v1880 = vmul.f32 %v1876, %v1878
    %1882 = vrot.lane.b32.xlu0 %v1880, 64
    %v1883 = vpop.permute.xlu0 %1882
    %v1885 = vadd.f32 %v255, %v1883
    %v1886 = vtanh.pop %v1885
    %v1887 = vsub.f32 1.0, %v1876
    %1889 = vrot.lane.b32.xlu0 %v1886, 96
    %v1890 = vpop.permute.xlu0 %1889
    %v1892 = vmul.f32 %v1887, %v1890
    %v1893 = vrot.slane %v1677, 6
    %v1895 = vmul.f32 %v1876, %v1893
    %v1896 = vadd.f32 %v1892, %v1895
    %v1898 = vrot.slane %v1790, 2
    %v1899 = vsel %vm74, %v1898, 0
    %1901 = vmatprep.subr.mxu0 0.0
    %1902 = vmatpush1.msra.mxu0 %v261
    %1903 = vmatprep.subr.mxu0 0.0
    %1904 = vmatpush1.msra.mxu0 %v262
    %1905 = vmatprep.subr.mxu0 0.0
    %1906 = vmatpush1.msra.mxu0 %v263
    %1907 = vmatprep.subr.mxu0 0.0
    %1908 = vmatpush1.msra.mxu0 %v264
    %1909 = vmatprep.subr.mxu0 0.0
    %1910 = vmatpush1.msra.mxu0 0.0
    %1911 = vmatprep.subr.mxu0 0.0
    %1912 = vmatpush1.msra.mxu0 0.0
    %1913 = vmatprep.subr.mxu0 0.0
    %1914 = vmatpush1.msra.mxu0 0.0
    %1915 = vmatprep.subr.mxu0 0.0
    %1916 = vmatpush1.msra.mxu0 0.0
    %1917 = vmatprep.subr.mxu0 0.0
    %1918 = vmatpush1.msra.mxu0 0.0
    %1919 = vmatprep.subr.mxu0 0.0
    %1920 = vmatpush1.msra.mxu0 0.0
    %1921 = vmatprep.subr.mxu0 0.0
    %1922 = vmatpush1.msra.mxu0 0.0
    %1923 = vmatprep.subr.mxu0 0.0
    %1924 = vmatpush1.msra.mxu0 0.0
    %1925 = vmatprep.subr.mxu0 0.0
    %1926 = vmatpush1.msra.mxu0 0.0
    %1927 = vmatprep.subr.mxu0 0.0
    %1928 = vmatpush1.msra.mxu0 0.0
    %1929 = vmatprep.subr.mxu0 0.0
    %1930 = vmatpush1.msra.mxu0 0.0
    %1931 = vmatprep.subr.mxu0 0.0
    %1932 = vmatpush1.msra.mxu0 0.0
    %1933 = vmatprep.subr.mxu0 0.0
    %1934 = vmatpush1.msra.mxu0 0.0
    %1935 = vmatprep.subr.mxu0 0.0
    %1936 = vmatpush1.msra.mxu0 0.0
    %1937 = vmatprep.subr.mxu0 0.0
    %1938 = vmatpush1.msra.mxu0 0.0
    %1939 = vmatprep.subr.mxu0 0.0
    %1940 = vmatpush1.msra.mxu0 0.0
    %1941 = vmatprep.subr.mxu0 0.0
    %1942 = vmatpush1.msra.mxu0 0.0
    %1943 = vmatprep.subr.mxu0 0.0
    %1944 = vmatpush1.msra.mxu0 0.0
    %1945 = vmatprep.subr.mxu0 0.0
    %1946 = vmatpush1.msra.mxu0 0.0
    %1947 = vmatprep.subr.mxu0 0.0
    %1948 = vmatpush1.msra.mxu0 0.0
    %1949 = vmatprep.subr.mxu0 0.0
    %1950 = vmatpush1.msra.mxu0 0.0
    %1951 = vmatprep.subr.mxu0 0.0
    %1952 = vmatpush1.msra.mxu0 0.0
    %1953 = vmatprep.subr.mxu0 0.0
    %1954 = vmatpush1.msra.mxu0 0.0
    %1955 = vmatprep.subr.mxu0 0.0
    %1956 = vmatpush1.msra.mxu0 0.0
    %1957 = vmatprep.subr.mxu0 0.0
    %1958 = vmatpush1.msra.mxu0 0.0
    %1959 = vmatprep.subr.mxu0 0.0
    %1960 = vmatpush1.msra.mxu0 0.0
    %1961 = vmatprep.subr.mxu0 0.0
    %1962 = vmatpush1.msra.mxu0 0.0
    %1963 = vmatprep.subr.mxu0 0.0
    %1964 = vmatpush1.msra.mxu0 0.0
    %1965 = vmatprep.mubr.f32.mxu0 0.0
    %1966 = vmatmul.mubr.f32.gmra.mrb[0].mxu0 %v1899
    %v1967 = vpop.f32.mrb[0].mxu0
    %v1968 = vadd.f32 %v376, %v1967
    %v1969 = vpop.f32.mrb[0].mxu0
    %1970 = vdwg.mxu0
    %1972 = vrot.lane.b32.xlu0 %v1968, 96
    %v1973 = vpop.permute.xlu0 %1972
    %v1975 = vadd.f32 %v253, %v1973
    %v1976 = vxor.u32 %v1975, 2147483648
    %v1977 = vmul.f32 %v1976, 1.442695
    %v1978 = vpow.pop %v1977
    %v1979 = vadd.f32 %v1978, 1.0
    %v1980 = vrcp.pop %v1979
    %v1981 = vmul.f32 1.0, %v1980
    %v1982 = vadd.f32 %v254, %v1973
    %v1983 = vxor.u32 %v1982, 2147483648
    %v1984 = vmul.f32 %v1983, 1.442695
    %v1985 = vpow.pop %v1984
    %v1986 = vadd.f32 %v1985, 1.0
    %v1987 = vrcp.pop %v1986
    %v1988 = vmul.f32 1.0, %v1987
    %1989 = vrot.lane.b32.xlu0 %v1968, 32
    %v1990 = vpop.permute.xlu0 %1989
    %v1992 = vmul.f32 %v1981, %v1990
    %1994 = vrot.lane.b32.xlu0 %v1992, 64
    %v1995 = vpop.permute.xlu0 %1994
    %v1997 = vadd.f32 %v254, %v1995
    %v1998 = vtanh.pop %v1997
    %v1999 = vsub.f32 1.0, %v1988
    %2001 = vrot.lane.b32.xlu0 %v1998, 96
    %v2002 = vpop.permute.xlu0 %2001
    %v2004 = vmul.f32 %v1999, %v2002
    %v2006 = vmul.f32 %v1988, %v1898
    %v2007 = vadd.f32 %v2004, %v2006
    %v2008 = vld [vmem:[%s2] sm:$0x3]
    %v2010 = vrot.slane %v1896, 6
    %2011 = vrot.lane.b32.xlu0 %v2010, 32
    %v2012 = vpop.permute.xlu0 %2011
    %2015 = vrot.lane.b32.xlu0 %v2007, 96
    %v2016 = vpop.permute.xlu0 %2015
    %vm2018 = vcmask 523264
    %v2019 = vsel %vm2018, %v2008, %v2012
    %vm2020 = vcmask 785408
    %v2021 = vsel %vm2020, %v2019, %v2016
    %v2022 = vld [vmem:[%s9] sm:$0xff]
    %v2023 = vld [vmem:[%s9 + $0x8] sm:$0xff]
    %v2024 = vld [vmem:[%s9 + $0x10] sm:$0xff]
    %v2025 = vld [vmem:[%s9 + $0x18] sm:$0xff]
    %v2026 = vld [vmem:[%s9 + $0x20] sm:$0xff]
    %v2027 = vld [vmem:[%s9 + $0x28] sm:$0xff]
    %v2028 = vld [vmem:[%s9 + $0x30] sm:$0xff]
    %v2029 = vld [vmem:[%s9 + $0x38] sm:$0xff]
    %v2030 = vld [vmem:[%s9 + $0x40] sm:$0xff]
    %v2031 = vld [vmem:[%s9 + $0x48] sm:$0xff]
    %v2032 = vld [vmem:[%s9 + $0x50] sm:$0xff]
    %v2033 = vld [vmem:[%s9 + $0x58] sm:$0xff]
    %v2034 = vld [vmem:[%s9 + $0x60] sm:$0xff]
    %v2035 = vld [vmem:[%s9 + $0x68] sm:$0xff]
    %v2036 = vld [vmem:[%s9 + $0x70] sm:$0xff]
    %v2037 = vld [vmem:[%s9 + $0x78] sm:$0xff]
    %v2038 = vld [vmem:[#allocation2] sm:$0x1]
    %v2040 = vlaneseq
    %v2041 = vshrl.u32 %v2040, 7
    %v2042 = vsub.s32 0, %v2041
    %v2043 = vrot.slane %v2038, %v2042
    %2045 = vmatprep.subr.mxu0 0.0
    %2046 = vmatpush1.msra.mxu0 %v2022
    %2047 = vmatprep.subr.mxu0 0.0
    %2048 = vmatpush1.msra.mxu0 %v2023
    %2049 = vmatprep.subr.mxu0 0.0
    %2050 = vmatpush1.msra.mxu0 %v2024
    %2051 = vmatprep.subr.mxu0 0.0
    %2052 = vmatpush1.msra.mxu0 %v2025
    %2053 = vmatprep.subr.mxu0 0.0
    %2054 = vmatpush1.msra.mxu0 %v2026
    %2055 = vmatprep.subr.mxu0 0.0
    %2056 = vmatpush1.msra.mxu0 %v2027
    %2057 = vmatprep.subr.mxu0 0.0
    %2058 = vmatpush1.msra.mxu0 %v2028
    %2059 = vmatprep.subr.mxu0 0.0
    %2060 = vmatpush1.msra.mxu0 %v2029
    %2061 = vmatprep.subr.mxu0 0.0
    %2062 = vmatpush1.msra.mxu0 %v2030
    %2063 = vmatprep.subr.mxu0 0.0
    %2064 = vmatpush1.msra.mxu0 %v2031
    %2065 = vmatprep.subr.mxu0 0.0
    %2066 = vmatpush1.msra.mxu0 %v2032
    %2067 = vmatprep.subr.mxu0 0.0
    %2068 = vmatpush1.msra.mxu0 %v2033
    %2069 = vmatprep.subr.mxu0 0.0
    %2070 = vmatpush1.msra.mxu0 %v2034
    %2071 = vmatprep.subr.mxu0 0.0
    %2072 = vmatpush1.msra.mxu0 %v2035
    %2073 = vmatprep.subr.mxu0 0.0
    %2074 = vmatpush1.msra.mxu0 %v2036
    %2075 = vmatprep.subr.mxu0 0.0
    %2076 = vmatpush1.msra.mxu0 %v2037
    %2077 = vmatprep.subr.mxu0 0.0
    %2078 = vmatpush1.msra.mxu0 0.0
    %2079 = vmatprep.subr.mxu0 0.0
    %2080 = vmatpush1.msra.mxu0 0.0
    %2081 = vmatprep.subr.mxu0 0.0
    %2082 = vmatpush1.msra.mxu0 0.0
    %2083 = vmatprep.subr.mxu0 0.0
    %2084 = vmatpush1.msra.mxu0 0.0
    %2085 = vmatprep.subr.mxu0 0.0
    %2086 = vmatpush1.msra.mxu0 0.0
    %2087 = vmatprep.subr.mxu0 0.0
    %2088 = vmatpush1.msra.mxu0 0.0
    %2089 = vmatprep.subr.mxu0 0.0
    %2090 = vmatpush1.msra.mxu0 0.0
    %2091 = vmatprep.subr.mxu0 0.0
    %2092 = vmatpush1.msra.mxu0 0.0
    %2093 = vmatprep.subr.mxu0 0.0
    %2094 = vmatpush1.msra.mxu0 0.0
    %2095 = vmatprep.subr.mxu0 0.0
    %2096 = vmatpush1.msra.mxu0 0.0
    %2097 = vmatprep.subr.mxu0 0.0
    %2098 = vmatpush1.msra.mxu0 0.0
    %2099 = vmatprep.subr.mxu0 0.0
    %2100 = vmatpush1.msra.mxu0 0.0
    %2101 = vmatprep.subr.mxu0 0.0
    %2102 = vmatpush1.msra.mxu0 0.0
    %2103 = vmatprep.subr.mxu0 0.0
    %2104 = vmatpush1.msra.mxu0 0.0
    %2105 = vmatprep.subr.mxu0 0.0
    %2106 = vmatpush1.msra.mxu0 0.0
    %2107 = vmatprep.subr.mxu0 0.0
    %2108 = vmatpush1.msra.mxu0 0.0
    %2109 = vmatprep.mubr.f32.mxu0 0.0
    %2110 = vmatmul.mubr.f32.gmra.mrb[0].mxu0 %v2021
    %v2111 = vpop.f32.mrb[0].mxu0
    %v2112 = vadd.f32 %v2043, %v2111
    %v2113 = vpop.f32.mrb[0].mxu0
    %2114 = vdwg.mxu0
    %vm2115 = vcmask 1024
    %2116 = vst.msk [vmem:[%s11] sm:$0x3] %vm2115, %v2112
    // Predicated region
    $region50: #{_lambda_.3} parent=1 // pred_check
      _
    $region51: #{_lambda_.3} parent=1 // pred_check_branch
      %2118 = sbr.rel (0) target = $region53
    $region52: #{_lambda_.3} parent=1 // pred_region
      _
    $region53: #{_lambda_.3} parent=1 // pred_fallthru
      _
    // Predicated region
    $region54: #{_lambda_.3} parent=1 // pred_check
      _
    $region55: #{_lambda_.3} parent=1 // pred_check_branch
      %2120 = sbr.rel (0) target = $region57
    $region56: #{_lambda_.3} parent=1 // pred_region
      _
    $region57: #{_lambda_.3} parent=1 // pred_fallthru
      _
    %2121 = vsyncpa [#allocation4], 1

</llo_original>
